<compile_context>
chip_gen: v7x
topology: tpu7x:2x2x1
jax: 0.10.0
libtpu: 0.0.40
codegen_flags: <defaults>
</compile_context>

<pallas_src>
import jax
import jax.numpy as jnp
from jax.experimental import pallas as pl
from jax.experimental.pallas import tpu as pltpu


# ----------------------------------------------------------------------------
# Pallas kernels
# ----------------------------------------------------------------------------
def _conv_pool_kernel(p_ref, w_ref, b_ref, o_ref):
    """Fused conv + bias + ReLU + 2x2 max-pool (+ ReLU), transposed/lane-dense.

    p_ref: (4, K, Mt)  bf16 im2col patches, one slab per pool-window position.
    w_ref: (Cout, K)   bf16 conv weight, rows ordered (cin, kh, kw) like PyTorch.
    b_ref: (Cout, 1)   f32 conv bias.
    o_ref: (Cout, Mt)  bf16 pooled activations; Mt = tile of B*Hp*Wp (lane axis).
    """
    w = w_ref[...]
    z = jnp.dot(w, p_ref[0], preferred_element_type=jnp.float32)
    for q in range(1, p_ref.shape[0]):
        z = jnp.maximum(z, jnp.dot(w, p_ref[q], preferred_element_type=jnp.float32))
    # relu(maxpool(relu(conv + b))) == relu(max_q(conv_q) + b)  (shared bias, relu monotone)
    o_ref[...] = jnp.maximum(z + b_ref[...], 0.0).astype(o_ref.dtype)


def _conv_pool_linear_kernel(p_ref, w_ref, b_ref, wl_ref, bl_ref, o_ref):
    """Stage 2, one batch element per grid step: conv + bias + ReLU + pool + ReLU + Linear.

    p_ref : (4, K2, HW)   bf16 im2col patches for this batch element.
    w_ref : (C2, K2)      bf16 conv2 weight.
    b_ref : (C2, 1)       f32 conv2 bias.
    wl_ref: (O, C2, HW)   f32 linear weight (PyTorch (O, C2*H*W) reshaped).
    bl_ref: (O, 1)        f32 linear bias.
    o_ref : (O, 1)        f32 logits for this batch element.
    """
    w = w_ref[...]
    z = jnp.dot(w, p_ref[0], preferred_element_type=jnp.float32)
    for q in range(1, p_ref.shape[0]):
        z = jnp.maximum(z, jnp.dot(w, p_ref[q], preferred_element_type=jnp.float32))
    z = jnp.maximum(z + b_ref[...], 0.0)                    # (C2, HW) f32 pooled features
    # Linear as one fused VPU multiply + two reductions (exact f32):
    #   out[o] = sum_{c, m} wl[o, c, m] * z[c, m]
    t = jnp.sum(wl_ref[...] * z[None, :, :], axis=2)        # (O, C2)
    row = jnp.sum(t, axis=1, keepdims=True)                 # (O, 1)
    o_ref[...] = (row + bl_ref[...]).astype(o_ref.dtype)


# ----------------------------------------------------------------------------
# pallas_call wrappers
# ----------------------------------------------------------------------------
def conv_relu_pool(patches, w, b, *, m_tiles):
    """Stage 1: relu(maxpool(relu(conv))), tiled over the lane-dense M = B*Hp*Wp axis."""
    n_pool, k, m = patches.shape
    cout = w.shape[0]
    assert m % m_tiles == 0
    mt = m // m_tiles
    return pl.pallas_call(
        _conv_pool_kernel,
        out_shape=jax.ShapeDtypeStruct((cout, m), jnp.bfloat16),
        grid=(m_tiles,),
        in_specs=[
            pl.BlockSpec((n_pool, k, mt), lambda i: (0, 0, i)),
            pl.BlockSpec((cout, k), lambda i: (0, 0)),
            pl.BlockSpec((cout, 1), lambda i: (0, 0)),
        ],
        out_specs=pl.BlockSpec((cout, mt), lambda i: (0, i)),
        compiler_params=pltpu.CompilerParams(dimension_semantics=("parallel",)),
    )(patches, w, b)


def conv_relu_pool_linear(patches, w, b, wl, bl):
    """Stage 2 + final Linear, one batch element per (parallel) grid step."""
    bsz, n_pool, k, hw = patches.shape
    c2 = w.shape[0]
    n_out = wl.shape[0]
    out = pl.pallas_call(
        _conv_pool_linear_kernel,
        out_shape=jax.ShapeDtypeStruct((bsz, n_out, 1), jnp.float32),
        grid=(bsz,),
        in_specs=[
            pl.BlockSpec((None, n_pool, k, hw), lambda bi: (bi, 0, 0, 0)),
            pl.BlockSpec((c2, k), lambda bi: (0, 0)),
            pl.BlockSpec((c2, 1), lambda bi: (0, 0)),
            pl.BlockSpec((n_out, c2, hw), lambda bi: (0, 0, 0)),
            pl.BlockSpec((n_out, 1), lambda bi: (0, 0)),
        ],
        out_specs=pl.BlockSpec((None, n_out, 1), lambda bi: (bi, 0, 0)),
        compiler_params=pltpu.CompilerParams(dimension_semantics=("parallel",)),
    )(patches, w, b, wl, bl)
    return out.reshape(bsz, n_out)        # free squeeze


# ----------------------------------------------------------------------------
# Thin XLA glue: pool-grouped, transposed im2col (strided slices only, bf16)
# ----------------------------------------------------------------------------
def pooled_conv_patches(xp, *, ksize, stride, pool, hp, wp, batch_major=False):
    """Transposed im2col grouped by position inside the pool window.

    xp: (C, B, Hpad, Wpad) channels-leading, already zero-padded (any dtype).
    Returns (pool^2, C*k*k, B*hp*wp) with columns ordered (b, hp, wp), or the
    batch-major layout (B, pool^2, C*k*k, hp*wp) if batch_major=True.
    K rows are ordered (c, kh, kw) to match PyTorch Conv2d weight.reshape(Cout, -1).
    """
    c, b = xp.shape[0], xp.shape[1]
    step = stride * pool
    quads = []
    for dh in range(pool):
        for dw in range(pool):
            slabs = []
            for kh in range(ksize):
                for kw in range(ksize):
                    h0 = stride * dh + kh
                    w0 = stride * dw + kw
                    slabs.append(
                        xp[:, :, h0:h0 + step * (hp - 1) + 1:step,
                                 w0:w0 + step * (wp - 1) + 1:step])   # (C, B, hp, wp)
            quads.append(jnp.stack(slabs, axis=1))                    # (C, k*k, B, hp, wp)
    p = jnp.stack(quads, axis=0)                                      # (P, C, kk, B, hp, wp)
    k = c * ksize * ksize
    if batch_major:
        return p.transpose(3, 0, 1, 2, 4, 5).reshape(b, pool * pool, k, hp * wp)
    return p.reshape(pool * pool, k, b * hp * wp)


def _default_m_tiles():
    """v7x (2 TensorCores): 4 parallel tiles -> 2 steps/core so DMA overlaps compute.
    v5e/v6e (1 TensorCore): 1 step -- extra steps only add ~0.35us/step overhead."""
    try:
        kind = jax.devices()[0].device_kind.lower()
    except Exception:
        return 1
    return 4 if "v7" in kind else 1


# ----------------------------------------------------------------------------
# Parameters (deterministic synthetic init, converted from PyTorch layouts)
# ----------------------------------------------------------------------------
def init_params(key, n_filters, out_features=2):
    k1, k2, k3, k4, k5, k6 = jax.random.split(key, 6)
    c1, c2 = n_filters, n_filters * 2
    # PyTorch layouts: Conv2d (Cout, Cin, KH, KW), Linear (out, in=C*H*W).
    w1_t = jax.random.normal(k1, (c1, 3, 4, 4), jnp.float32) * 0.1
    b1 = jax.random.normal(k2, (c1,), jnp.float32) * 0.1
    w2_t = jax.random.normal(k3, (c2, c1, 4, 4), jnp.float32) * 0.1
    b2 = jax.random.normal(k4, (c2,), jnp.float32) * 0.1
    wl_t = jax.random.normal(k5, (out_features, c2 * 8 * 8), jnp.float32) * 0.05
    bl = jax.random.normal(k6, (out_features,), jnp.float32) * 0.05
    return dict(
        # Conv weights pre-reshaped + pre-cast to bf16 once (explicit MXU precision).
        w1=w1_t.reshape(c1, -1).astype(jnp.bfloat16),     # (Cout, Cin*KH*KW), rows (c, kh, kw)
        b1=b1.reshape(c1, 1),                             # f32
        w2=w2_t.reshape(c2, -1).astype(jnp.bfloat16),
        b2=b2.reshape(c2, 1),
        # Linear weight kept f32 and reshaped once: (O, C2*H*W) -> (O, C2, H*W).
        wl_r=wl_t.reshape(out_features, c2, 8 * 8),
        bl=bl.reshape(out_features, 1),
    )


# ----------------------------------------------------------------------------
# Forward pass (matches BasicNetwork.forward)
# ----------------------------------------------------------------------------
def basic_network_forward(x_nchw, params, *, m_tiles=None):
    B, _, H, W = x_nchw.shape
    c1 = params["w1"].shape[0]
    n_out = params["bl"].shape[0]
    if m_tiles is None:
        m_tiles = _default_m_tiles()

    # ---- stage 1: Conv2d(3, c1, k=4, s=2, p=1) + ReLU + MaxPool(2,2) + ReLU ----
    # Channels-leading + bf16 so the one XLA im2col fusion moves half the bytes
    # and B*Hp*Wp lands on the lane axis of the matmul output.
    xp = jnp.pad(jnp.transpose(x_nchw, (1, 0, 2, 3)).astype(jnp.bfloat16),
                 ((0, 0), (0, 0), (1, 1), (1, 1)))            # (3, B, H+2, W+2)
    hp1, wp1 = H // 4, W // 4
    p1 = pooled_conv_patches(xp, ksize=4, stride=2, pool=2, hp=hp1, wp=wp1)
    m1 = B * hp1 * wp1
    if m1 % (128 * m_tiles) != 0:                             # keep tiles lane-dense
        m_tiles = 1
    y1 = conv_relu_pool(p1, params["w1"], params["b1"], m_tiles=m_tiles)  # (c1, m1) bf16

    # ---- stage 2: Conv2d(c1, 2*c1, 4, 2, 1) + ReLU + MaxPool(2,2) + ReLU + Linear ----
    y1 = y1.reshape(c1, B, hp1, wp1)                          # free reshape (same layout)
    y1p = jnp.pad(y1, ((0, 0), (0, 0), (1, 1), (1, 1)))
    hp2, wp2 = hp1 // 4, wp1 // 4
    p2 = pooled_conv_patches(y1p, ksize=4, stride=2, pool=2, hp=hp2, wp=wp2,
                             batch_major=True)                # (B, 4, K2, hp2*wp2) bf16
    out = conv_relu_pool_linear(p2, params["w2"], params["b2"],
                                params["wl_r"], params["bl"])  # (B, n_out) f32
    assert out.shape == (B, n_out)
    return out


if __name__ == "__main__":
    key = jax.random.PRNGKey(0)
    kx, kp = jax.random.split(key)
    n_filters = 4
    # nn.Linear(n_filters * 2 * 8 * 8, 2) pins the final feature map to 8x8,
    # i.e. a 128x128 spatial input.
    x = jax.random.normal(kx, (2, 3, 128, 128), jnp.float32)
    params = init_params(kp, n_filters, out_features=2)

    fwd = jax.jit(basic_network_forward)
    out = fwd(x, params)
    jax.block_until_ready(out)
    assert out.shape == (2, 2), out.shape
    assert bool(jnp.all(jnp.isfinite(out)))
    print("KERNEL_OK")
</pallas_src>

<mosaic_0001>
module attributes {stable_mosaic.version = 11 : i64} {
  func.func @_conv_pool_kernel(%arg0: i32, %arg1: memref<4x48x2048xbf16, #tpu.memory_space<vmem>>, %arg2: memref<4x48xbf16, #tpu.memory_space<vmem>>, %arg3: memref<4x1xf32, #tpu.memory_space<vmem>>, %arg4: memref<4x2048xbf16, #tpu.memory_space<vmem>>) attributes {dimension_semantics = [#tpu.dimension_semantics<parallel>], iteration_bounds = array<i64: 1>, scalar_prefetch = 0 : i64, scratch_operands = 0 : i64, tpu.core_type = #tpu.core_type<tc>, window_params = [{transform_indices = @transform_0, window_bounds = array<i64: 4, 48, 2048>}, {pipeline_mode = #tpu.pipeline_mode<synchronous>, transform_indices = @transform_1, window_bounds = array<i64: 4, 48>}, {pipeline_mode = #tpu.pipeline_mode<synchronous>, transform_indices = @transform_2, window_bounds = array<i64: 4, 1>}, {transform_indices = @transform_3, window_bounds = array<i64: 4, 2048>}]} {
    %c0 = arith.constant 0 : index
    %c0_0 = arith.constant 0 : index
    %0 = vector.load %arg2[%c0, %c0_0] : memref<4x48xbf16, #tpu.memory_space<vmem>>, vector<4x48xbf16>
    %c0_1 = arith.constant 0 : index
    %c0_2 = arith.constant 0 : index
    %c0_3 = arith.constant 0 : index
    %1 = vector.load %arg1[%c0_1, %c0_2, %c0_3] : memref<4x48x2048xbf16, #tpu.memory_space<vmem>>, vector<1x48x2048xbf16>
    %2 = vector.shape_cast %1 : vector<1x48x2048xbf16> to vector<48x2048xbf16>
    %cst = arith.constant dense<0.000000e+00> : vector<4x2048xf32>
    %3 = tpu.matmul %0, %2, %cst {dimension_numbers = #tpu.dot_dimension_numbers<[1], [0], [0], [1], [0, 0, 1, 1], [], []>} : vector<4x48xbf16>, vector<48x2048xbf16>, vector<4x2048xf32> -> vector<4x2048xf32>
    %c1 = arith.constant 1 : index
    %c0_4 = arith.constant 0 : index
    %c0_5 = arith.constant 0 : index
    %4 = vector.load %arg1[%c1, %c0_4, %c0_5] : memref<4x48x2048xbf16, #tpu.memory_space<vmem>>, vector<1x48x2048xbf16>
    %5 = vector.shape_cast %4 : vector<1x48x2048xbf16> to vector<48x2048xbf16>
    %cst_6 = arith.constant dense<0.000000e+00> : vector<4x2048xf32>
    %6 = tpu.matmul %0, %5, %cst_6 {dimension_numbers = #tpu.dot_dimension_numbers<[1], [0], [0], [1], [0, 0, 1, 1], [], []>} : vector<4x48xbf16>, vector<48x2048xbf16>, vector<4x2048xf32> -> vector<4x2048xf32>
    %7 = arith.maximumf %3, %6 : vector<4x2048xf32>
    %c2 = arith.constant 2 : index
    %c0_7 = arith.constant 0 : index
    %c0_8 = arith.constant 0 : index
    %8 = vector.load %arg1[%c2, %c0_7, %c0_8] : memref<4x48x2048xbf16, #tpu.memory_space<vmem>>, vector<1x48x2048xbf16>
    %9 = vector.shape_cast %8 : vector<1x48x2048xbf16> to vector<48x2048xbf16>
    %cst_9 = arith.constant dense<0.000000e+00> : vector<4x2048xf32>
    %10 = tpu.matmul %0, %9, %cst_9 {dimension_numbers = #tpu.dot_dimension_numbers<[1], [0], [0], [1], [0, 0, 1, 1], [], []>} : vector<4x48xbf16>, vector<48x2048xbf16>, vector<4x2048xf32> -> vector<4x2048xf32>
    %11 = arith.maximumf %7, %10 : vector<4x2048xf32>
    %c3 = arith.constant 3 : index
    %c0_10 = arith.constant 0 : index
    %c0_11 = arith.constant 0 : index
    %12 = vector.load %arg1[%c3, %c0_10, %c0_11] : memref<4x48x2048xbf16, #tpu.memory_space<vmem>>, vector<1x48x2048xbf16>
    %13 = vector.shape_cast %12 : vector<1x48x2048xbf16> to vector<48x2048xbf16>
    %cst_12 = arith.constant dense<0.000000e+00> : vector<4x2048xf32>
    %14 = tpu.matmul %0, %13, %cst_12 {dimension_numbers = #tpu.dot_dimension_numbers<[1], [0], [0], [1], [0, 0, 1, 1], [], []>} : vector<4x48xbf16>, vector<48x2048xbf16>, vector<4x2048xf32> -> vector<4x2048xf32>
    %15 = arith.maximumf %11, %14 : vector<4x2048xf32>
    %c0_13 = arith.constant 0 : index
    %c0_14 = arith.constant 0 : index
    %16 = vector.load %arg3[%c0_13, %c0_14] : memref<4x1xf32, #tpu.memory_space<vmem>>, vector<4x1xf32>
    %17 = vector.broadcast %16 : vector<4x1xf32> to vector<4x2048xf32>
    %18 = arith.addf %15, %17 : vector<4x2048xf32>
    %cst_15 = arith.constant 0.000000e+00 : f32
    %19 = vector.broadcast %cst_15 : f32 to vector<4x2048xf32>
    %20 = arith.maximumf %18, %19 : vector<4x2048xf32>
    %21 = arith.truncf %20 : vector<4x2048xf32> to vector<4x2048xbf16>
    %c0_16 = arith.constant 0 : index
    %c0_17 = arith.constant 0 : index
    %22 = vector.load %arg4[%c0_16, %c0_17] : memref<4x2048xbf16, #tpu.memory_space<vmem>>, vector<4x2048xbf16>
    tpu.vector_store %arg4[%c0_16, %c0_17], %21 {strides = array<i32>} : memref<4x2048xbf16, #tpu.memory_space<vmem>>, vector<4x2048xbf16>,
    return
  }
  func.func @transform_0(%arg0: i32) -> (i32, i32, i32) {
    %c0_i32 = arith.constant 0 : i32
    %c0_i32_0 = arith.constant 0 : i32
    %c0_i32_1 = arith.constant 0 : i32
    return %c0_i32, %c0_i32_0, %arg0 : i32, i32, i32
  }
  func.func @transform_1(%arg0: i32) -> (i32, i32) {
    %c0_i32 = arith.constant 0 : i32
    %c0_i32_0 = arith.constant 0 : i32
    %c0_i32_1 = arith.constant 0 : i32
    return %c0_i32, %c0_i32_0 : i32, i32
  }
  func.func @transform_2(%arg0: i32) -> (i32, i32) {
    %c0_i32 = arith.constant 0 : i32
    %c0_i32_0 = arith.constant 0 : i32
    %c0_i32_1 = arith.constant 0 : i32
    return %c0_i32, %c0_i32_0 : i32, i32
  }
  func.func @transform_3(%arg0: i32) -> (i32, i32) {
    %c0_i32 = arith.constant 0 : i32
    %c0_i32_0 = arith.constant 0 : i32
    return %c0_i32, %arg0 : i32, i32
  }
}

module attributes {stable_mosaic.version = 11 : i64} {
  func.func @_conv_pool_linear_kernel(%arg0: i32, %arg1: memref<1x4x64x64xbf16, #tpu.memory_space<vmem>>, %arg2: memref<8x64xbf16, #tpu.memory_space<vmem>>, %arg3: memref<8x1xf32, #tpu.memory_space<vmem>>, %arg4: memref<2x8x64xf32, #tpu.memory_space<vmem>>, %arg5: memref<2x1xf32, #tpu.memory_space<vmem>>, %arg6: memref<1x2x1xf32, #tpu.memory_space<vmem>>) attributes {dimension_semantics = [#tpu.dimension_semantics<parallel>], iteration_bounds = array<i64: 2>, scalar_prefetch = 0 : i64, scratch_operands = 0 : i64, tpu.core_type = #tpu.core_type<tc>, window_params = [{transform_indices = @transform_0, window_bounds = array<i64: 1, 4, 64, 64>}, {pipeline_mode = #tpu.pipeline_mode<synchronous>, transform_indices = @transform_1, window_bounds = array<i64: 8, 64>}, {pipeline_mode = #tpu.pipeline_mode<synchronous>, transform_indices = @transform_2, window_bounds = array<i64: 8, 1>}, {pipeline_mode = #tpu.pipeline_mode<synchronous>, transform_indices = @transform_3, window_bounds = array<i64: 2, 8, 64>}, {pipeline_mode = #tpu.pipeline_mode<synchronous>, transform_indices = @transform_4, window_bounds = array<i64: 2, 1>}, {transform_indices = @transform_5, window_bounds = array<i64: 1, 2, 1>}]} {
    %c0 = arith.constant 0 : index
    %c0_0 = arith.constant 0 : index
    %0 = vector.load %arg2[%c0, %c0_0] : memref<8x64xbf16, #tpu.memory_space<vmem>>, vector<8x64xbf16>
    %c0_1 = arith.constant 0 : index
    %c0_2 = arith.constant 0 : index
    %c0_3 = arith.constant 0 : index
    %c0_4 = arith.constant 0 : index
    %1 = vector.load %arg1[%c0_1, %c0_2, %c0_3, %c0_4] : memref<1x4x64x64xbf16, #tpu.memory_space<vmem>>, vector<1x1x64x64xbf16>
    %2 = vector.shape_cast %1 : vector<1x1x64x64xbf16> to vector<64x64xbf16>
    %cst = arith.constant dense<0.000000e+00> : vector<8x64xf32>
    %3 = tpu.matmul %0, %2, %cst {dimension_numbers = #tpu.dot_dimension_numbers<[1], [0], [0], [1], [0, 0, 1, 1], [], []>} : vector<8x64xbf16>, vector<64x64xbf16>, vector<8x64xf32> -> vector<8x64xf32>
    %c0_5 = arith.constant 0 : index
    %c1 = arith.constant 1 : index
    %c0_6 = arith.constant 0 : index
    %c0_7 = arith.constant 0 : index
    %4 = vector.load %arg1[%c0_5, %c1, %c0_6, %c0_7] : memref<1x4x64x64xbf16, #tpu.memory_space<vmem>>, vector<1x1x64x64xbf16>
    %5 = vector.shape_cast %4 : vector<1x1x64x64xbf16> to vector<64x64xbf16>
    %cst_8 = arith.constant dense<0.000000e+00> : vector<8x64xf32>
    %6 = tpu.matmul %0, %5, %cst_8 {dimension_numbers = #tpu.dot_dimension_numbers<[1], [0], [0], [1], [0, 0, 1, 1], [], []>} : vector<8x64xbf16>, vector<64x64xbf16>, vector<8x64xf32> -> vector<8x64xf32>
    %7 = arith.maximumf %3, %6 : vector<8x64xf32>
    %c0_9 = arith.constant 0 : index
    %c2 = arith.constant 2 : index
    %c0_10 = arith.constant 0 : index
    %c0_11 = arith.constant 0 : index
    %8 = vector.load %arg1[%c0_9, %c2, %c0_10, %c0_11] : memref<1x4x64x64xbf16, #tpu.memory_space<vmem>>, vector<1x1x64x64xbf16>
    %9 = vector.shape_cast %8 : vector<1x1x64x64xbf16> to vector<64x64xbf16>
    %cst_12 = arith.constant dense<0.000000e+00> : vector<8x64xf32>
    %10 = tpu.matmul %0, %9, %cst_12 {dimension_numbers = #tpu.dot_dimension_numbers<[1], [0], [0], [1], [0, 0, 1, 1], [], []>} : vector<8x64xbf16>, vector<64x64xbf16>, vector<8x64xf32> -> vector<8x64xf32>
    %11 = arith.maximumf %7, %10 : vector<8x64xf32>
    %c0_13 = arith.constant 0 : index
    %c3 = arith.constant 3 : index
    %c0_14 = arith.constant 0 : index
    %c0_15 = arith.constant 0 : index
    %12 = vector.load %arg1[%c0_13, %c3, %c0_14, %c0_15] : memref<1x4x64x64xbf16, #tpu.memory_space<vmem>>, vector<1x1x64x64xbf16>
    %13 = vector.shape_cast %12 : vector<1x1x64x64xbf16> to vector<64x64xbf16>
    %cst_16 = arith.constant dense<0.000000e+00> : vector<8x64xf32>
    %14 = tpu.matmul %0, %13, %cst_16 {dimension_numbers = #tpu.dot_dimension_numbers<[1], [0], [0], [1], [0, 0, 1, 1], [], []>} : vector<8x64xbf16>, vector<64x64xbf16>, vector<8x64xf32> -> vector<8x64xf32>
    %15 = arith.maximumf %11, %14 : vector<8x64xf32>
    %c0_17 = arith.constant 0 : index
    %c0_18 = arith.constant 0 : index
    %16 = vector.load %arg3[%c0_17, %c0_18] : memref<8x1xf32, #tpu.memory_space<vmem>>, vector<8x1xf32>
    %17 = vector.broadcast %16 : vector<8x1xf32> to vector<8x64xf32>
    %18 = arith.addf %15, %17 : vector<8x64xf32>
    %cst_19 = arith.constant 0.000000e+00 : f32
    %19 = vector.broadcast %cst_19 : f32 to vector<8x64xf32>
    %20 = arith.maximumf %18, %19 : vector<8x64xf32>
    %c0_20 = arith.constant 0 : index
    %c0_21 = arith.constant 0 : index
    %c0_22 = arith.constant 0 : index
    %21 = vector.load %arg4[%c0_20, %c0_21, %c0_22] : memref<2x8x64xf32, #tpu.memory_space<vmem>>, vector<2x8x64xf32>
    %22 = vector.shape_cast %20 : vector<8x64xf32> to vector<1x8x64xf32>
    %23 = vector.broadcast %22 : vector<1x8x64xf32> to vector<2x8x64xf32>
    %24 = arith.mulf %21, %23 : vector<2x8x64xf32>
    %cst_23 = arith.constant dense<0.000000e+00> : vector<2x8xf32>
    %25 = vector.multi_reduction <add>, %24, %cst_23 [2] : vector<2x8x64xf32> to vector<2x8xf32>
    %cst_24 = arith.constant dense<0.000000e+00> : vector<2xf32>
    %26 = vector.multi_reduction <add>, %25, %cst_24 [1] : vector<2x8xf32> to vector<2xf32>
    %27 = vector.shape_cast %26 : vector<2xf32> to vector<2x1xf32>
    %c0_25 = arith.constant 0 : index
    %c0_26 = arith.constant 0 : index
    %28 = vector.load %arg5[%c0_25, %c0_26] : memref<2x1xf32, #tpu.memory_space<vmem>>, vector<2x1xf32>
    %29 = arith.addf %27, %28 : vector<2x1xf32>
    %c0_27 = arith.constant 0 : index
    %c0_28 = arith.constant 0 : index
    %c0_29 = arith.constant 0 : index
    %30 = vector.load %arg6[%c0_27, %c0_28, %c0_29] : memref<1x2x1xf32, #tpu.memory_space<vmem>>, vector<1x2x1xf32>
    %31 = vector.shape_cast %30 : vector<1x2x1xf32> to vector<2x1xf32>
    %32 = vector.shape_cast %29 : vector<2x1xf32> to vector<1x2x1xf32>
    tpu.vector_store %arg6[%c0_27, %c0_28, %c0_29], %32 {strides = array<i32>} : memref<1x2x1xf32, #tpu.memory_space<vmem>>, vector<1x2x1xf32>,
    return
  }
  func.func @transform_0(%arg0: i32) -> (i32, i32, i32, i32) {
    %c0_i32 = arith.constant 0 : i32
    %c0_i32_0 = arith.constant 0 : i32
    %c0_i32_1 = arith.constant 0 : i32
    %c0_i32_2 = arith.constant 0 : i32
    return %arg0, %c0_i32, %c0_i32_0, %c0_i32_1 : i32, i32, i32, i32
  }
  func.func @transform_1(%arg0: i32) -> (i32, i32) {
    %c0_i32 = arith.constant 0 : i32
    %c0_i32_0 = arith.constant 0 : i32
    %c0_i32_1 = arith.constant 0 : i32
    return %c0_i32, %c0_i32_0 : i32, i32
  }
  func.func @transform_2(%arg0: i32) -> (i32, i32) {
    %c0_i32 = arith.constant 0 : i32
    %c0_i32_0 = arith.constant 0 : i32
    %c0_i32_1 = arith.constant 0 : i32
    return %c0_i32, %c0_i32_0 : i32, i32
  }
  func.func @transform_3(%arg0: i32) -> (i32, i32, i32) {
    %c0_i32 = arith.constant 0 : i32
    %c0_i32_0 = arith.constant 0 : i32
    %c0_i32_1 = arith.constant 0 : i32
    %c0_i32_2 = arith.constant 0 : i32
    return %c0_i32, %c0_i32_0, %c0_i32_1 : i32, i32, i32
  }
  func.func @transform_4(%arg0: i32) -> (i32, i32) {
    %c0_i32 = arith.constant 0 : i32
    %c0_i32_0 = arith.constant 0 : i32
    %c0_i32_1 = arith.constant 0 : i32
    return %c0_i32, %c0_i32_0 : i32, i32
  }
  func.func @transform_5(%arg0: i32) -> (i32, i32, i32) {
    %c0_i32 = arith.constant 0 : i32
    %c0_i32_0 = arith.constant 0 : i32
    %c0_i32_1 = arith.constant 0 : i32
    return %arg0, %c0_i32, %c0_i32_0 : i32, i32, i32
  }
}

</mosaic_0001>

<llo_original>
// kernel: basic_network_forward.2
$region0: #{basic_network_forward.2}
  #allocation0 [shape = 'u32[]', space=smem, size = 0x4, offset = 0x4, fixed_abs, tag = 'smem constant byte address 0x4 - core index']
  #allocation1 [shape = 'u32[144,128]{1,0:T(1,128)}', space=vmem, size = 0x12000, scoped, tag = 'internal scratch']
  %s0 = inlined_call_operand.vmem [shape: bf16[4,48,2048], index: 0, kind: input, shape index: {}]
  %s1 = inlined_call_operand.vmem [shape: bf16[4,48], index: 1, kind: input, shape index: {}]
  %s2 = inlined_call_operand.vmem [shape: f32[4,1], index: 2, kind: input, shape index: {}]
  %s3 = inlined_call_operand.vmem [shape: bf16[4,2048], index: 3, kind: output, shape index: {}]
  %s4 = sld [smem:[#allocation0]]
  $region22: #{basic_network_forward.2} parent=0
    _
  %s6 = ssub.s32 1, %s4
  %s7 = scalar_select 0, %s6, %s4
  // Predicated region
  $region2: #{basic_network_forward.2} parent=0 // pred_check
    _
  $region3: #{basic_network_forward.2} parent=0 // pred_check_branch
    %9 = sbr.rel (0) target = $region5
  $region4: #{basic_network_forward.2} parent=0 // pred_region
    _
  $region5: #{basic_network_forward.2} parent=0 // pred_fallthru
    _
  // Predicated region
  $region6: #{basic_network_forward.2} parent=0 // pred_check
    _
  $region7: #{basic_network_forward.2} parent=0 // pred_check_branch
    %11 = sbr.rel (0) target = $region9
  $region8: #{basic_network_forward.2} parent=0 // pred_region
    _
  $region9: #{basic_network_forward.2} parent=0 // pred_fallthru
    _
  // Predicated region
  $region10: #{basic_network_forward.2} parent=0 // pred_check
    _
  $region11: #{basic_network_forward.2} parent=0 // pred_check_branch
    %13 = sbr.rel (0) target = $region13
  $region12: #{basic_network_forward.2} parent=0 // pred_region
    _
  $region13: #{basic_network_forward.2} parent=0 // pred_fallthru
    _
  %v15 = vld [vmem:[%s1] sm:$0x3]
  %v16 = vld [vmem:[%s0] sm:$0xff]
  %v17 = vld [vmem:[%s0 + $0x8] sm:$0xff]
  %v18 = vld [vmem:[%s0 + $0x10] sm:$0xff]
  %v19 = vld [vmem:[%s0 + $0x18] sm:$0xff]
  %v20 = vld [vmem:[%s0 + $0x20] sm:$0xff]
  %v21 = vld [vmem:[%s0 + $0x28] sm:$0xff]
  %v22 = vld [vmem:[%s0 + $0x30] sm:$0xff]
  %v23 = vld [vmem:[%s0 + $0x38] sm:$0xff]
  %v24 = vld [vmem:[%s0 + $0x40] sm:$0xff]
  %v25 = vld [vmem:[%s0 + $0x48] sm:$0xff]
  %v26 = vld [vmem:[%s0 + $0x50] sm:$0xff]
  %v27 = vld [vmem:[%s0 + $0x58] sm:$0xff]
  %v28 = vld [vmem:[%s0 + $0x60] sm:$0xff]
  %v29 = vld [vmem:[%s0 + $0x68] sm:$0xff]
  %v30 = vld [vmem:[%s0 + $0x70] sm:$0xff]
  %v31 = vld [vmem:[%s0 + $0x78] sm:$0xff]
  %v32 = vld [vmem:[%s0 + $0x80] sm:$0xff]
  %v33 = vld [vmem:[%s0 + $0x88] sm:$0xff]
  %v34 = vld [vmem:[%s0 + $0x90] sm:$0xff]
  %v35 = vld [vmem:[%s0 + $0x98] sm:$0xff]
  %v36 = vld [vmem:[%s0 + $0xa0] sm:$0xff]
  %v37 = vld [vmem:[%s0 + $0xa8] sm:$0xff]
  %v38 = vld [vmem:[%s0 + $0xb0] sm:$0xff]
  %v39 = vld [vmem:[%s0 + $0xb8] sm:$0xff]
  %v40 = vld [vmem:[%s0 + $0xc0] sm:$0xff]
  %v41 = vld [vmem:[%s0 + $0xc8] sm:$0xff]
  %v42 = vld [vmem:[%s0 + $0xd0] sm:$0xff]
  %v43 = vld [vmem:[%s0 + $0xd8] sm:$0xff]
  %v44 = vld [vmem:[%s0 + $0xe0] sm:$0xff]
  %v45 = vld [vmem:[%s0 + $0xe8] sm:$0xff]
  %v46 = vld [vmem:[%s0 + $0xf0] sm:$0xff]
  %v47 = vld [vmem:[%s0 + $0xf8] sm:$0xff]
  %v48 = vld [vmem:[%s0 + $0x100] sm:$0xff]
  %v49 = vld [vmem:[%s0 + $0x108] sm:$0xff]
  %v50 = vld [vmem:[%s0 + $0x110] sm:$0xff]
  %v51 = vld [vmem:[%s0 + $0x118] sm:$0xff]
  %v52 = vld [vmem:[%s0 + $0x120] sm:$0xff]
  %v53 = vld [vmem:[%s0 + $0x128] sm:$0xff]
  %v54 = vld [vmem:[%s0 + $0x130] sm:$0xff]
  %v55 = vld [vmem:[%s0 + $0x138] sm:$0xff]
  %v56 = vld [vmem:[%s0 + $0x140] sm:$0xff]
  %v57 = vld [vmem:[%s0 + $0x148] sm:$0xff]
  %v58 = vld [vmem:[%s0 + $0x150] sm:$0xff]
  %v59 = vld [vmem:[%s0 + $0x158] sm:$0xff]
  %v60 = vld [vmem:[%s0 + $0x160] sm:$0xff]
  %v61 = vld [vmem:[%s0 + $0x168] sm:$0xff]
  %v62 = vld [vmem:[%s0 + $0x170] sm:$0xff]
  %v63 = vld [vmem:[%s0 + $0x178] sm:$0xff]
  %v112 = vunpack.c.l.b16 %v16
  %v113 = vunpack.c.h.b16 %v16
  %v114 = vunpack.c.l.b16 %v17
  %v115 = vunpack.c.h.b16 %v17
  %v116 = vunpack.c.l.b16 %v18
  %v117 = vunpack.c.h.b16 %v18
  %v118 = vunpack.c.l.b16 %v19
  %v119 = vunpack.c.h.b16 %v19
  %v120 = vunpack.c.l.b16 %v20
  %v121 = vunpack.c.h.b16 %v20
  %v122 = vunpack.c.l.b16 %v21
  %v123 = vunpack.c.h.b16 %v21
  %v124 = vunpack.c.l.b16 %v22
  %v125 = vunpack.c.h.b16 %v22
  %v126 = vunpack.c.l.b16 %v23
  %v127 = vunpack.c.h.b16 %v23
  %v128 = vunpack.c.l.b16 %v24
  %v129 = vunpack.c.h.b16 %v24
  %v130 = vunpack.c.l.b16 %v25
  %v131 = vunpack.c.h.b16 %v25
  %v132 = vunpack.c.l.b16 %v26
  %v133 = vunpack.c.h.b16 %v26
  %v134 = vunpack.c.l.b16 %v27
  %v135 = vunpack.c.h.b16 %v27
  %v136 = vunpack.c.l.b16 %v28
  %v137 = vunpack.c.h.b16 %v28
  %v138 = vunpack.c.l.b16 %v29
  %v139 = vunpack.c.h.b16 %v29
  %v140 = vunpack.c.l.b16 %v30
  %v141 = vunpack.c.h.b16 %v30
  %v142 = vunpack.c.l.b16 %v31
  %v143 = vunpack.c.h.b16 %v31
  %v144 = vunpack.c.l.b16 %v32
  %v145 = vunpack.c.h.b16 %v32
  %v146 = vunpack.c.l.b16 %v33
  %v147 = vunpack.c.h.b16 %v33
  %v148 = vunpack.c.l.b16 %v34
  %v149 = vunpack.c.h.b16 %v34
  %v150 = vunpack.c.l.b16 %v35
  %v151 = vunpack.c.h.b16 %v35
  %v152 = vunpack.c.l.b16 %v36
  %v153 = vunpack.c.h.b16 %v36
  %v154 = vunpack.c.l.b16 %v37
  %v155 = vunpack.c.h.b16 %v37
  %v156 = vunpack.c.l.b16 %v38
  %v157 = vunpack.c.h.b16 %v38
  %v158 = vunpack.c.l.b16 %v39
  %v159 = vunpack.c.h.b16 %v39
  %v160 = vunpack.c.l.b16 %v40
  %v161 = vunpack.c.h.b16 %v40
  %v162 = vunpack.c.l.b16 %v41
  %v163 = vunpack.c.h.b16 %v41
  %v164 = vunpack.c.l.b16 %v42
  %v165 = vunpack.c.h.b16 %v42
  %v166 = vunpack.c.l.b16 %v43
  %v167 = vunpack.c.h.b16 %v43
  %v168 = vunpack.c.l.b16 %v44
  %v169 = vunpack.c.h.b16 %v44
  %v170 = vunpack.c.l.b16 %v45
  %v171 = vunpack.c.h.b16 %v45
  %v172 = vunpack.c.l.b16 %v46
  %v173 = vunpack.c.h.b16 %v46
  %v174 = vunpack.c.l.b16 %v47
  %v175 = vunpack.c.h.b16 %v47
  %v176 = vunpack.c.l.b16 %v48
  %v177 = vunpack.c.h.b16 %v48
  %v178 = vunpack.c.l.b16 %v49
  %v179 = vunpack.c.h.b16 %v49
  %v180 = vunpack.c.l.b16 %v50
  %v181 = vunpack.c.h.b16 %v50
  %v182 = vunpack.c.l.b16 %v51
  %v183 = vunpack.c.h.b16 %v51
  %v184 = vunpack.c.l.b16 %v52
  %v185 = vunpack.c.h.b16 %v52
  %v186 = vunpack.c.l.b16 %v53
  %v187 = vunpack.c.h.b16 %v53
  %v188 = vunpack.c.l.b16 %v54
  %v189 = vunpack.c.h.b16 %v54
  %v190 = vunpack.c.l.b16 %v55
  %v191 = vunpack.c.h.b16 %v55
  %v192 = vunpack.c.l.b16 %v56
  %v193 = vunpack.c.h.b16 %v56
  %v194 = vunpack.c.l.b16 %v57
  %v195 = vunpack.c.h.b16 %v57
  %v196 = vunpack.c.l.b16 %v58
  %v197 = vunpack.c.h.b16 %v58
  %v198 = vunpack.c.l.b16 %v59
  %v199 = vunpack.c.h.b16 %v59
  %v200 = vunpack.c.l.b16 %v60
  %v201 = vunpack.c.h.b16 %v60
  %v202 = vunpack.c.l.b16 %v61
  %v203 = vunpack.c.h.b16 %v61
  %v204 = vunpack.c.l.b16 %v62
  %v205 = vunpack.c.h.b16 %v62
  %v206 = vunpack.c.l.b16 %v63
  %v207 = vunpack.c.h.b16 %v63
  %v208 = vpack.c.b16 %v128, %v112
  %v209 = vpack.c.b16 %v129, %v113
  %v210 = vpack.c.b16 %v130, %v114
  %v211 = vpack.c.b16 %v131, %v115
  %v212 = vpack.c.b16 %v132, %v116
  %v213 = vpack.c.b16 %v133, %v117
  %v214 = vpack.c.b16 %v134, %v118
  %v215 = vpack.c.b16 %v135, %v119
  %v216 = vpack.c.b16 %v136, %v120
  %v217 = vpack.c.b16 %v137, %v121
  %v218 = vpack.c.b16 %v138, %v122
  %v219 = vpack.c.b16 %v139, %v123
  %v220 = vpack.c.b16 %v140, %v124
  %v221 = vpack.c.b16 %v141, %v125
  %v222 = vpack.c.b16 %v142, %v126
  %v223 = vpack.c.b16 %v143, %v127
  %v224 = vpack.c.b16 %v160, %v144
  %v225 = vpack.c.b16 %v161, %v145
  %v226 = vpack.c.b16 %v162, %v146
  %v227 = vpack.c.b16 %v163, %v147
  %v228 = vpack.c.b16 %v164, %v148
  %v229 = vpack.c.b16 %v165, %v149
  %v230 = vpack.c.b16 %v166, %v150
  %v231 = vpack.c.b16 %v167, %v151
  %v232 = vpack.c.b16 %v168, %v152
  %v233 = vpack.c.b16 %v169, %v153
  %v234 = vpack.c.b16 %v170, %v154
  %v235 = vpack.c.b16 %v171, %v155
  %v236 = vpack.c.b16 %v172, %v156
  %v237 = vpack.c.b16 %v173, %v157
  %v238 = vpack.c.b16 %v174, %v158
  %v239 = vpack.c.b16 %v175, %v159
  %v240 = vpack.c.b16 %v192, %v176
  %v241 = vpack.c.b16 %v193, %v177
  %v242 = vpack.c.b16 %v194, %v178
  %v243 = vpack.c.b16 %v195, %v179
  %v244 = vpack.c.b16 %v196, %v180
  %v245 = vpack.c.b16 %v197, %v181
  %v246 = vpack.c.b16 %v198, %v182
  %v247 = vpack.c.b16 %v199, %v183
  %v248 = vpack.c.b16 %v200, %v184
  %v249 = vpack.c.b16 %v201, %v185
  %v250 = vpack.c.b16 %v202, %v186
  %v251 = vpack.c.b16 %v203, %v187
  %v252 = vpack.c.b16 %v204, %v188
  %v253 = vpack.c.b16 %v205, %v189
  %v254 = vpack.c.b16 %v206, %v190
  %v255 = vpack.c.b16 %v207, %v191
  %vm304 = vcmask 392192
  %v306 = vsel %vm304, %v15, 0
  %308 = vmatprep.subr.bf16.mxu0 %v209
  %309 = vmatpush1.bf16.msra.mxu0 %v208
  %310 = vmatprep.subr.bf16.mxu0 %v225
  %311 = vmatpush1.bf16.msra.mxu0 %v224
  %312 = vmatprep.subr.bf16.mxu0 %v241
  %313 = vmatpush1.bf16.msra.mxu0 %v240
  %314 = vmatprep.subr.bf16.mxu0 0
  %315 = vmatpush1.bf16.msra.mxu0 0
  %316 = vmatprep.subr.bf16.mxu0 0
  %317 = vmatpush1.bf16.msra.mxu0 0
  %318 = vmatprep.subr.bf16.mxu0 0
  %319 = vmatpush1.bf16.msra.mxu0 0
  %320 = vmatprep.subr.bf16.mxu0 0
  %321 = vmatpush1.bf16.msra.mxu0 0
  %322 = vmatprep.subr.bf16.mxu0 0
  %323 = vmatpush1.bf16.msra.mxu0 0
  %324 = vmatprep.subr.bf16.mxu0 0
  %325 = vmatpush1.bf16.msra.mxu0 0
  %326 = vmatprep.subr.bf16.mxu0 0
  %327 = vmatpush1.bf16.msra.mxu0 0
  %328 = vmatprep.subr.bf16.mxu0 0
  %329 = vmatpush1.bf16.msra.mxu0 0
  %330 = vmatprep.subr.bf16.mxu0 0
  %331 = vmatpush1.bf16.msra.mxu0 0
  %332 = vmatprep.subr.bf16.mxu0 0
  %333 = vmatpush1.bf16.msra.mxu0 0
  %334 = vmatprep.subr.bf16.mxu0 0
  %335 = vmatpush1.bf16.msra.mxu0 0
  %336 = vmatprep.subr.bf16.mxu0 0
  %337 = vmatpush1.bf16.msra.mxu0 0
  %338 = vmatprep.subr.bf16.mxu0 0
  %339 = vmatpush1.bf16.msra.mxu0 0
  %340 = vmatprep.mubr.bf16.mxu0 0
  %341 = vmatmul.mubr.bf16.gmra.mrb[0].mxu0 %v306
  %v342 = vpop.f32.mrb[0].mxu0
  %v343 = vadd.f32 0.0, %v342
  %v344 = vpop.f32.mrb[0].mxu0
  %v345 = vadd.f32 0.0, %v344
  %v346 = vpop.f32.mrb[0].mxu0
  %v347 = vpop.f32.mrb[0].mxu0
  %348 = vdwg.mxu0
  %349 = vmatprep.subr.bf16.mxu0 %v211
  %350 = vmatpush1.bf16.msra.mxu0 %v210
  %351 = vmatprep.subr.bf16.mxu0 %v227
  %352 = vmatpush1.bf16.msra.mxu0 %v226
  %353 = vmatprep.subr.bf16.mxu0 %v243
  %354 = vmatpush1.bf16.msra.mxu0 %v242
  %355 = vmatprep.subr.bf16.mxu0 0
  %356 = vmatpush1.bf16.msra.mxu0 0
  %357 = vmatprep.subr.bf16.mxu0 0
  %358 = vmatpush1.bf16.msra.mxu0 0
  %359 = vmatprep.subr.bf16.mxu0 0
  %360 = vmatpush1.bf16.msra.mxu0 0
  %361 = vmatprep.subr.bf16.mxu0 0
  %362 = vmatpush1.bf16.msra.mxu0 0
  %363 = vmatprep.subr.bf16.mxu0 0
  %364 = vmatpush1.bf16.msra.mxu0 0
  %365 = vmatprep.subr.bf16.mxu0 0
  %366 = vmatpush1.bf16.msra.mxu0 0
  %367 = vmatprep.subr.bf16.mxu0 0
  %368 = vmatpush1.bf16.msra.mxu0 0
  %369 = vmatprep.subr.bf16.mxu0 0
  %370 = vmatpush1.bf16.msra.mxu0 0
  %371 = vmatprep.subr.bf16.mxu0 0
  %372 = vmatpush1.bf16.msra.mxu0 0
  %373 = vmatprep.subr.bf16.mxu0 0
  %374 = vmatpush1.bf16.msra.mxu0 0
  %375 = vmatprep.subr.bf16.mxu0 0
  %376 = vmatpush1.bf16.msra.mxu0 0
  %377 = vmatprep.subr.bf16.mxu0 0
  %378 = vmatpush1.bf16.msra.mxu0 0
  %379 = vmatprep.subr.bf16.mxu0 0
  %380 = vmatpush1.bf16.msra.mxu0 0
  %381 = vmatprep.mubr.bf16.mxu0 0
  %382 = vmatmul.mubr.bf16.gmra.mrb[0].mxu0 %v306
  %v383 = vpop.f32.mrb[0].mxu0
  %v384 = vadd.f32 0.0, %v383
  %v385 = vpop.f32.mrb[0].mxu0
  %v386 = vadd.f32 0.0, %v385
  %v387 = vpop.f32.mrb[0].mxu0
  %v388 = vpop.f32.mrb[0].mxu0
  %389 = vdwg.mxu0
  %390 = vmatprep.subr.bf16.mxu0 %v213
  %391 = vmatpush1.bf16.msra.mxu0 %v212
  %392 = vmatprep.subr.bf16.mxu0 %v229
  %393 = vmatpush1.bf16.msra.mxu0 %v228
  %394 = vmatprep.subr.bf16.mxu0 %v245
  %395 = vmatpush1.bf16.msra.mxu0 %v244
  %396 = vmatprep.subr.bf16.mxu0 0
  %397 = vmatpush1.bf16.msra.mxu0 0
  %398 = vmatprep.subr.bf16.mxu0 0
  %399 = vmatpush1.bf16.msra.mxu0 0
  %400 = vmatprep.subr.bf16.mxu0 0
  %401 = vmatpush1.bf16.msra.mxu0 0
  %402 = vmatprep.subr.bf16.mxu0 0
  %403 = vmatpush1.bf16.msra.mxu0 0
  %404 = vmatprep.subr.bf16.mxu0 0
  %405 = vmatpush1.bf16.msra.mxu0 0
  %406 = vmatprep.subr.bf16.mxu0 0
  %407 = vmatpush1.bf16.msra.mxu0 0
  %408 = vmatprep.subr.bf16.mxu0 0
  %409 = vmatpush1.bf16.msra.mxu0 0
  %410 = vmatprep.subr.bf16.mxu0 0
  %411 = vmatpush1.bf16.msra.mxu0 0
  %412 = vmatprep.subr.bf16.mxu0 0
  %413 = vmatpush1.bf16.msra.mxu0 0
  %414 = vmatprep.subr.bf16.mxu0 0
  %415 = vmatpush1.bf16.msra.mxu0 0
  %416 = vmatprep.subr.bf16.mxu0 0
  %417 = vmatpush1.bf16.msra.mxu0 0
  %418 = vmatprep.subr.bf16.mxu0 0
  %419 = vmatpush1.bf16.msra.mxu0 0
  %420 = vmatprep.subr.bf16.mxu0 0
  %421 = vmatpush1.bf16.msra.mxu0 0
  %422 = vmatprep.mubr.bf16.mxu0 0
  %423 = vmatmul.mubr.bf16.gmra.mrb[0].mxu0 %v306
  %v424 = vpop.f32.mrb[0].mxu0
  %v425 = vadd.f32 0.0, %v424
  %v426 = vpop.f32.mrb[0].mxu0
  %v427 = vadd.f32 0.0, %v426
  %v428 = vpop.f32.mrb[0].mxu0
  %v429 = vpop.f32.mrb[0].mxu0
  %430 = vdwg.mxu0
  %431 = vmatprep.subr.bf16.mxu0 %v215
  %432 = vmatpush1.bf16.msra.mxu0 %v214
  %433 = vmatprep.subr.bf16.mxu0 %v231
  %434 = vmatpush1.bf16.msra.mxu0 %v230
  %435 = vmatprep.subr.bf16.mxu0 %v247
  %436 = vmatpush1.bf16.msra.mxu0 %v246
  %437 = vmatprep.subr.bf16.mxu0 0
  %438 = vmatpush1.bf16.msra.mxu0 0
  %439 = vmatprep.subr.bf16.mxu0 0
  %440 = vmatpush1.bf16.msra.mxu0 0
  %441 = vmatprep.subr.bf16.mxu0 0
  %442 = vmatpush1.bf16.msra.mxu0 0
  %443 = vmatprep.subr.bf16.mxu0 0
  %444 = vmatpush1.bf16.msra.mxu0 0
  %445 = vmatprep.subr.bf16.mxu0 0
  %446 = vmatpush1.bf16.msra.mxu0 0
  %447 = vmatprep.subr.bf16.mxu0 0
  %448 = vmatpush1.bf16.msra.mxu0 0
  %449 = vmatprep.subr.bf16.mxu0 0
  %450 = vmatpush1.bf16.msra.mxu0 0
  %451 = vmatprep.subr.bf16.mxu0 0
  %452 = vmatpush1.bf16.msra.mxu0 0
  %453 = vmatprep.subr.bf16.mxu0 0
  %454 = vmatpush1.bf16.msra.mxu0 0
  %455 = vmatprep.subr.bf16.mxu0 0
  %456 = vmatpush1.bf16.msra.mxu0 0
  %457 = vmatprep.subr.bf16.mxu0 0
  %458 = vmatpush1.bf16.msra.mxu0 0
  %459 = vmatprep.subr.bf16.mxu0 0
  %460 = vmatpush1.bf16.msra.mxu0 0
  %461 = vmatprep.subr.bf16.mxu0 0
  %462 = vmatpush1.bf16.msra.mxu0 0
  %463 = vmatprep.mubr.bf16.mxu0 0
  %464 = vmatmul.mubr.bf16.gmra.mrb[0].mxu0 %v306
  %v465 = vpop.f32.mrb[0].mxu0
  %v466 = vadd.f32 0.0, %v465
  %v467 = vpop.f32.mrb[0].mxu0
  %v468 = vadd.f32 0.0, %v467
  %v469 = vpop.f32.mrb[0].mxu0
  %v470 = vpop.f32.mrb[0].mxu0
  %471 = vdwg.mxu0
  %472 = vmatprep.subr.bf16.mxu0 %v217
  %473 = vmatpush1.bf16.msra.mxu0 %v216
  %474 = vmatprep.subr.bf16.mxu0 %v233
  %475 = vmatpush1.bf16.msra.mxu0 %v232
  %476 = vmatprep.subr.bf16.mxu0 %v249
  %477 = vmatpush1.bf16.msra.mxu0 %v248
  %478 = vmatprep.subr.bf16.mxu0 0
  %479 = vmatpush1.bf16.msra.mxu0 0
  %480 = vmatprep.subr.bf16.mxu0 0
  %481 = vmatpush1.bf16.msra.mxu0 0
  %482 = vmatprep.subr.bf16.mxu0 0
  %483 = vmatpush1.bf16.msra.mxu0 0
  %484 = vmatprep.subr.bf16.mxu0 0
  %485 = vmatpush1.bf16.msra.mxu0 0
  %486 = vmatprep.subr.bf16.mxu0 0
  %487 = vmatpush1.bf16.msra.mxu0 0
  %488 = vmatprep.subr.bf16.mxu0 0
  %489 = vmatpush1.bf16.msra.mxu0 0
  %490 = vmatprep.subr.bf16.mxu0 0
  %491 = vmatpush1.bf16.msra.mxu0 0
  %492 = vmatprep.subr.bf16.mxu0 0
  %493 = vmatpush1.bf16.msra.mxu0 0
  %494 = vmatprep.subr.bf16.mxu0 0
  %495 = vmatpush1.bf16.msra.mxu0 0
  %496 = vmatprep.subr.bf16.mxu0 0
  %497 = vmatpush1.bf16.msra.mxu0 0
  %498 = vmatprep.subr.bf16.mxu0 0
  %499 = vmatpush1.bf16.msra.mxu0 0
  %500 = vmatprep.subr.bf16.mxu0 0
  %501 = vmatpush1.bf16.msra.mxu0 0
  %502 = vmatprep.subr.bf16.mxu0 0
  %503 = vmatpush1.bf16.msra.mxu0 0
  %504 = vmatprep.mubr.bf16.mxu0 0
  %505 = vmatmul.mubr.bf16.gmra.mrb[0].mxu0 %v306
  %v506 = vpop.f32.mrb[0].mxu0
  %v507 = vadd.f32 0.0, %v506
  %v508 = vpop.f32.mrb[0].mxu0
  %v509 = vadd.f32 0.0, %v508
  %v510 = vpop.f32.mrb[0].mxu0
  %v511 = vpop.f32.mrb[0].mxu0
  %512 = vdwg.mxu0
  %513 = vmatprep.subr.bf16.mxu0 %v219
  %514 = vmatpush1.bf16.msra.mxu0 %v218
  %515 = vmatprep.subr.bf16.mxu0 %v235
  %516 = vmatpush1.bf16.msra.mxu0 %v234
  %517 = vmatprep.subr.bf16.mxu0 %v251
  %518 = vmatpush1.bf16.msra.mxu0 %v250
  %519 = vmatprep.subr.bf16.mxu0 0
  %520 = vmatpush1.bf16.msra.mxu0 0
  %521 = vmatprep.subr.bf16.mxu0 0
  %522 = vmatpush1.bf16.msra.mxu0 0
  %523 = vmatprep.subr.bf16.mxu0 0
  %524 = vmatpush1.bf16.msra.mxu0 0
  %525 = vmatprep.subr.bf16.mxu0 0
  %526 = vmatpush1.bf16.msra.mxu0 0
  %527 = vmatprep.subr.bf16.mxu0 0
  %528 = vmatpush1.bf16.msra.mxu0 0
  %529 = vmatprep.subr.bf16.mxu0 0
  %530 = vmatpush1.bf16.msra.mxu0 0
  %531 = vmatprep.subr.bf16.mxu0 0
  %532 = vmatpush1.bf16.msra.mxu0 0
  %533 = vmatprep.subr.bf16.mxu0 0
  %534 = vmatpush1.bf16.msra.mxu0 0
  %535 = vmatprep.subr.bf16.mxu0 0
  %536 = vmatpush1.bf16.msra.mxu0 0
  %537 = vmatprep.subr.bf16.mxu0 0
  %538 = vmatpush1.bf16.msra.mxu0 0
  %539 = vmatprep.subr.bf16.mxu0 0
  %540 = vmatpush1.bf16.msra.mxu0 0
  %541 = vmatprep.subr.bf16.mxu0 0
  %542 = vmatpush1.bf16.msra.mxu0 0
  %543 = vmatprep.subr.bf16.mxu0 0
  %544 = vmatpush1.bf16.msra.mxu0 0
  %545 = vmatprep.mubr.bf16.mxu0 0
  %546 = vmatmul.mubr.bf16.gmra.mrb[0].mxu0 %v306
  %v547 = vpop.f32.mrb[0].mxu0
  %v548 = vadd.f32 0.0, %v547
  %v549 = vpop.f32.mrb[0].mxu0
  %v550 = vadd.f32 0.0, %v549
  %v551 = vpop.f32.mrb[0].mxu0
  %v552 = vpop.f32.mrb[0].mxu0
  %553 = vdwg.mxu0
  %554 = vmatprep.subr.bf16.mxu0 %v221
  %555 = vmatpush1.bf16.msra.mxu0 %v220
  %556 = vmatprep.subr.bf16.mxu0 %v237
  %557 = vmatpush1.bf16.msra.mxu0 %v236
  %558 = vmatprep.subr.bf16.mxu0 %v253
  %559 = vmatpush1.bf16.msra.mxu0 %v252
  %560 = vmatprep.subr.bf16.mxu0 0
  %561 = vmatpush1.bf16.msra.mxu0 0
  %562 = vmatprep.subr.bf16.mxu0 0
  %563 = vmatpush1.bf16.msra.mxu0 0
  %564 = vmatprep.subr.bf16.mxu0 0
  %565 = vmatpush1.bf16.msra.mxu0 0
  %566 = vmatprep.subr.bf16.mxu0 0
  %567 = vmatpush1.bf16.msra.mxu0 0
  %568 = vmatprep.subr.bf16.mxu0 0
  %569 = vmatpush1.bf16.msra.mxu0 0
  %570 = vmatprep.subr.bf16.mxu0 0
  %571 = vmatpush1.bf16.msra.mxu0 0
  %572 = vmatprep.subr.bf16.mxu0 0
  %573 = vmatpush1.bf16.msra.mxu0 0
  %574 = vmatprep.subr.bf16.mxu0 0
  %575 = vmatpush1.bf16.msra.mxu0 0
  %576 = vmatprep.subr.bf16.mxu0 0
  %577 = vmatpush1.bf16.msra.mxu0 0
  %578 = vmatprep.subr.bf16.mxu0 0
  %579 = vmatpush1.bf16.msra.mxu0 0
  %580 = vmatprep.subr.bf16.mxu0 0
  %581 = vmatpush1.bf16.msra.mxu0 0
  %582 = vmatprep.subr.bf16.mxu0 0
  %583 = vmatpush1.bf16.msra.mxu0 0
  %584 = vmatprep.subr.bf16.mxu0 0
  %585 = vmatpush1.bf16.msra.mxu0 0
  %586 = vmatprep.mubr.bf16.mxu0 0
  %587 = vmatmul.mubr.bf16.gmra.mrb[0].mxu0 %v306
  %v588 = vpop.f32.mrb[0].mxu0
  %v589 = vadd.f32 0.0, %v588
  %v590 = vpop.f32.mrb[0].mxu0
  %v591 = vadd.f32 0.0, %v590
  %v592 = vpop.f32.mrb[0].mxu0
  %v593 = vpop.f32.mrb[0].mxu0
  %594 = vdwg.mxu0
  %595 = vmatprep.subr.bf16.mxu0 %v223
  %596 = vmatpush1.bf16.msra.mxu0 %v222
  %597 = vmatprep.subr.bf16.mxu0 %v239
  %598 = vmatpush1.bf16.msra.mxu0 %v238
  %599 = vmatprep.subr.bf16.mxu0 %v255
  %600 = vmatpush1.bf16.msra.mxu0 %v254
  %601 = vmatprep.subr.bf16.mxu0 0
  %602 = vmatpush1.bf16.msra.mxu0 0
  %603 = vmatprep.subr.bf16.mxu0 0
  %604 = vmatpush1.bf16.msra.mxu0 0
  %605 = vmatprep.subr.bf16.mxu0 0
  %606 = vmatpush1.bf16.msra.mxu0 0
  %607 = vmatprep.subr.bf16.mxu0 0
  %608 = vmatpush1.bf16.msra.mxu0 0
  %609 = vmatprep.subr.bf16.mxu0 0
  %610 = vmatpush1.bf16.msra.mxu0 0
  %611 = vmatprep.subr.bf16.mxu0 0
  %612 = vmatpush1.bf16.msra.mxu0 0
  %613 = vmatprep.subr.bf16.mxu0 0
  %614 = vmatpush1.bf16.msra.mxu0 0
  %615 = vmatprep.subr.bf16.mxu0 0
  %616 = vmatpush1.bf16.msra.mxu0 0
  %617 = vmatprep.subr.bf16.mxu0 0
  %618 = vmatpush1.bf16.msra.mxu0 0
  %619 = vmatprep.subr.bf16.mxu0 0
  %620 = vmatpush1.bf16.msra.mxu0 0
  %621 = vmatprep.subr.bf16.mxu0 0
  %622 = vmatpush1.bf16.msra.mxu0 0
  %623 = vmatprep.subr.bf16.mxu0 0
  %624 = vmatpush1.bf16.msra.mxu0 0
  %625 = vmatprep.subr.bf16.mxu0 0
  %626 = vmatpush1.bf16.msra.mxu0 0
  %627 = vmatprep.mubr.bf16.mxu0 0
  %628 = vmatmul.mubr.bf16.gmra.mrb[0].mxu0 %v306
  %v629 = vpop.f32.mrb[0].mxu0
  %v630 = vadd.f32 0.0, %v629
  %v631 = vpop.f32.mrb[0].mxu0
  %v632 = vadd.f32 0.0, %v631
  %v633 = vpop.f32.mrb[0].mxu0
  %v634 = vpop.f32.mrb[0].mxu0
  %635 = vdwg.mxu0
  %s636 = scalar_lea.vmem %s0, 384
  %v637 = vld [vmem:[%s636] sm:$0xff]
  %v638 = vld [vmem:[%s636 + $0x8] sm:$0xff]
  %v639 = vld [vmem:[%s636 + $0x10] sm:$0xff]
  %v640 = vld [vmem:[%s636 + $0x18] sm:$0xff]
  %v641 = vld [vmem:[%s636 + $0x20] sm:$0xff]
  %v642 = vld [vmem:[%s636 + $0x28] sm:$0xff]
  %v643 = vld [vmem:[%s636 + $0x30] sm:$0xff]
  %v644 = vld [vmem:[%s636 + $0x38] sm:$0xff]
  %v645 = vld [vmem:[%s636 + $0x40] sm:$0xff]
  %v646 = vld [vmem:[%s636 + $0x48] sm:$0xff]
  %v647 = vld [vmem:[%s636 + $0x50] sm:$0xff]
  %v648 = vld [vmem:[%s636 + $0x58] sm:$0xff]
  %v649 = vld [vmem:[%s636 + $0x60] sm:$0xff]
  %v650 = vld [vmem:[%s636 + $0x68] sm:$0xff]
  %v651 = vld [vmem:[%s636 + $0x70] sm:$0xff]
  %v652 = vld [vmem:[%s636 + $0x78] sm:$0xff]
  %v653 = vld [vmem:[%s636 + $0x80] sm:$0xff]
  %v654 = vld [vmem:[%s636 + $0x88] sm:$0xff]
  %v655 = vld [vmem:[%s636 + $0x90] sm:$0xff]
  %v656 = vld [vmem:[%s636 + $0x98] sm:$0xff]
  %v657 = vld [vmem:[%s636 + $0xa0] sm:$0xff]
  %v658 = vld [vmem:[%s636 + $0xa8] sm:$0xff]
  %v659 = vld [vmem:[%s636 + $0xb0] sm:$0xff]
  %v660 = vld [vmem:[%s636 + $0xb8] sm:$0xff]
  %v661 = vld [vmem:[%s636 + $0xc0] sm:$0xff]
  %v662 = vld [vmem:[%s636 + $0xc8] sm:$0xff]
  %v663 = vld [vmem:[%s636 + $0xd0] sm:$0xff]
  %v664 = vld [vmem:[%s636 + $0xd8] sm:$0xff]
  %v665 = vld [vmem:[%s636 + $0xe0] sm:$0xff]
  %v666 = vld [vmem:[%s636 + $0xe8] sm:$0xff]
  %v667 = vld [vmem:[%s636 + $0xf0] sm:$0xff]
  %v668 = vld [vmem:[%s636 + $0xf8] sm:$0xff]
  %v669 = vld [vmem:[%s636 + $0x100] sm:$0xff]
  %v670 = vld [vmem:[%s636 + $0x108] sm:$0xff]
  %v671 = vld [vmem:[%s636 + $0x110] sm:$0xff]
  %v672 = vld [vmem:[%s636 + $0x118] sm:$0xff]
  %v673 = vld [vmem:[%s636 + $0x120] sm:$0xff]
  %v674 = vld [vmem:[%s636 + $0x128] sm:$0xff]
  %v675 = vld [vmem:[%s636 + $0x130] sm:$0xff]
  %v676 = vld [vmem:[%s636 + $0x138] sm:$0xff]
  %v677 = vld [vmem:[%s636 + $0x140] sm:$0xff]
  %v678 = vld [vmem:[%s636 + $0x148] sm:$0xff]
  %v679 = vld [vmem:[%s636 + $0x150] sm:$0xff]
  %v680 = vld [vmem:[%s636 + $0x158] sm:$0xff]
  %v681 = vld [vmem:[%s636 + $0x160] sm:$0xff]
  %v682 = vld [vmem:[%s636 + $0x168] sm:$0xff]
  %v683 = vld [vmem:[%s636 + $0x170] sm:$0xff]
  %v684 = vld [vmem:[%s636 + $0x178] sm:$0xff]
  %v733 = vunpack.c.l.b16 %v637
  %v734 = vunpack.c.h.b16 %v637
  %v735 = vunpack.c.l.b16 %v638
  %v736 = vunpack.c.h.b16 %v638
  %v737 = vunpack.c.l.b16 %v639
  %v738 = vunpack.c.h.b16 %v639
  %v739 = vunpack.c.l.b16 %v640
  %v740 = vunpack.c.h.b16 %v640
  %v741 = vunpack.c.l.b16 %v641
  %v742 = vunpack.c.h.b16 %v641
  %v743 = vunpack.c.l.b16 %v642
  %v744 = vunpack.c.h.b16 %v642
  %v745 = vunpack.c.l.b16 %v643
  %v746 = vunpack.c.h.b16 %v643
  %v747 = vunpack.c.l.b16 %v644
  %v748 = vunpack.c.h.b16 %v644
  %v749 = vunpack.c.l.b16 %v645
  %v750 = vunpack.c.h.b16 %v645
  %v751 = vunpack.c.l.b16 %v646
  %v752 = vunpack.c.h.b16 %v646
  %v753 = vunpack.c.l.b16 %v647
  %v754 = vunpack.c.h.b16 %v647
  %v755 = vunpack.c.l.b16 %v648
  %v756 = vunpack.c.h.b16 %v648
  %v757 = vunpack.c.l.b16 %v649
  %v758 = vunpack.c.h.b16 %v649
  %v759 = vunpack.c.l.b16 %v650
  %v760 = vunpack.c.h.b16 %v650
  %v761 = vunpack.c.l.b16 %v651
  %v762 = vunpack.c.h.b16 %v651
  %v763 = vunpack.c.l.b16 %v652
  %v764 = vunpack.c.h.b16 %v652
  %v765 = vunpack.c.l.b16 %v653
  %v766 = vunpack.c.h.b16 %v653
  %v767 = vunpack.c.l.b16 %v654
  %v768 = vunpack.c.h.b16 %v654
  %v769 = vunpack.c.l.b16 %v655
  %v770 = vunpack.c.h.b16 %v655
  %v771 = vunpack.c.l.b16 %v656
  %v772 = vunpack.c.h.b16 %v656
  %v773 = vunpack.c.l.b16 %v657
  %v774 = vunpack.c.h.b16 %v657
  %v775 = vunpack.c.l.b16 %v658
  %v776 = vunpack.c.h.b16 %v658
  %v777 = vunpack.c.l.b16 %v659
  %v778 = vunpack.c.h.b16 %v659
  %v779 = vunpack.c.l.b16 %v660
  %v780 = vunpack.c.h.b16 %v660
  %v781 = vunpack.c.l.b16 %v661
  %v782 = vunpack.c.h.b16 %v661
  %v783 = vunpack.c.l.b16 %v662
  %v784 = vunpack.c.h.b16 %v662
  %v785 = vunpack.c.l.b16 %v663
  %v786 = vunpack.c.h.b16 %v663
  %v787 = vunpack.c.l.b16 %v664
  %v788 = vunpack.c.h.b16 %v664
  %v789 = vunpack.c.l.b16 %v665
  %v790 = vunpack.c.h.b16 %v665
  %v791 = vunpack.c.l.b16 %v666
  %v792 = vunpack.c.h.b16 %v666
  %v793 = vunpack.c.l.b16 %v667
  %v794 = vunpack.c.h.b16 %v667
  %v795 = vunpack.c.l.b16 %v668
  %v796 = vunpack.c.h.b16 %v668
  %v797 = vunpack.c.l.b16 %v669
  %v798 = vunpack.c.h.b16 %v669
  %v799 = vunpack.c.l.b16 %v670
  %v800 = vunpack.c.h.b16 %v670
  %v801 = vunpack.c.l.b16 %v671
  %v802 = vunpack.c.h.b16 %v671
  %v803 = vunpack.c.l.b16 %v672
  %v804 = vunpack.c.h.b16 %v672
  %v805 = vunpack.c.l.b16 %v673
  %v806 = vunpack.c.h.b16 %v673
  %v807 = vunpack.c.l.b16 %v674
  %v808 = vunpack.c.h.b16 %v674
  %v809 = vunpack.c.l.b16 %v675
  %v810 = vunpack.c.h.b16 %v675
  %v811 = vunpack.c.l.b16 %v676
  %v812 = vunpack.c.h.b16 %v676
  %v813 = vunpack.c.l.b16 %v677
  %v814 = vunpack.c.h.b16 %v677
  %v815 = vunpack.c.l.b16 %v678
  %v816 = vunpack.c.h.b16 %v678
  %v817 = vunpack.c.l.b16 %v679
  %v818 = vunpack.c.h.b16 %v679
  %v819 = vunpack.c.l.b16 %v680
  %v820 = vunpack.c.h.b16 %v680
  %v821 = vunpack.c.l.b16 %v681
  %v822 = vunpack.c.h.b16 %v681
  %v823 = vunpack.c.l.b16 %v682
  %v824 = vunpack.c.h.b16 %v682
  %v825 = vunpack.c.l.b16 %v683
  %v826 = vunpack.c.h.b16 %v683
  %v827 = vunpack.c.l.b16 %v684
  %v828 = vunpack.c.h.b16 %v684
  %v829 = vpack.c.b16 %v749, %v733
  %v830 = vpack.c.b16 %v750, %v734
  %v831 = vpack.c.b16 %v751, %v735
  %v832 = vpack.c.b16 %v752, %v736
  %v833 = vpack.c.b16 %v753, %v737
  %v834 = vpack.c.b16 %v754, %v738
  %v835 = vpack.c.b16 %v755, %v739
  %v836 = vpack.c.b16 %v756, %v740
  %v837 = vpack.c.b16 %v757, %v741
  %v838 = vpack.c.b16 %v758, %v742
  %v839 = vpack.c.b16 %v759, %v743
  %v840 = vpack.c.b16 %v760, %v744
  %v841 = vpack.c.b16 %v761, %v745
  %v842 = vpack.c.b16 %v762, %v746
  %v843 = vpack.c.b16 %v763, %v747
  %v844 = vpack.c.b16 %v764, %v748
  %v845 = vpack.c.b16 %v781, %v765
  %v846 = vpack.c.b16 %v782, %v766
  %v847 = vpack.c.b16 %v783, %v767
  %v848 = vpack.c.b16 %v784, %v768
  %v849 = vpack.c.b16 %v785, %v769
  %v850 = vpack.c.b16 %v786, %v770
  %v851 = vpack.c.b16 %v787, %v771
  %v852 = vpack.c.b16 %v788, %v772
  %v853 = vpack.c.b16 %v789, %v773
  %v854 = vpack.c.b16 %v790, %v774
  %v855 = vpack.c.b16 %v791, %v775
  %v856 = vpack.c.b16 %v792, %v776
  %v857 = vpack.c.b16 %v793, %v777
  %v858 = vpack.c.b16 %v794, %v778
  %v859 = vpack.c.b16 %v795, %v779
  %v860 = vpack.c.b16 %v796, %v780
  %v861 = vpack.c.b16 %v813, %v797
  %v862 = vpack.c.b16 %v814, %v798
  %v863 = vpack.c.b16 %v815, %v799
  %v864 = vpack.c.b16 %v816, %v800
  %v865 = vpack.c.b16 %v817, %v801
  %v866 = vpack.c.b16 %v818, %v802
  %v867 = vpack.c.b16 %v819, %v803
  %v868 = vpack.c.b16 %v820, %v804
  %v869 = vpack.c.b16 %v821, %v805
  %v870 = vpack.c.b16 %v822, %v806
  %v871 = vpack.c.b16 %v823, %v807
  %v872 = vpack.c.b16 %v824, %v808
  %v873 = vpack.c.b16 %v825, %v809
  %v874 = vpack.c.b16 %v826, %v810
  %v875 = vpack.c.b16 %v827, %v811
  %v876 = vpack.c.b16 %v828, %v812
  %925 = vmatprep.subr.bf16.mxu0 %v830
  %926 = vmatpush1.bf16.msra.mxu0 %v829
  %927 = vmatprep.subr.bf16.mxu0 %v846
  %928 = vmatpush1.bf16.msra.mxu0 %v845
  %929 = vmatprep.subr.bf16.mxu0 %v862
  %930 = vmatpush1.bf16.msra.mxu0 %v861
  %931 = vmatprep.subr.bf16.mxu0 0
  %932 = vmatpush1.bf16.msra.mxu0 0
  %933 = vmatprep.subr.bf16.mxu0 0
  %934 = vmatpush1.bf16.msra.mxu0 0
  %935 = vmatprep.subr.bf16.mxu0 0
  %936 = vmatpush1.bf16.msra.mxu0 0
  %937 = vmatprep.subr.bf16.mxu0 0
  %938 = vmatpush1.bf16.msra.mxu0 0
  %939 = vmatprep.subr.bf16.mxu0 0
  %940 = vmatpush1.bf16.msra.mxu0 0
  %941 = vmatprep.subr.bf16.mxu0 0
  %942 = vmatpush1.bf16.msra.mxu0 0
  %943 = vmatprep.subr.bf16.mxu0 0
  %944 = vmatpush1.bf16.msra.mxu0 0
  %945 = vmatprep.subr.bf16.mxu0 0
  %946 = vmatpush1.bf16.msra.mxu0 0
  %947 = vmatprep.subr.bf16.mxu0 0
  %948 = vmatpush1.bf16.msra.mxu0 0
  %949 = vmatprep.subr.bf16.mxu0 0
  %950 = vmatpush1.bf16.msra.mxu0 0
  %951 = vmatprep.subr.bf16.mxu0 0
  %952 = vmatpush1.bf16.msra.mxu0 0
  %953 = vmatprep.subr.bf16.mxu0 0
  %954 = vmatpush1.bf16.msra.mxu0 0
  %955 = vmatprep.subr.bf16.mxu0 0
  %956 = vmatpush1.bf16.msra.mxu0 0
  %957 = vmatprep.mubr.bf16.mxu0 0
  %958 = vmatmul.mubr.bf16.gmra.mrb[0].mxu0 %v306
  %v959 = vpop.f32.mrb[0].mxu0
  %v960 = vadd.f32 0.0, %v959
  %v961 = vpop.f32.mrb[0].mxu0
  %v962 = vadd.f32 0.0, %v961
  %v963 = vpop.f32.mrb[0].mxu0
  %v964 = vpop.f32.mrb[0].mxu0
  %965 = vdwg.mxu0
  %966 = vmatprep.subr.bf16.mxu0 %v832
  %967 = vmatpush1.bf16.msra.mxu0 %v831
  %968 = vmatprep.subr.bf16.mxu0 %v848
  %969 = vmatpush1.bf16.msra.mxu0 %v847
  %970 = vmatprep.subr.bf16.mxu0 %v864
  %971 = vmatpush1.bf16.msra.mxu0 %v863
  %972 = vmatprep.subr.bf16.mxu0 0
  %973 = vmatpush1.bf16.msra.mxu0 0
  %974 = vmatprep.subr.bf16.mxu0 0
  %975 = vmatpush1.bf16.msra.mxu0 0
  %976 = vmatprep.subr.bf16.mxu0 0
  %977 = vmatpush1.bf16.msra.mxu0 0
  %978 = vmatprep.subr.bf16.mxu0 0
  %979 = vmatpush1.bf16.msra.mxu0 0
  %980 = vmatprep.subr.bf16.mxu0 0
  %981 = vmatpush1.bf16.msra.mxu0 0
  %982 = vmatprep.subr.bf16.mxu0 0
  %983 = vmatpush1.bf16.msra.mxu0 0
  %984 = vmatprep.subr.bf16.mxu0 0
  %985 = vmatpush1.bf16.msra.mxu0 0
  %986 = vmatprep.subr.bf16.mxu0 0
  %987 = vmatpush1.bf16.msra.mxu0 0
  %988 = vmatprep.subr.bf16.mxu0 0
  %989 = vmatpush1.bf16.msra.mxu0 0
  %990 = vmatprep.subr.bf16.mxu0 0
  %991 = vmatpush1.bf16.msra.mxu0 0
  %992 = vmatprep.subr.bf16.mxu0 0
  %993 = vmatpush1.bf16.msra.mxu0 0
  %994 = vmatprep.subr.bf16.mxu0 0
  %995 = vmatpush1.bf16.msra.mxu0 0
  %996 = vmatprep.subr.bf16.mxu0 0
  %997 = vmatpush1.bf16.msra.mxu0 0
  %998 = vmatprep.mubr.bf16.mxu0 0
  %999 = vmatmul.mubr.bf16.gmra.mrb[0].mxu0 %v306
  %v1000 = vpop.f32.mrb[0].mxu0
  %v1001 = vadd.f32 0.0, %v1000
  %v1002 = vpop.f32.mrb[0].mxu0
  %v1003 = vadd.f32 0.0, %v1002
  %v1004 = vpop.f32.mrb[0].mxu0
  %v1005 = vpop.f32.mrb[0].mxu0
  %1006 = vdwg.mxu0
  %1007 = vmatprep.subr.bf16.mxu0 %v834
  %1008 = vmatpush1.bf16.msra.mxu0 %v833
  %1009 = vmatprep.subr.bf16.mxu0 %v850
  %1010 = vmatpush1.bf16.msra.mxu0 %v849
  %1011 = vmatprep.subr.bf16.mxu0 %v866
  %1012 = vmatpush1.bf16.msra.mxu0 %v865
  %1013 = vmatprep.subr.bf16.mxu0 0
  %1014 = vmatpush1.bf16.msra.mxu0 0
  %1015 = vmatprep.subr.bf16.mxu0 0
  %1016 = vmatpush1.bf16.msra.mxu0 0
  %1017 = vmatprep.subr.bf16.mxu0 0
  %1018 = vmatpush1.bf16.msra.mxu0 0
  %1019 = vmatprep.subr.bf16.mxu0 0
  %1020 = vmatpush1.bf16.msra.mxu0 0
  %1021 = vmatprep.subr.bf16.mxu0 0
  %1022 = vmatpush1.bf16.msra.mxu0 0
  %1023 = vmatprep.subr.bf16.mxu0 0
  %1024 = vmatpush1.bf16.msra.mxu0 0
  %1025 = vmatprep.subr.bf16.mxu0 0
  %1026 = vmatpush1.bf16.msra.mxu0 0
  %1027 = vmatprep.subr.bf16.mxu0 0
  %1028 = vmatpush1.bf16.msra.mxu0 0
  %1029 = vmatprep.subr.bf16.mxu0 0
  %1030 = vmatpush1.bf16.msra.mxu0 0
  %1031 = vmatprep.subr.bf16.mxu0 0
  %1032 = vmatpush1.bf16.msra.mxu0 0
  %1033 = vmatprep.subr.bf16.mxu0 0
  %1034 = vmatpush1.bf16.msra.mxu0 0
  %1035 = vmatprep.subr.bf16.mxu0 0
  %1036 = vmatpush1.bf16.msra.mxu0 0
  %1037 = vmatprep.subr.bf16.mxu0 0
  %1038 = vmatpush1.bf16.msra.mxu0 0
  %1039 = vmatprep.mubr.bf16.mxu0 0
  %1040 = vmatmul.mubr.bf16.gmra.mrb[0].mxu0 %v306
  %v1041 = vpop.f32.mrb[0].mxu0
  %v1042 = vadd.f32 0.0, %v1041
  %v1043 = vpop.f32.mrb[0].mxu0
  %v1044 = vadd.f32 0.0, %v1043
  %v1045 = vpop.f32.mrb[0].mxu0
  %v1046 = vpop.f32.mrb[0].mxu0
  %1047 = vdwg.mxu0
  %1048 = vmatprep.subr.bf16.mxu0 %v836
  %1049 = vmatpush1.bf16.msra.mxu0 %v835
  %1050 = vmatprep.subr.bf16.mxu0 %v852
  %1051 = vmatpush1.bf16.msra.mxu0 %v851
  %1052 = vmatprep.subr.bf16.mxu0 %v868
  %1053 = vmatpush1.bf16.msra.mxu0 %v867
  %1054 = vmatprep.subr.bf16.mxu0 0
  %1055 = vmatpush1.bf16.msra.mxu0 0
  %1056 = vmatprep.subr.bf16.mxu0 0
  %1057 = vmatpush1.bf16.msra.mxu0 0
  %1058 = vmatprep.subr.bf16.mxu0 0
  %1059 = vmatpush1.bf16.msra.mxu0 0
  %1060 = vmatprep.subr.bf16.mxu0 0
  %1061 = vmatpush1.bf16.msra.mxu0 0
  %1062 = vmatprep.subr.bf16.mxu0 0
  %1063 = vmatpush1.bf16.msra.mxu0 0
  %1064 = vmatprep.subr.bf16.mxu0 0
  %1065 = vmatpush1.bf16.msra.mxu0 0
  %1066 = vmatprep.subr.bf16.mxu0 0
  %1067 = vmatpush1.bf16.msra.mxu0 0
  %1068 = vmatprep.subr.bf16.mxu0 0
  %1069 = vmatpush1.bf16.msra.mxu0 0
  %1070 = vmatprep.subr.bf16.mxu0 0
  %1071 = vmatpush1.bf16.msra.mxu0 0
  %1072 = vmatprep.subr.bf16.mxu0 0
  %1073 = vmatpush1.bf16.msra.mxu0 0
  %1074 = vmatprep.subr.bf16.mxu0 0
  %1075 = vmatpush1.bf16.msra.mxu0 0
  %1076 = vmatprep.subr.bf16.mxu0 0
  %1077 = vmatpush1.bf16.msra.mxu0 0
  %1078 = vmatprep.subr.bf16.mxu0 0
  %1079 = vmatpush1.bf16.msra.mxu0 0
  %1080 = vmatprep.mubr.bf16.mxu0 0
  %1081 = vmatmul.mubr.bf16.gmra.mrb[0].mxu0 %v306
  %v1082 = vpop.f32.mrb[0].mxu0
  %v1083 = vadd.f32 0.0, %v1082
  %v1084 = vpop.f32.mrb[0].mxu0
  %v1085 = vadd.f32 0.0, %v1084
  %v1086 = vpop.f32.mrb[0].mxu0
  %v1087 = vpop.f32.mrb[0].mxu0
  %1088 = vdwg.mxu0
  %1089 = vmatprep.subr.bf16.mxu0 %v838
  %1090 = vmatpush1.bf16.msra.mxu0 %v837
  %1091 = vmatprep.subr.bf16.mxu0 %v854
  %1092 = vmatpush1.bf16.msra.mxu0 %v853
  %1093 = vmatprep.subr.bf16.mxu0 %v870
  %1094 = vmatpush1.bf16.msra.mxu0 %v869
  %1095 = vmatprep.subr.bf16.mxu0 0
  %1096 = vmatpush1.bf16.msra.mxu0 0
  %1097 = vmatprep.subr.bf16.mxu0 0
  %1098 = vmatpush1.bf16.msra.mxu0 0
  %1099 = vmatprep.subr.bf16.mxu0 0
  %1100 = vmatpush1.bf16.msra.mxu0 0
  %1101 = vmatprep.subr.bf16.mxu0 0
  %1102 = vmatpush1.bf16.msra.mxu0 0
  %1103 = vmatprep.subr.bf16.mxu0 0
  %1104 = vmatpush1.bf16.msra.mxu0 0
  %1105 = vmatprep.subr.bf16.mxu0 0
  %1106 = vmatpush1.bf16.msra.mxu0 0
  %1107 = vmatprep.subr.bf16.mxu0 0
  %1108 = vmatpush1.bf16.msra.mxu0 0
  %1109 = vmatprep.subr.bf16.mxu0 0
  %1110 = vmatpush1.bf16.msra.mxu0 0
  %1111 = vmatprep.subr.bf16.mxu0 0
  %1112 = vmatpush1.bf16.msra.mxu0 0
  %1113 = vmatprep.subr.bf16.mxu0 0
  %1114 = vmatpush1.bf16.msra.mxu0 0
  %1115 = vmatprep.subr.bf16.mxu0 0
  %1116 = vmatpush1.bf16.msra.mxu0 0
  %1117 = vmatprep.subr.bf16.mxu0 0
  %1118 = vmatpush1.bf16.msra.mxu0 0
  %1119 = vmatprep.subr.bf16.mxu0 0
  %1120 = vmatpush1.bf16.msra.mxu0 0
  %1121 = vmatprep.mubr.bf16.mxu0 0
  %1122 = vmatmul.mubr.bf16.gmra.mrb[0].mxu0 %v306
  %v1123 = vpop.f32.mrb[0].mxu0
  %v1124 = vadd.f32 0.0, %v1123
  %v1125 = vpop.f32.mrb[0].mxu0
  %v1126 = vadd.f32 0.0, %v1125
  %v1127 = vpop.f32.mrb[0].mxu0
  %v1128 = vpop.f32.mrb[0].mxu0
  %1129 = vdwg.mxu0
  %1130 = vmatprep.subr.bf16.mxu0 %v840
  %1131 = vmatpush1.bf16.msra.mxu0 %v839
  %1132 = vmatprep.subr.bf16.mxu0 %v856
  %1133 = vmatpush1.bf16.msra.mxu0 %v855
  %1134 = vmatprep.subr.bf16.mxu0 %v872
  %1135 = vmatpush1.bf16.msra.mxu0 %v871
  %1136 = vmatprep.subr.bf16.mxu0 0
  %1137 = vmatpush1.bf16.msra.mxu0 0
  %1138 = vmatprep.subr.bf16.mxu0 0
  %1139 = vmatpush1.bf16.msra.mxu0 0
  %1140 = vmatprep.subr.bf16.mxu0 0
  %1141 = vmatpush1.bf16.msra.mxu0 0
  %1142 = vmatprep.subr.bf16.mxu0 0
  %1143 = vmatpush1.bf16.msra.mxu0 0
  %1144 = vmatprep.subr.bf16.mxu0 0
  %1145 = vmatpush1.bf16.msra.mxu0 0
  %1146 = vmatprep.subr.bf16.mxu0 0
  %1147 = vmatpush1.bf16.msra.mxu0 0
  %1148 = vmatprep.subr.bf16.mxu0 0
  %1149 = vmatpush1.bf16.msra.mxu0 0
  %1150 = vmatprep.subr.bf16.mxu0 0
  %1151 = vmatpush1.bf16.msra.mxu0 0
  %1152 = vmatprep.subr.bf16.mxu0 0
  %1153 = vmatpush1.bf16.msra.mxu0 0
  %1154 = vmatprep.subr.bf16.mxu0 0
  %1155 = vmatpush1.bf16.msra.mxu0 0
  %1156 = vmatprep.subr.bf16.mxu0 0
  %1157 = vmatpush1.bf16.msra.mxu0 0
  %1158 = vmatprep.subr.bf16.mxu0 0
  %1159 = vmatpush1.bf16.msra.mxu0 0
  %1160 = vmatprep.subr.bf16.mxu0 0
  %1161 = vmatpush1.bf16.msra.mxu0 0
  %1162 = vmatprep.mubr.bf16.mxu0 0
  %1163 = vmatmul.mubr.bf16.gmra.mrb[0].mxu0 %v306
  %v1164 = vpop.f32.mrb[0].mxu0
  %v1165 = vadd.f32 0.0, %v1164
  %v1166 = vpop.f32.mrb[0].mxu0
  %v1167 = vadd.f32 0.0, %v1166
  %v1168 = vpop.f32.mrb[0].mxu0
  %v1169 = vpop.f32.mrb[0].mxu0
  %1170 = vdwg.mxu0
  %1171 = vmatprep.subr.bf16.mxu0 %v842
  %1172 = vmatpush1.bf16.msra.mxu0 %v841
  %1173 = vmatprep.subr.bf16.mxu0 %v858
  %1174 = vmatpush1.bf16.msra.mxu0 %v857
  %1175 = vmatprep.subr.bf16.mxu0 %v874
  %1176 = vmatpush1.bf16.msra.mxu0 %v873
  %1177 = vmatprep.subr.bf16.mxu0 0
  %1178 = vmatpush1.bf16.msra.mxu0 0
  %1179 = vmatprep.subr.bf16.mxu0 0
  %1180 = vmatpush1.bf16.msra.mxu0 0
  %1181 = vmatprep.subr.bf16.mxu0 0
  %1182 = vmatpush1.bf16.msra.mxu0 0
  %1183 = vmatprep.subr.bf16.mxu0 0
  %1184 = vmatpush1.bf16.msra.mxu0 0
  %1185 = vmatprep.subr.bf16.mxu0 0
  %1186 = vmatpush1.bf16.msra.mxu0 0
  %1187 = vmatprep.subr.bf16.mxu0 0
  %1188 = vmatpush1.bf16.msra.mxu0 0
  %1189 = vmatprep.subr.bf16.mxu0 0
  %1190 = vmatpush1.bf16.msra.mxu0 0
  %1191 = vmatprep.subr.bf16.mxu0 0
  %1192 = vmatpush1.bf16.msra.mxu0 0
  %1193 = vmatprep.subr.bf16.mxu0 0
  %1194 = vmatpush1.bf16.msra.mxu0 0
  %1195 = vmatprep.subr.bf16.mxu0 0
  %1196 = vmatpush1.bf16.msra.mxu0 0
  %1197 = vmatprep.subr.bf16.mxu0 0
  %1198 = vmatpush1.bf16.msra.mxu0 0
  %1199 = vmatprep.subr.bf16.mxu0 0
  %1200 = vmatpush1.bf16.msra.mxu0 0
  %1201 = vmatprep.subr.bf16.mxu0 0
  %1202 = vmatpush1.bf16.msra.mxu0 0
  %1203 = vmatprep.mubr.bf16.mxu0 0
  %1204 = vmatmul.mubr.bf16.gmra.mrb[0].mxu0 %v306
  %v1205 = vpop.f32.mrb[0].mxu0
  %v1206 = vadd.f32 0.0, %v1205
  %v1207 = vpop.f32.mrb[0].mxu0
  %v1208 = vadd.f32 0.0, %v1207
  %v1209 = vpop.f32.mrb[0].mxu0
  %v1210 = vpop.f32.mrb[0].mxu0
  %1211 = vdwg.mxu0
  %1212 = vmatprep.subr.bf16.mxu0 %v844
  %1213 = vmatpush1.bf16.msra.mxu0 %v843
  %1214 = vmatprep.subr.bf16.mxu0 %v860
  %1215 = vmatpush1.bf16.msra.mxu0 %v859
  %1216 = vmatprep.subr.bf16.mxu0 %v876
  %1217 = vmatpush1.bf16.msra.mxu0 %v875
  %1218 = vmatprep.subr.bf16.mxu0 0
  %1219 = vmatpush1.bf16.msra.mxu0 0
  %1220 = vmatprep.subr.bf16.mxu0 0
  %1221 = vmatpush1.bf16.msra.mxu0 0
  %1222 = vmatprep.subr.bf16.mxu0 0
  %1223 = vmatpush1.bf16.msra.mxu0 0
  %1224 = vmatprep.subr.bf16.mxu0 0
  %1225 = vmatpush1.bf16.msra.mxu0 0
  %1226 = vmatprep.subr.bf16.mxu0 0
  %1227 = vmatpush1.bf16.msra.mxu0 0
  %1228 = vmatprep.subr.bf16.mxu0 0
  %1229 = vmatpush1.bf16.msra.mxu0 0
  %1230 = vmatprep.subr.bf16.mxu0 0
  %1231 = vmatpush1.bf16.msra.mxu0 0
  %1232 = vmatprep.subr.bf16.mxu0 0
  %1233 = vmatpush1.bf16.msra.mxu0 0
  %1234 = vmatprep.subr.bf16.mxu0 0
  %1235 = vmatpush1.bf16.msra.mxu0 0
  %1236 = vmatprep.subr.bf16.mxu0 0
  %1237 = vmatpush1.bf16.msra.mxu0 0
  %1238 = vmatprep.subr.bf16.mxu0 0
  %1239 = vmatpush1.bf16.msra.mxu0 0
  %1240 = vmatprep.subr.bf16.mxu0 0
  %1241 = vmatpush1.bf16.msra.mxu0 0
  %1242 = vmatprep.subr.bf16.mxu0 0
  %1243 = vmatpush1.bf16.msra.mxu0 0
  %1244 = vmatprep.mubr.bf16.mxu0 0
  %1245 = vmatmul.mubr.bf16.gmra.mrb[0].mxu0 %v306
  %v1246 = vpop.f32.mrb[0].mxu0
  %v1247 = vadd.f32 0.0, %v1246
  %v1248 = vpop.f32.mrb[0].mxu0
  %v1249 = vadd.f32 0.0, %v1248
  %v1250 = vpop.f32.mrb[0].mxu0
  %v1251 = vpop.f32.mrb[0].mxu0
  %1252 = vdwg.mxu0
  %v1253 = vmax.f32 %v343, %v960
  %v1254 = vmax.f32 %v345, %v962
  %v1255 = vmax.f32 %v384, %v1001
  %v1256 = vmax.f32 %v386, %v1003
  %v1257 = vmax.f32 %v425, %v1042
  %v1258 = vmax.f32 %v427, %v1044
  %v1259 = vmax.f32 %v466, %v1083
  %v1260 = vmax.f32 %v468, %v1085
  %v1261 = vmax.f32 %v507, %v1124
  %v1262 = vmax.f32 %v509, %v1126
  %v1263 = vmax.f32 %v548, %v1165
  %v1264 = vmax.f32 %v550, %v1167
  %v1265 = vmax.f32 %v589, %v1206
  %v1266 = vmax.f32 %v591, %v1208
  %v1267 = vmax.f32 %v630, %v1247
  %v1268 = vmax.f32 %v632, %v1249
  %s1269 = scalar_lea.vmem %s0, 768
  %v1270 = vld [vmem:[%s1269] sm:$0xff]
  %v1271 = vld [vmem:[%s1269 + $0x8] sm:$0xff]
  %v1272 = vld [vmem:[%s1269 + $0x10] sm:$0xff]
  %v1273 = vld [vmem:[%s1269 + $0x18] sm:$0xff]
  %v1274 = vld [vmem:[%s1269 + $0x20] sm:$0xff]
  %v1275 = vld [vmem:[%s1269 + $0x28] sm:$0xff]
  %v1276 = vld [vmem:[%s1269 + $0x30] sm:$0xff]
  %v1277 = vld [vmem:[%s1269 + $0x38] sm:$0xff]
  %v1278 = vld [vmem:[%s1269 + $0x40] sm:$0xff]
  %v1279 = vld [vmem:[%s1269 + $0x48] sm:$0xff]
  %v1280 = vld [vmem:[%s1269 + $0x50] sm:$0xff]
  %v1281 = vld [vmem:[%s1269 + $0x58] sm:$0xff]
  %v1282 = vld [vmem:[%s1269 + $0x60] sm:$0xff]
  %v1283 = vld [vmem:[%s1269 + $0x68] sm:$0xff]
  %v1284 = vld [vmem:[%s1269 + $0x70] sm:$0xff]
  %v1285 = vld [vmem:[%s1269 + $0x78] sm:$0xff]
  %v1286 = vld [vmem:[%s1269 + $0x80] sm:$0xff]
  %v1287 = vld [vmem:[%s1269 + $0x88] sm:$0xff]
  %v1288 = vld [vmem:[%s1269 + $0x90] sm:$0xff]
  %v1289 = vld [vmem:[%s1269 + $0x98] sm:$0xff]
  %v1290 = vld [vmem:[%s1269 + $0xa0] sm:$0xff]
  %v1291 = vld [vmem:[%s1269 + $0xa8] sm:$0xff]
  %v1292 = vld [vmem:[%s1269 + $0xb0] sm:$0xff]
  %v1293 = vld [vmem:[%s1269 + $0xb8] sm:$0xff]
  %v1294 = vld [vmem:[%s1269 + $0xc0] sm:$0xff]
  %v1295 = vld [vmem:[%s1269 + $0xc8] sm:$0xff]
  %v1296 = vld [vmem:[%s1269 + $0xd0] sm:$0xff]
  %v1297 = vld [vmem:[%s1269 + $0xd8] sm:$0xff]
  %v1298 = vld [vmem:[%s1269 + $0xe0] sm:$0xff]
  %v1299 = vld [vmem:[%s1269 + $0xe8] sm:$0xff]
  %v1300 = vld [vmem:[%s1269 + $0xf0] sm:$0xff]
  %v1301 = vld [vmem:[%s1269 + $0xf8] sm:$0xff]
  %v1302 = vld [vmem:[%s1269 + $0x100] sm:$0xff]
  %v1303 = vld [vmem:[%s1269 + $0x108] sm:$0xff]
  %v1304 = vld [vmem:[%s1269 + $0x110] sm:$0xff]
  %v1305 = vld [vmem:[%s1269 + $0x118] sm:$0xff]
  %v1306 = vld [vmem:[%s1269 + $0x120] sm:$0xff]
  %v1307 = vld [vmem:[%s1269 + $0x128] sm:$0xff]
  %v1308 = vld [vmem:[%s1269 + $0x130] sm:$0xff]
  %v1309 = vld [vmem:[%s1269 + $0x138] sm:$0xff]
  %v1310 = vld [vmem:[%s1269 + $0x140] sm:$0xff]
  %v1311 = vld [vmem:[%s1269 + $0x148] sm:$0xff]
  %v1312 = vld [vmem:[%s1269 + $0x150] sm:$0xff]
  %v1313 = vld [vmem:[%s1269 + $0x158] sm:$0xff]
  %v1314 = vld [vmem:[%s1269 + $0x160] sm:$0xff]
  %v1315 = vld [vmem:[%s1269 + $0x168] sm:$0xff]
  %v1316 = vld [vmem:[%s1269 + $0x170] sm:$0xff]
  %v1317 = vld [vmem:[%s1269 + $0x178] sm:$0xff]
  %v1366 = vunpack.c.l.b16 %v1270
  %v1367 = vunpack.c.h.b16 %v1270
  %v1368 = vunpack.c.l.b16 %v1271
  %v1369 = vunpack.c.h.b16 %v1271
  %v1370 = vunpack.c.l.b16 %v1272
  %v1371 = vunpack.c.h.b16 %v1272
  %v1372 = vunpack.c.l.b16 %v1273
  %v1373 = vunpack.c.h.b16 %v1273
  %v1374 = vunpack.c.l.b16 %v1274
  %v1375 = vunpack.c.h.b16 %v1274
  %v1376 = vunpack.c.l.b16 %v1275
  %v1377 = vunpack.c.h.b16 %v1275
  %v1378 = vunpack.c.l.b16 %v1276
  %v1379 = vunpack.c.h.b16 %v1276
  %v1380 = vunpack.c.l.b16 %v1277
  %v1381 = vunpack.c.h.b16 %v1277
  %v1382 = vunpack.c.l.b16 %v1278
  %v1383 = vunpack.c.h.b16 %v1278
  %v1384 = vunpack.c.l.b16 %v1279
  %v1385 = vunpack.c.h.b16 %v1279
  %v1386 = vunpack.c.l.b16 %v1280
  %v1387 = vunpack.c.h.b16 %v1280
  %v1388 = vunpack.c.l.b16 %v1281
  %v1389 = vunpack.c.h.b16 %v1281
  %v1390 = vunpack.c.l.b16 %v1282
  %v1391 = vunpack.c.h.b16 %v1282
  %v1392 = vunpack.c.l.b16 %v1283
  %v1393 = vunpack.c.h.b16 %v1283
  %v1394 = vunpack.c.l.b16 %v1284
  %v1395 = vunpack.c.h.b16 %v1284
  %v1396 = vunpack.c.l.b16 %v1285
  %v1397 = vunpack.c.h.b16 %v1285
  %v1398 = vunpack.c.l.b16 %v1286
  %v1399 = vunpack.c.h.b16 %v1286
  %v1400 = vunpack.c.l.b16 %v1287
  %v1401 = vunpack.c.h.b16 %v1287
  %v1402 = vunpack.c.l.b16 %v1288
  %v1403 = vunpack.c.h.b16 %v1288
  %v1404 = vunpack.c.l.b16 %v1289
  %v1405 = vunpack.c.h.b16 %v1289
  %v1406 = vunpack.c.l.b16 %v1290
  %v1407 = vunpack.c.h.b16 %v1290
  %v1408 = vunpack.c.l.b16 %v1291
  %v1409 = vunpack.c.h.b16 %v1291
  %v1410 = vunpack.c.l.b16 %v1292
  %v1411 = vunpack.c.h.b16 %v1292
  %v1412 = vunpack.c.l.b16 %v1293
  %v1413 = vunpack.c.h.b16 %v1293
  %v1414 = vunpack.c.l.b16 %v1294
  %v1415 = vunpack.c.h.b16 %v1294
  %v1416 = vunpack.c.l.b16 %v1295
  %v1417 = vunpack.c.h.b16 %v1295
  %v1418 = vunpack.c.l.b16 %v1296
  %v1419 = vunpack.c.h.b16 %v1296
  %v1420 = vunpack.c.l.b16 %v1297
  %v1421 = vunpack.c.h.b16 %v1297
  %v1422 = vunpack.c.l.b16 %v1298
  %v1423 = vunpack.c.h.b16 %v1298
  %v1424 = vunpack.c.l.b16 %v1299
  %v1425 = vunpack.c.h.b16 %v1299
  %v1426 = vunpack.c.l.b16 %v1300
  %v1427 = vunpack.c.h.b16 %v1300
  %v1428 = vunpack.c.l.b16 %v1301
  %v1429 = vunpack.c.h.b16 %v1301
  %v1430 = vunpack.c.l.b16 %v1302
  %v1431 = vunpack.c.h.b16 %v1302
  %v1432 = vunpack.c.l.b16 %v1303
  %v1433 = vunpack.c.h.b16 %v1303
  %v1434 = vunpack.c.l.b16 %v1304
  %v1435 = vunpack.c.h.b16 %v1304
  %v1436 = vunpack.c.l.b16 %v1305
  %v1437 = vunpack.c.h.b16 %v1305
  %v1438 = vunpack.c.l.b16 %v1306
  %v1439 = vunpack.c.h.b16 %v1306
  %v1440 = vunpack.c.l.b16 %v1307
  %v1441 = vunpack.c.h.b16 %v1307
  %v1442 = vunpack.c.l.b16 %v1308
  %v1443 = vunpack.c.h.b16 %v1308
  %v1444 = vunpack.c.l.b16 %v1309
  %v1445 = vunpack.c.h.b16 %v1309
  %v1446 = vunpack.c.l.b16 %v1310
  %v1447 = vunpack.c.h.b16 %v1310
  %v1448 = vunpack.c.l.b16 %v1311
  %v1449 = vunpack.c.h.b16 %v1311
  %v1450 = vunpack.c.l.b16 %v1312
  %v1451 = vunpack.c.h.b16 %v1312
  %v1452 = vunpack.c.l.b16 %v1313
  %v1453 = vunpack.c.h.b16 %v1313
  %v1454 = vunpack.c.l.b16 %v1314
  %v1455 = vunpack.c.h.b16 %v1314
  %v1456 = vunpack.c.l.b16 %v1315
  %v1457 = vunpack.c.h.b16 %v1315
  %v1458 = vunpack.c.l.b16 %v1316
  %v1459 = vunpack.c.h.b16 %v1316
  %v1460 = vunpack.c.l.b16 %v1317
  %v1461 = vunpack.c.h.b16 %v1317
  %v1462 = vpack.c.b16 %v1382, %v1366
  %v1463 = vpack.c.b16 %v1383, %v1367
  %v1464 = vpack.c.b16 %v1384, %v1368
  %v1465 = vpack.c.b16 %v1385, %v1369
  %v1466 = vpack.c.b16 %v1386, %v1370
  %v1467 = vpack.c.b16 %v1387, %v1371
  %v1468 = vpack.c.b16 %v1388, %v1372
  %v1469 = vpack.c.b16 %v1389, %v1373
  %v1470 = vpack.c.b16 %v1390, %v1374
  %v1471 = vpack.c.b16 %v1391, %v1375
  %v1472 = vpack.c.b16 %v1392, %v1376
  %v1473 = vpack.c.b16 %v1393, %v1377
  %v1474 = vpack.c.b16 %v1394, %v1378
  %v1475 = vpack.c.b16 %v1395, %v1379
  %v1476 = vpack.c.b16 %v1396, %v1380
  %v1477 = vpack.c.b16 %v1397, %v1381
  %v1478 = vpack.c.b16 %v1414, %v1398
  %v1479 = vpack.c.b16 %v1415, %v1399
  %v1480 = vpack.c.b16 %v1416, %v1400
  %v1481 = vpack.c.b16 %v1417, %v1401
  %v1482 = vpack.c.b16 %v1418, %v1402
  %v1483 = vpack.c.b16 %v1419, %v1403
  %v1484 = vpack.c.b16 %v1420, %v1404
  %v1485 = vpack.c.b16 %v1421, %v1405
  %v1486 = vpack.c.b16 %v1422, %v1406
  %v1487 = vpack.c.b16 %v1423, %v1407
  %v1488 = vpack.c.b16 %v1424, %v1408
  %v1489 = vpack.c.b16 %v1425, %v1409
  %v1490 = vpack.c.b16 %v1426, %v1410
  %v1491 = vpack.c.b16 %v1427, %v1411
  %v1492 = vpack.c.b16 %v1428, %v1412
  %v1493 = vpack.c.b16 %v1429, %v1413
  %v1494 = vpack.c.b16 %v1446, %v1430
  %v1495 = vpack.c.b16 %v1447, %v1431
  %v1496 = vpack.c.b16 %v1448, %v1432
  %v1497 = vpack.c.b16 %v1449, %v1433
  %v1498 = vpack.c.b16 %v1450, %v1434
  %v1499 = vpack.c.b16 %v1451, %v1435
  %v1500 = vpack.c.b16 %v1452, %v1436
  %v1501 = vpack.c.b16 %v1453, %v1437
  %v1502 = vpack.c.b16 %v1454, %v1438
  %v1503 = vpack.c.b16 %v1455, %v1439
  %v1504 = vpack.c.b16 %v1456, %v1440
  %v1505 = vpack.c.b16 %v1457, %v1441
  %v1506 = vpack.c.b16 %v1458, %v1442
  %v1507 = vpack.c.b16 %v1459, %v1443
  %v1508 = vpack.c.b16 %v1460, %v1444
  %v1509 = vpack.c.b16 %v1461, %v1445
  %1558 = vmatprep.subr.bf16.mxu0 %v1463
  %1559 = vmatpush1.bf16.msra.mxu0 %v1462
  %1560 = vmatprep.subr.bf16.mxu0 %v1479
  %1561 = vmatpush1.bf16.msra.mxu0 %v1478
  %1562 = vmatprep.subr.bf16.mxu0 %v1495
  %1563 = vmatpush1.bf16.msra.mxu0 %v1494
  %1564 = vmatprep.subr.bf16.mxu0 0
  %1565 = vmatpush1.bf16.msra.mxu0 0
  %1566 = vmatprep.subr.bf16.mxu0 0
  %1567 = vmatpush1.bf16.msra.mxu0 0
  %1568 = vmatprep.subr.bf16.mxu0 0
  %1569 = vmatpush1.bf16.msra.mxu0 0
  %1570 = vmatprep.subr.bf16.mxu0 0
  %1571 = vmatpush1.bf16.msra.mxu0 0
  %1572 = vmatprep.subr.bf16.mxu0 0
  %1573 = vmatpush1.bf16.msra.mxu0 0
  %1574 = vmatprep.subr.bf16.mxu0 0
  %1575 = vmatpush1.bf16.msra.mxu0 0
  %1576 = vmatprep.subr.bf16.mxu0 0
  %1577 = vmatpush1.bf16.msra.mxu0 0
  %1578 = vmatprep.subr.bf16.mxu0 0
  %1579 = vmatpush1.bf16.msra.mxu0 0
  %1580 = vmatprep.subr.bf16.mxu0 0
  %1581 = vmatpush1.bf16.msra.mxu0 0
  %1582 = vmatprep.subr.bf16.mxu0 0
  %1583 = vmatpush1.bf16.msra.mxu0 0
  %1584 = vmatprep.subr.bf16.mxu0 0
  %1585 = vmatpush1.bf16.msra.mxu0 0
  %1586 = vmatprep.subr.bf16.mxu0 0
  %1587 = vmatpush1.bf16.msra.mxu0 0
  %1588 = vmatprep.subr.bf16.mxu0 0
  %1589 = vmatpush1.bf16.msra.mxu0 0
  %1590 = vmatprep.mubr.bf16.mxu0 0
  %1591 = vmatmul.mubr.bf16.gmra.mrb[0].mxu0 %v306
  %v1592 = vpop.f32.mrb[0].mxu0
  %v1593 = vadd.f32 0.0, %v1592
  %v1594 = vpop.f32.mrb[0].mxu0
  %v1595 = vadd.f32 0.0, %v1594
  %v1596 = vpop.f32.mrb[0].mxu0
  %v1597 = vpop.f32.mrb[0].mxu0
  %1598 = vdwg.mxu0
  %1599 = vmatprep.subr.bf16.mxu0 %v1465
  %1600 = vmatpush1.bf16.msra.mxu0 %v1464
  %1601 = vmatprep.subr.bf16.mxu0 %v1481
  %1602 = vmatpush1.bf16.msra.mxu0 %v1480
  %1603 = vmatprep.subr.bf16.mxu0 %v1497
  %1604 = vmatpush1.bf16.msra.mxu0 %v1496
  %1605 = vmatprep.subr.bf16.mxu0 0
  %1606 = vmatpush1.bf16.msra.mxu0 0
  %1607 = vmatprep.subr.bf16.mxu0 0
  %1608 = vmatpush1.bf16.msra.mxu0 0
  %1609 = vmatprep.subr.bf16.mxu0 0
  %1610 = vmatpush1.bf16.msra.mxu0 0
  %1611 = vmatprep.subr.bf16.mxu0 0
  %1612 = vmatpush1.bf16.msra.mxu0 0
  %1613 = vmatprep.subr.bf16.mxu0 0
  %1614 = vmatpush1.bf16.msra.mxu0 0
  %1615 = vmatprep.subr.bf16.mxu0 0
  %1616 = vmatpush1.bf16.msra.mxu0 0
  %1617 = vmatprep.subr.bf16.mxu0 0
  %1618 = vmatpush1.bf16.msra.mxu0 0
  %1619 = vmatprep.subr.bf16.mxu0 0
  %1620 = vmatpush1.bf16.msra.mxu0 0
  %1621 = vmatprep.subr.bf16.mxu0 0
  %1622 = vmatpush1.bf16.msra.mxu0 0
  %1623 = vmatprep.subr.bf16.mxu0 0
  %1624 = vmatpush1.bf16.msra.mxu0 0
  %1625 = vmatprep.subr.bf16.mxu0 0
  %1626 = vmatpush1.bf16.msra.mxu0 0
  %1627 = vmatprep.subr.bf16.mxu0 0
  %1628 = vmatpush1.bf16.msra.mxu0 0
  %1629 = vmatprep.subr.bf16.mxu0 0
  %1630 = vmatpush1.bf16.msra.mxu0 0
  %1631 = vmatprep.mubr.bf16.mxu0 0
  %1632 = vmatmul.mubr.bf16.gmra.mrb[0].mxu0 %v306
  %v1633 = vpop.f32.mrb[0].mxu0
  %v1634 = vadd.f32 0.0, %v1633
  %v1635 = vpop.f32.mrb[0].mxu0
  %v1636 = vadd.f32 0.0, %v1635
  %v1637 = vpop.f32.mrb[0].mxu0
  %v1638 = vpop.f32.mrb[0].mxu0
  %1639 = vdwg.mxu0
  %1640 = vmatprep.subr.bf16.mxu0 %v1467
  %1641 = vmatpush1.bf16.msra.mxu0 %v1466
  %1642 = vmatprep.subr.bf16.mxu0 %v1483
  %1643 = vmatpush1.bf16.msra.mxu0 %v1482
  %1644 = vmatprep.subr.bf16.mxu0 %v1499
  %1645 = vmatpush1.bf16.msra.mxu0 %v1498
  %1646 = vmatprep.subr.bf16.mxu0 0
  %1647 = vmatpush1.bf16.msra.mxu0 0
  %1648 = vmatprep.subr.bf16.mxu0 0
  %1649 = vmatpush1.bf16.msra.mxu0 0
  %1650 = vmatprep.subr.bf16.mxu0 0
  %1651 = vmatpush1.bf16.msra.mxu0 0
  %1652 = vmatprep.subr.bf16.mxu0 0
  %1653 = vmatpush1.bf16.msra.mxu0 0
  %1654 = vmatprep.subr.bf16.mxu0 0
  %1655 = vmatpush1.bf16.msra.mxu0 0
  %1656 = vmatprep.subr.bf16.mxu0 0
  %1657 = vmatpush1.bf16.msra.mxu0 0
  %1658 = vmatprep.subr.bf16.mxu0 0
  %1659 = vmatpush1.bf16.msra.mxu0 0
  %1660 = vmatprep.subr.bf16.mxu0 0
  %1661 = vmatpush1.bf16.msra.mxu0 0
  %1662 = vmatprep.subr.bf16.mxu0 0
  %1663 = vmatpush1.bf16.msra.mxu0 0
  %1664 = vmatprep.subr.bf16.mxu0 0
  %1665 = vmatpush1.bf16.msra.mxu0 0
  %1666 = vmatprep.subr.bf16.mxu0 0
  %1667 = vmatpush1.bf16.msra.mxu0 0
  %1668 = vmatprep.subr.bf16.mxu0 0
  %1669 = vmatpush1.bf16.msra.mxu0 0
  %1670 = vmatprep.subr.bf16.mxu0 0
  %1671 = vmatpush1.bf16.msra.mxu0 0
  %1672 = vmatprep.mubr.bf16.mxu0 0
  %1673 = vmatmul.mubr.bf16.gmra.mrb[0].mxu0 %v306
  %v1674 = vpop.f32.mrb[0].mxu0
  %v1675 = vadd.f32 0.0, %v1674
  %v1676 = vpop.f32.mrb[0].mxu0
  %v1677 = vadd.f32 0.0, %v1676
  %v1678 = vpop.f32.mrb[0].mxu0
  %v1679 = vpop.f32.mrb[0].mxu0
  %1680 = vdwg.mxu0
  %1681 = vmatprep.subr.bf16.mxu0 %v1469
  %1682 = vmatpush1.bf16.msra.mxu0 %v1468
  %1683 = vmatprep.subr.bf16.mxu0 %v1485
  %1684 = vmatpush1.bf16.msra.mxu0 %v1484
  %1685 = vmatprep.subr.bf16.mxu0 %v1501
  %1686 = vmatpush1.bf16.msra.mxu0 %v1500
  %1687 = vmatprep.subr.bf16.mxu0 0
  %1688 = vmatpush1.bf16.msra.mxu0 0
  %1689 = vmatprep.subr.bf16.mxu0 0
  %1690 = vmatpush1.bf16.msra.mxu0 0
  %1691 = vmatprep.subr.bf16.mxu0 0
  %1692 = vmatpush1.bf16.msra.mxu0 0
  %1693 = vmatprep.subr.bf16.mxu0 0
  %1694 = vmatpush1.bf16.msra.mxu0 0
  %1695 = vmatprep.subr.bf16.mxu0 0
  %1696 = vmatpush1.bf16.msra.mxu0 0
  %1697 = vmatprep.subr.bf16.mxu0 0
  %1698 = vmatpush1.bf16.msra.mxu0 0
  %1699 = vmatprep.subr.bf16.mxu0 0
  %1700 = vmatpush1.bf16.msra.mxu0 0
  %1701 = vmatprep.subr.bf16.mxu0 0
  %1702 = vmatpush1.bf16.msra.mxu0 0
  %1703 = vmatprep.subr.bf16.mxu0 0
  %1704 = vmatpush1.bf16.msra.mxu0 0
  %1705 = vmatprep.subr.bf16.mxu0 0
  %1706 = vmatpush1.bf16.msra.mxu0 0
  %1707 = vmatprep.subr.bf16.mxu0 0
  %1708 = vmatpush1.bf16.msra.mxu0 0
  %1709 = vmatprep.subr.bf16.mxu0 0
  %1710 = vmatpush1.bf16.msra.mxu0 0
  %1711 = vmatprep.subr.bf16.mxu0 0
  %1712 = vmatpush1.bf16.msra.mxu0 0
  %1713 = vmatprep.mubr.bf16.mxu0 0
  %1714 = vmatmul.mubr.bf16.gmra.mrb[0].mxu0 %v306
  %v1715 = vpop.f32.mrb[0].mxu0
  %v1716 = vadd.f32 0.0, %v1715
  %v1717 = vpop.f32.mrb[0].mxu0
  %v1718 = vadd.f32 0.0, %v1717
  %v1719 = vpop.f32.mrb[0].mxu0
  %v1720 = vpop.f32.mrb[0].mxu0
  %1721 = vdwg.mxu0
  %1722 = vmatprep.subr.bf16.mxu0 %v1471
  %1723 = vmatpush1.bf16.msra.mxu0 %v1470
  %1724 = vmatprep.subr.bf16.mxu0 %v1487
  %1725 = vmatpush1.bf16.msra.mxu0 %v1486
  %1726 = vmatprep.subr.bf16.mxu0 %v1503
  %1727 = vmatpush1.bf16.msra.mxu0 %v1502
  %1728 = vmatprep.subr.bf16.mxu0 0
  %1729 = vmatpush1.bf16.msra.mxu0 0
  %1730 = vmatprep.subr.bf16.mxu0 0
  %1731 = vmatpush1.bf16.msra.mxu0 0
  %1732 = vmatprep.subr.bf16.mxu0 0
  %1733 = vmatpush1.bf16.msra.mxu0 0
  %1734 = vmatprep.subr.bf16.mxu0 0
  %1735 = vmatpush1.bf16.msra.mxu0 0
  %1736 = vmatprep.subr.bf16.mxu0 0
  %1737 = vmatpush1.bf16.msra.mxu0 0
  %1738 = vmatprep.subr.bf16.mxu0 0
  %1739 = vmatpush1.bf16.msra.mxu0 0
  %1740 = vmatprep.subr.bf16.mxu0 0
  %1741 = vmatpush1.bf16.msra.mxu0 0
  %1742 = vmatprep.subr.bf16.mxu0 0
  %1743 = vmatpush1.bf16.msra.mxu0 0
  %1744 = vmatprep.subr.bf16.mxu0 0
  %1745 = vmatpush1.bf16.msra.mxu0 0
  %1746 = vmatprep.subr.bf16.mxu0 0
  %1747 = vmatpush1.bf16.msra.mxu0 0
  %1748 = vmatprep.subr.bf16.mxu0 0
  %1749 = vmatpush1.bf16.msra.mxu0 0
  %1750 = vmatprep.subr.bf16.mxu0 0
  %1751 = vmatpush1.bf16.msra.mxu0 0
  %1752 = vmatprep.subr.bf16.mxu0 0
  %1753 = vmatpush1.bf16.msra.mxu0 0
  %1754 = vmatprep.mubr.bf16.mxu0 0
  %1755 = vmatmul.mubr.bf16.gmra.mrb[0].mxu0 %v306
  %v1756 = vpop.f32.mrb[0].mxu0
  %v1757 = vadd.f32 0.0, %v1756
  %v1758 = vpop.f32.mrb[0].mxu0
  %v1759 = vadd.f32 0.0, %v1758
  %v1760 = vpop.f32.mrb[0].mxu0
  %v1761 = vpop.f32.mrb[0].mxu0
  %1762 = vdwg.mxu0
  %1763 = vmatprep.subr.bf16.mxu0 %v1473
  %1764 = vmatpush1.bf16.msra.mxu0 %v1472
  %1765 = vmatprep.subr.bf16.mxu0 %v1489
  %1766 = vmatpush1.bf16.msra.mxu0 %v1488
  %1767 = vmatprep.subr.bf16.mxu0 %v1505
  %1768 = vmatpush1.bf16.msra.mxu0 %v1504
  %1769 = vmatprep.subr.bf16.mxu0 0
  %1770 = vmatpush1.bf16.msra.mxu0 0
  %1771 = vmatprep.subr.bf16.mxu0 0
  %1772 = vmatpush1.bf16.msra.mxu0 0
  %1773 = vmatprep.subr.bf16.mxu0 0
  %1774 = vmatpush1.bf16.msra.mxu0 0
  %1775 = vmatprep.subr.bf16.mxu0 0
  %1776 = vmatpush1.bf16.msra.mxu0 0
  %1777 = vmatprep.subr.bf16.mxu0 0
  %1778 = vmatpush1.bf16.msra.mxu0 0
  %1779 = vmatprep.subr.bf16.mxu0 0
  %1780 = vmatpush1.bf16.msra.mxu0 0
  %1781 = vmatprep.subr.bf16.mxu0 0
  %1782 = vmatpush1.bf16.msra.mxu0 0
  %1783 = vmatprep.subr.bf16.mxu0 0
  %1784 = vmatpush1.bf16.msra.mxu0 0
  %1785 = vmatprep.subr.bf16.mxu0 0
  %1786 = vmatpush1.bf16.msra.mxu0 0
  %1787 = vmatprep.subr.bf16.mxu0 0
  %1788 = vmatpush1.bf16.msra.mxu0 0
  %1789 = vmatprep.subr.bf16.mxu0 0
  %1790 = vmatpush1.bf16.msra.mxu0 0
  %1791 = vmatprep.subr.bf16.mxu0 0
  %1792 = vmatpush1.bf16.msra.mxu0 0
  %1793 = vmatprep.subr.bf16.mxu0 0
  %1794 = vmatpush1.bf16.msra.mxu0 0
  %1795 = vmatprep.mubr.bf16.mxu0 0
  %1796 = vmatmul.mubr.bf16.gmra.mrb[0].mxu0 %v306
  %v1797 = vpop.f32.mrb[0].mxu0
  %v1798 = vadd.f32 0.0, %v1797
  %v1799 = vpop.f32.mrb[0].mxu0
  %v1800 = vadd.f32 0.0, %v1799
  %v1801 = vpop.f32.mrb[0].mxu0
  %v1802 = vpop.f32.mrb[0].mxu0
  %1803 = vdwg.mxu0
  %1804 = vmatprep.subr.bf16.mxu0 %v1475
  %1805 = vmatpush1.bf16.msra.mxu0 %v1474
  %1806 = vmatprep.subr.bf16.mxu0 %v1491
  %1807 = vmatpush1.bf16.msra.mxu0 %v1490
  %1808 = vmatprep.subr.bf16.mxu0 %v1507
  %1809 = vmatpush1.bf16.msra.mxu0 %v1506
  %1810 = vmatprep.subr.bf16.mxu0 0
  %1811 = vmatpush1.bf16.msra.mxu0 0
  %1812 = vmatprep.subr.bf16.mxu0 0
  %1813 = vmatpush1.bf16.msra.mxu0 0
  %1814 = vmatprep.subr.bf16.mxu0 0
  %1815 = vmatpush1.bf16.msra.mxu0 0
  %1816 = vmatprep.subr.bf16.mxu0 0
  %1817 = vmatpush1.bf16.msra.mxu0 0
  %1818 = vmatprep.subr.bf16.mxu0 0
  %1819 = vmatpush1.bf16.msra.mxu0 0
  %1820 = vmatprep.subr.bf16.mxu0 0
  %1821 = vmatpush1.bf16.msra.mxu0 0
  %1822 = vmatprep.subr.bf16.mxu0 0
  %1823 = vmatpush1.bf16.msra.mxu0 0
  %1824 = vmatprep.subr.bf16.mxu0 0
  %1825 = vmatpush1.bf16.msra.mxu0 0
  %1826 = vmatprep.subr.bf16.mxu0 0
  %1827 = vmatpush1.bf16.msra.mxu0 0
  %1828 = vmatprep.subr.bf16.mxu0 0
  %1829 = vmatpush1.bf16.msra.mxu0 0
  %1830 = vmatprep.subr.bf16.mxu0 0
  %1831 = vmatpush1.bf16.msra.mxu0 0
  %1832 = vmatprep.subr.bf16.mxu0 0
  %1833 = vmatpush1.bf16.msra.mxu0 0
  %1834 = vmatprep.subr.bf16.mxu0 0
  %1835 = vmatpush1.bf16.msra.mxu0 0
  %1836 = vmatprep.mubr.bf16.mxu0 0
  %1837 = vmatmul.mubr.bf16.gmra.mrb[0].mxu0 %v306
  %v1838 = vpop.f32.mrb[0].mxu0
  %v1839 = vadd.f32 0.0, %v1838
  %v1840 = vpop.f32.mrb[0].mxu0
  %v1841 = vadd.f32 0.0, %v1840
  %v1842 = vpop.f32.mrb[0].mxu0
  %v1843 = vpop.f32.mrb[0].mxu0
  %1844 = vdwg.mxu0
  %1845 = vmatprep.subr.bf16.mxu0 %v1477
  %1846 = vmatpush1.bf16.msra.mxu0 %v1476
  %1847 = vmatprep.subr.bf16.mxu0 %v1493
  %1848 = vmatpush1.bf16.msra.mxu0 %v1492
  %1849 = vmatprep.subr.bf16.mxu0 %v1509
  %1850 = vmatpush1.bf16.msra.mxu0 %v1508
  %1851 = vmatprep.subr.bf16.mxu0 0
  %1852 = vmatpush1.bf16.msra.mxu0 0
  %1853 = vmatprep.subr.bf16.mxu0 0
  %1854 = vmatpush1.bf16.msra.mxu0 0
  %1855 = vmatprep.subr.bf16.mxu0 0
  %1856 = vmatpush1.bf16.msra.mxu0 0
  %1857 = vmatprep.subr.bf16.mxu0 0
  %1858 = vmatpush1.bf16.msra.mxu0 0
  %1859 = vmatprep.subr.bf16.mxu0 0
  %1860 = vmatpush1.bf16.msra.mxu0 0
  %1861 = vmatprep.subr.bf16.mxu0 0
  %1862 = vmatpush1.bf16.msra.mxu0 0
  %1863 = vmatprep.subr.bf16.mxu0 0
  %1864 = vmatpush1.bf16.msra.mxu0 0
  %1865 = vmatprep.subr.bf16.mxu0 0
  %1866 = vmatpush1.bf16.msra.mxu0 0
  %1867 = vmatprep.subr.bf16.mxu0 0
  %1868 = vmatpush1.bf16.msra.mxu0 0
  %1869 = vmatprep.subr.bf16.mxu0 0
  %1870 = vmatpush1.bf16.msra.mxu0 0
  %1871 = vmatprep.subr.bf16.mxu0 0
  %1872 = vmatpush1.bf16.msra.mxu0 0
  %1873 = vmatprep.subr.bf16.mxu0 0
  %1874 = vmatpush1.bf16.msra.mxu0 0
  %1875 = vmatprep.subr.bf16.mxu0 0
  %1876 = vmatpush1.bf16.msra.mxu0 0
  %1877 = vmatprep.mubr.bf16.mxu0 0
  %1878 = vmatmul.mubr.bf16.gmra.mrb[0].mxu0 %v306
  %v1879 = vpop.f32.mrb[0].mxu0
  %v1880 = vadd.f32 0.0, %v1879
  %v1881 = vpop.f32.mrb[0].mxu0
  %v1882 = vadd.f32 0.0, %v1881
  %v1883 = vpop.f32.mrb[0].mxu0
  %v1884 = vpop.f32.mrb[0].mxu0
  %1885 = vdwg.mxu0
  %v1886 = vmax.f32 %v1253, %v1593
  %v1887 = vmax.f32 %v1254, %v1595
  %v1888 = vmax.f32 %v1255, %v1634
  %v1889 = vmax.f32 %v1256, %v1636
  %v1890 = vmax.f32 %v1257, %v1675
  %v1891 = vmax.f32 %v1258, %v1677
  %v1892 = vmax.f32 %v1259, %v1716
  %v1893 = vmax.f32 %v1260, %v1718
  %v1894 = vmax.f32 %v1261, %v1757
  %v1895 = vmax.f32 %v1262, %v1759
  %v1896 = vmax.f32 %v1263, %v1798
  %v1897 = vmax.f32 %v1264, %v1800
  %v1898 = vmax.f32 %v1265, %v1839
  %v1899 = vmax.f32 %v1266, %v1841
  %v1900 = vmax.f32 %v1267, %v1880
  %v1901 = vmax.f32 %v1268, %v1882
  %s1902 = scalar_lea.vmem %s0, 1152
  %v1903 = vld [vmem:[%s1902] sm:$0xff]
  %v1904 = vld [vmem:[%s1902 + $0x8] sm:$0xff]
  %v1905 = vld [vmem:[%s1902 + $0x10] sm:$0xff]
  %v1906 = vld [vmem:[%s1902 + $0x18] sm:$0xff]
  %v1907 = vld [vmem:[%s1902 + $0x20] sm:$0xff]
  %v1908 = vld [vmem:[%s1902 + $0x28] sm:$0xff]
  %v1909 = vld [vmem:[%s1902 + $0x30] sm:$0xff]
  %v1910 = vld [vmem:[%s1902 + $0x38] sm:$0xff]
  %v1911 = vld [vmem:[%s1902 + $0x40] sm:$0xff]
  %v1912 = vld [vmem:[%s1902 + $0x48] sm:$0xff]
  %v1913 = vld [vmem:[%s1902 + $0x50] sm:$0xff]
  %v1914 = vld [vmem:[%s1902 + $0x58] sm:$0xff]
  %v1915 = vld [vmem:[%s1902 + $0x60] sm:$0xff]
  %v1916 = vld [vmem:[%s1902 + $0x68] sm:$0xff]
  %v1917 = vld [vmem:[%s1902 + $0x70] sm:$0xff]
  %v1918 = vld [vmem:[%s1902 + $0x78] sm:$0xff]
  %v1919 = vld [vmem:[%s1902 + $0x80] sm:$0xff]
  %v1920 = vld [vmem:[%s1902 + $0x88] sm:$0xff]
  %v1921 = vld [vmem:[%s1902 + $0x90] sm:$0xff]
  %v1922 = vld [vmem:[%s1902 + $0x98] sm:$0xff]
  %v1923 = vld [vmem:[%s1902 + $0xa0] sm:$0xff]
  %v1924 = vld [vmem:[%s1902 + $0xa8] sm:$0xff]
  %v1925 = vld [vmem:[%s1902 + $0xb0] sm:$0xff]
  %v1926 = vld [vmem:[%s1902 + $0xb8] sm:$0xff]
  %v1927 = vld [vmem:[%s1902 + $0xc0] sm:$0xff]
  %v1928 = vld [vmem:[%s1902 + $0xc8] sm:$0xff]
  %v1929 = vld [vmem:[%s1902 + $0xd0] sm:$0xff]
  %v1930 = vld [vmem:[%s1902 + $0xd8] sm:$0xff]
  %v1931 = vld [vmem:[%s1902 + $0xe0] sm:$0xff]
  %v1932 = vld [vmem:[%s1902 + $0xe8] sm:$0xff]
  %v1933 = vld [vmem:[%s1902 + $0xf0] sm:$0xff]
  %v1934 = vld [vmem:[%s1902 + $0xf8] sm:$0xff]
  %v1935 = vld [vmem:[%s1902 + $0x100] sm:$0xff]
  %v1936 = vld [vmem:[%s1902 + $0x108] sm:$0xff]
  %v1937 = vld [vmem:[%s1902 + $0x110] sm:$0xff]
  %v1938 = vld [vmem:[%s1902 + $0x118] sm:$0xff]
  %v1939 = vld [vmem:[%s1902 + $0x120] sm:$0xff]
  %v1940 = vld [vmem:[%s1902 + $0x128] sm:$0xff]
  %v1941 = vld [vmem:[%s1902 + $0x130] sm:$0xff]
  %v1942 = vld [vmem:[%s1902 + $0x138] sm:$0xff]
  %v1943 = vld [vmem:[%s1902 + $0x140] sm:$0xff]
  %v1944 = vld [vmem:[%s1902 + $0x148] sm:$0xff]
  %v1945 = vld [vmem:[%s1902 + $0x150] sm:$0xff]
  %v1946 = vld [vmem:[%s1902 + $0x158] sm:$0xff]
  %v1947 = vld [vmem:[%s1902 + $0x160] sm:$0xff]
  %v1948 = vld [vmem:[%s1902 + $0x168] sm:$0xff]
  %v1949 = vld [vmem:[%s1902 + $0x170] sm:$0xff]
  %v1950 = vld [vmem:[%s1902 + $0x178] sm:$0xff]
  %v1999 = vunpack.c.l.b16 %v1903
  %v2000 = vunpack.c.h.b16 %v1903
  %v2001 = vunpack.c.l.b16 %v1904
  %v2002 = vunpack.c.h.b16 %v1904
  %v2003 = vunpack.c.l.b16 %v1905
  %v2004 = vunpack.c.h.b16 %v1905
  %v2005 = vunpack.c.l.b16 %v1906
  %v2006 = vunpack.c.h.b16 %v1906
  %v2007 = vunpack.c.l.b16 %v1907
  %v2008 = vunpack.c.h.b16 %v1907
  %v2009 = vunpack.c.l.b16 %v1908
  %v2010 = vunpack.c.h.b16 %v1908
  %v2011 = vunpack.c.l.b16 %v1909
  %v2012 = vunpack.c.h.b16 %v1909
  %v2013 = vunpack.c.l.b16 %v1910
  %v2014 = vunpack.c.h.b16 %v1910
  %v2015 = vunpack.c.l.b16 %v1911
  %v2016 = vunpack.c.h.b16 %v1911
  %v2017 = vunpack.c.l.b16 %v1912
  %v2018 = vunpack.c.h.b16 %v1912
  %v2019 = vunpack.c.l.b16 %v1913
  %v2020 = vunpack.c.h.b16 %v1913
  %v2021 = vunpack.c.l.b16 %v1914
  %v2022 = vunpack.c.h.b16 %v1914
  %v2023 = vunpack.c.l.b16 %v1915
  %v2024 = vunpack.c.h.b16 %v1915
  %v2025 = vunpack.c.l.b16 %v1916
  %v2026 = vunpack.c.h.b16 %v1916
  %v2027 = vunpack.c.l.b16 %v1917
  %v2028 = vunpack.c.h.b16 %v1917
  %v2029 = vunpack.c.l.b16 %v1918
  %v2030 = vunpack.c.h.b16 %v1918
  %v2031 = vunpack.c.l.b16 %v1919
  %v2032 = vunpack.c.h.b16 %v1919
  %v2033 = vunpack.c.l.b16 %v1920
  %v2034 = vunpack.c.h.b16 %v1920
  %v2035 = vunpack.c.l.b16 %v1921
  %v2036 = vunpack.c.h.b16 %v1921
  %v2037 = vunpack.c.l.b16 %v1922
  %v2038 = vunpack.c.h.b16 %v1922
  %v2039 = vunpack.c.l.b16 %v1923
  %v2040 = vunpack.c.h.b16 %v1923
  %v2041 = vunpack.c.l.b16 %v1924
  %v2042 = vunpack.c.h.b16 %v1924
  %v2043 = vunpack.c.l.b16 %v1925
  %v2044 = vunpack.c.h.b16 %v1925
  %v2045 = vunpack.c.l.b16 %v1926
  %v2046 = vunpack.c.h.b16 %v1926
  %v2047 = vunpack.c.l.b16 %v1927
  %v2048 = vunpack.c.h.b16 %v1927
  %v2049 = vunpack.c.l.b16 %v1928
  %v2050 = vunpack.c.h.b16 %v1928
  %v2051 = vunpack.c.l.b16 %v1929
  %v2052 = vunpack.c.h.b16 %v1929
  %v2053 = vunpack.c.l.b16 %v1930
  %v2054 = vunpack.c.h.b16 %v1930
  %v2055 = vunpack.c.l.b16 %v1931
  %v2056 = vunpack.c.h.b16 %v1931
  %v2057 = vunpack.c.l.b16 %v1932
  %v2058 = vunpack.c.h.b16 %v1932
  %v2059 = vunpack.c.l.b16 %v1933
  %v2060 = vunpack.c.h.b16 %v1933
  %v2061 = vunpack.c.l.b16 %v1934
  %v2062 = vunpack.c.h.b16 %v1934
  %v2063 = vunpack.c.l.b16 %v1935
  %v2064 = vunpack.c.h.b16 %v1935
  %v2065 = vunpack.c.l.b16 %v1936
  %v2066 = vunpack.c.h.b16 %v1936
  %v2067 = vunpack.c.l.b16 %v1937
  %v2068 = vunpack.c.h.b16 %v1937
  %v2069 = vunpack.c.l.b16 %v1938
  %v2070 = vunpack.c.h.b16 %v1938
  %v2071 = vunpack.c.l.b16 %v1939
  %v2072 = vunpack.c.h.b16 %v1939
  %v2073 = vunpack.c.l.b16 %v1940
  %v2074 = vunpack.c.h.b16 %v1940
  %v2075 = vunpack.c.l.b16 %v1941
  %v2076 = vunpack.c.h.b16 %v1941
  %v2077 = vunpack.c.l.b16 %v1942
  %v2078 = vunpack.c.h.b16 %v1942
  %v2079 = vunpack.c.l.b16 %v1943
  %v2080 = vunpack.c.h.b16 %v1943
  %v2081 = vunpack.c.l.b16 %v1944
  %v2082 = vunpack.c.h.b16 %v1944
  %v2083 = vunpack.c.l.b16 %v1945
  %v2084 = vunpack.c.h.b16 %v1945
  %v2085 = vunpack.c.l.b16 %v1946
  %v2086 = vunpack.c.h.b16 %v1946
  %v2087 = vunpack.c.l.b16 %v1947
  %v2088 = vunpack.c.h.b16 %v1947
  %v2089 = vunpack.c.l.b16 %v1948
  %v2090 = vunpack.c.h.b16 %v1948
  %v2091 = vunpack.c.l.b16 %v1949
  %v2092 = vunpack.c.h.b16 %v1949
  %v2093 = vunpack.c.l.b16 %v1950
  %v2094 = vunpack.c.h.b16 %v1950
  %v2095 = vpack.c.b16 %v2015, %v1999
  %v2096 = vpack.c.b16 %v2016, %v2000
  %v2097 = vpack.c.b16 %v2017, %v2001
  %v2098 = vpack.c.b16 %v2018, %v2002
  %v2099 = vpack.c.b16 %v2019, %v2003
  %v2100 = vpack.c.b16 %v2020, %v2004
  %v2101 = vpack.c.b16 %v2021, %v2005
  %v2102 = vpack.c.b16 %v2022, %v2006
  %v2103 = vpack.c.b16 %v2023, %v2007
  %v2104 = vpack.c.b16 %v2024, %v2008
  %v2105 = vpack.c.b16 %v2025, %v2009
  %v2106 = vpack.c.b16 %v2026, %v2010
  %v2107 = vpack.c.b16 %v2027, %v2011
  %v2108 = vpack.c.b16 %v2028, %v2012
  %v2109 = vpack.c.b16 %v2029, %v2013
  %v2110 = vpack.c.b16 %v2030, %v2014
  %v2111 = vpack.c.b16 %v2047, %v2031
  %v2112 = vpack.c.b16 %v2048, %v2032
  %v2113 = vpack.c.b16 %v2049, %v2033
  %v2114 = vpack.c.b16 %v2050, %v2034
  %v2115 = vpack.c.b16 %v2051, %v2035
  %v2116 = vpack.c.b16 %v2052, %v2036
  %v2117 = vpack.c.b16 %v2053, %v2037
  %v2118 = vpack.c.b16 %v2054, %v2038
  %v2119 = vpack.c.b16 %v2055, %v2039
  %v2120 = vpack.c.b16 %v2056, %v2040
  %v2121 = vpack.c.b16 %v2057, %v2041
  %v2122 = vpack.c.b16 %v2058, %v2042
  %v2123 = vpack.c.b16 %v2059, %v2043
  %v2124 = vpack.c.b16 %v2060, %v2044
  %v2125 = vpack.c.b16 %v2061, %v2045
  %v2126 = vpack.c.b16 %v2062, %v2046
  %v2127 = vpack.c.b16 %v2079, %v2063
  %v2128 = vpack.c.b16 %v2080, %v2064
  %v2129 = vpack.c.b16 %v2081, %v2065
  %v2130 = vpack.c.b16 %v2082, %v2066
  %v2131 = vpack.c.b16 %v2083, %v2067
  %v2132 = vpack.c.b16 %v2084, %v2068
  %v2133 = vpack.c.b16 %v2085, %v2069
  %v2134 = vpack.c.b16 %v2086, %v2070
  %v2135 = vpack.c.b16 %v2087, %v2071
  %v2136 = vpack.c.b16 %v2088, %v2072
  %v2137 = vpack.c.b16 %v2089, %v2073
  %v2138 = vpack.c.b16 %v2090, %v2074
  %v2139 = vpack.c.b16 %v2091, %v2075
  %v2140 = vpack.c.b16 %v2092, %v2076
  %v2141 = vpack.c.b16 %v2093, %v2077
  %v2142 = vpack.c.b16 %v2094, %v2078
  %2191 = vmatprep.subr.bf16.mxu0 %v2096
  %2192 = vmatpush1.bf16.msra.mxu0 %v2095
  %2193 = vmatprep.subr.bf16.mxu0 %v2112
  %2194 = vmatpush1.bf16.msra.mxu0 %v2111
  %2195 = vmatprep.subr.bf16.mxu0 %v2128
  %2196 = vmatpush1.bf16.msra.mxu0 %v2127
  %2197 = vmatprep.subr.bf16.mxu0 0
  %2198 = vmatpush1.bf16.msra.mxu0 0
  %2199 = vmatprep.subr.bf16.mxu0 0
  %2200 = vmatpush1.bf16.msra.mxu0 0
  %2201 = vmatprep.subr.bf16.mxu0 0
  %2202 = vmatpush1.bf16.msra.mxu0 0
  %2203 = vmatprep.subr.bf16.mxu0 0
  %2204 = vmatpush1.bf16.msra.mxu0 0
  %2205 = vmatprep.subr.bf16.mxu0 0
  %2206 = vmatpush1.bf16.msra.mxu0 0
  %2207 = vmatprep.subr.bf16.mxu0 0
  %2208 = vmatpush1.bf16.msra.mxu0 0
  %2209 = vmatprep.subr.bf16.mxu0 0
  %2210 = vmatpush1.bf16.msra.mxu0 0
  %2211 = vmatprep.subr.bf16.mxu0 0
  %2212 = vmatpush1.bf16.msra.mxu0 0
  %2213 = vmatprep.subr.bf16.mxu0 0
  %2214 = vmatpush1.bf16.msra.mxu0 0
  %2215 = vmatprep.subr.bf16.mxu0 0
  %2216 = vmatpush1.bf16.msra.mxu0 0
  %2217 = vmatprep.subr.bf16.mxu0 0
  %2218 = vmatpush1.bf16.msra.mxu0 0
  %2219 = vmatprep.subr.bf16.mxu0 0
  %2220 = vmatpush1.bf16.msra.mxu0 0
  %2221 = vmatprep.subr.bf16.mxu0 0
  %2222 = vmatpush1.bf16.msra.mxu0 0
  %2223 = vmatprep.mubr.bf16.mxu0 0
  %2224 = vmatmul.mubr.bf16.gmra.mrb[0].mxu0 %v306
  %v2225 = vpop.f32.mrb[0].mxu0
  %v2226 = vadd.f32 0.0, %v2225
  %v2227 = vpop.f32.mrb[0].mxu0
  %v2228 = vadd.f32 0.0, %v2227
  %v2229 = vpop.f32.mrb[0].mxu0
  %v2230 = vpop.f32.mrb[0].mxu0
  %2231 = vdwg.mxu0
  %2232 = vmatprep.subr.bf16.mxu0 %v2098
  %2233 = vmatpush1.bf16.msra.mxu0 %v2097
  %2234 = vmatprep.subr.bf16.mxu0 %v2114
  %2235 = vmatpush1.bf16.msra.mxu0 %v2113
  %2236 = vmatprep.subr.bf16.mxu0 %v2130
  %2237 = vmatpush1.bf16.msra.mxu0 %v2129
  %2238 = vmatprep.subr.bf16.mxu0 0
  %2239 = vmatpush1.bf16.msra.mxu0 0
  %2240 = vmatprep.subr.bf16.mxu0 0
  %2241 = vmatpush1.bf16.msra.mxu0 0
  %2242 = vmatprep.subr.bf16.mxu0 0
  %2243 = vmatpush1.bf16.msra.mxu0 0
  %2244 = vmatprep.subr.bf16.mxu0 0
  %2245 = vmatpush1.bf16.msra.mxu0 0
  %2246 = vmatprep.subr.bf16.mxu0 0
  %2247 = vmatpush1.bf16.msra.mxu0 0
  %2248 = vmatprep.subr.bf16.mxu0 0
  %2249 = vmatpush1.bf16.msra.mxu0 0
  %2250 = vmatprep.subr.bf16.mxu0 0
  %2251 = vmatpush1.bf16.msra.mxu0 0
  %2252 = vmatprep.subr.bf16.mxu0 0
  %2253 = vmatpush1.bf16.msra.mxu0 0
  %2254 = vmatprep.subr.bf16.mxu0 0
  %2255 = vmatpush1.bf16.msra.mxu0 0
  %2256 = vmatprep.subr.bf16.mxu0 0
  %2257 = vmatpush1.bf16.msra.mxu0 0
  %2258 = vmatprep.subr.bf16.mxu0 0
  %2259 = vmatpush1.bf16.msra.mxu0 0
  %2260 = vmatprep.subr.bf16.mxu0 0
  %2261 = vmatpush1.bf16.msra.mxu0 0
  %2262 = vmatprep.subr.bf16.mxu0 0
  %2263 = vmatpush1.bf16.msra.mxu0 0
  %2264 = vmatprep.mubr.bf16.mxu0 0
  %2265 = vmatmul.mubr.bf16.gmra.mrb[0].mxu0 %v306
  %v2266 = vpop.f32.mrb[0].mxu0
  %v2267 = vadd.f32 0.0, %v2266
  %v2268 = vpop.f32.mrb[0].mxu0
  %v2269 = vadd.f32 0.0, %v2268
  %v2270 = vpop.f32.mrb[0].mxu0
  %v2271 = vpop.f32.mrb[0].mxu0
  %2272 = vdwg.mxu0
  %2273 = vmatprep.subr.bf16.mxu0 %v2100
  %2274 = vmatpush1.bf16.msra.mxu0 %v2099
  %2275 = vmatprep.subr.bf16.mxu0 %v2116
  %2276 = vmatpush1.bf16.msra.mxu0 %v2115
  %2277 = vmatprep.subr.bf16.mxu0 %v2132
  %2278 = vmatpush1.bf16.msra.mxu0 %v2131
  %2279 = vmatprep.subr.bf16.mxu0 0
  %2280 = vmatpush1.bf16.msra.mxu0 0
  %2281 = vmatprep.subr.bf16.mxu0 0
  %2282 = vmatpush1.bf16.msra.mxu0 0
  %2283 = vmatprep.subr.bf16.mxu0 0
  %2284 = vmatpush1.bf16.msra.mxu0 0
  %2285 = vmatprep.subr.bf16.mxu0 0
  %2286 = vmatpush1.bf16.msra.mxu0 0
  %2287 = vmatprep.subr.bf16.mxu0 0
  %2288 = vmatpush1.bf16.msra.mxu0 0
  %2289 = vmatprep.subr.bf16.mxu0 0
  %2290 = vmatpush1.bf16.msra.mxu0 0
  %2291 = vmatprep.subr.bf16.mxu0 0
  %2292 = vmatpush1.bf16.msra.mxu0 0
  %2293 = vmatprep.subr.bf16.mxu0 0
  %2294 = vmatpush1.bf16.msra.mxu0 0
  %2295 = vmatprep.subr.bf16.mxu0 0
  %2296 = vmatpush1.bf16.msra.mxu0 0
  %2297 = vmatprep.subr.bf16.mxu0 0
  %2298 = vmatpush1.bf16.msra.mxu0 0
  %2299 = vmatprep.subr.bf16.mxu0 0
  %2300 = vmatpush1.bf16.msra.mxu0 0
  %2301 = vmatprep.subr.bf16.mxu0 0
  %2302 = vmatpush1.bf16.msra.mxu0 0
  %2303 = vmatprep.subr.bf16.mxu0 0
  %2304 = vmatpush1.bf16.msra.mxu0 0
  %2305 = vmatprep.mubr.bf16.mxu0 0
  %2306 = vmatmul.mubr.bf16.gmra.mrb[0].mxu0 %v306
  %v2307 = vpop.f32.mrb[0].mxu0
  %v2308 = vadd.f32 0.0, %v2307
  %v2309 = vpop.f32.mrb[0].mxu0
  %v2310 = vadd.f32 0.0, %v2309
  %v2311 = vpop.f32.mrb[0].mxu0
  %v2312 = vpop.f32.mrb[0].mxu0
  %2313 = vdwg.mxu0
  %2314 = vmatprep.subr.bf16.mxu0 %v2102
  %2315 = vmatpush1.bf16.msra.mxu0 %v2101
  %2316 = vmatprep.subr.bf16.mxu0 %v2118
  %2317 = vmatpush1.bf16.msra.mxu0 %v2117
  %2318 = vmatprep.subr.bf16.mxu0 %v2134
  %2319 = vmatpush1.bf16.msra.mxu0 %v2133
  %2320 = vmatprep.subr.bf16.mxu0 0
  %2321 = vmatpush1.bf16.msra.mxu0 0
  %2322 = vmatprep.subr.bf16.mxu0 0
  %2323 = vmatpush1.bf16.msra.mxu0 0
  %2324 = vmatprep.subr.bf16.mxu0 0
  %2325 = vmatpush1.bf16.msra.mxu0 0
  %2326 = vmatprep.subr.bf16.mxu0 0
  %2327 = vmatpush1.bf16.msra.mxu0 0
  %2328 = vmatprep.subr.bf16.mxu0 0
  %2329 = vmatpush1.bf16.msra.mxu0 0
  %2330 = vmatprep.subr.bf16.mxu0 0
  %2331 = vmatpush1.bf16.msra.mxu0 0
  %2332 = vmatprep.subr.bf16.mxu0 0
  %2333 = vmatpush1.bf16.msra.mxu0 0
  %2334 = vmatprep.subr.bf16.mxu0 0
  %2335 = vmatpush1.bf16.msra.mxu0 0
  %2336 = vmatprep.subr.bf16.mxu0 0
  %2337 = vmatpush1.bf16.msra.mxu0 0
  %2338 = vmatprep.subr.bf16.mxu0 0
  %2339 = vmatpush1.bf16.msra.mxu0 0
  %2340 = vmatprep.subr.bf16.mxu0 0
  %2341 = vmatpush1.bf16.msra.mxu0 0
  %2342 = vmatprep.subr.bf16.mxu0 0
  %2343 = vmatpush1.bf16.msra.mxu0 0
  %2344 = vmatprep.subr.bf16.mxu0 0
  %2345 = vmatpush1.bf16.msra.mxu0 0
  %2346 = vmatprep.mubr.bf16.mxu0 0
  %2347 = vmatmul.mubr.bf16.gmra.mrb[0].mxu0 %v306
  %v2348 = vpop.f32.mrb[0].mxu0
  %v2349 = vadd.f32 0.0, %v2348
  %v2350 = vpop.f32.mrb[0].mxu0
  %v2351 = vadd.f32 0.0, %v2350
  %v2352 = vpop.f32.mrb[0].mxu0
  %v2353 = vpop.f32.mrb[0].mxu0
  %2354 = vdwg.mxu0
  %2355 = vmatprep.subr.bf16.mxu0 %v2104
  %2356 = vmatpush1.bf16.msra.mxu0 %v2103
  %2357 = vmatprep.subr.bf16.mxu0 %v2120
  %2358 = vmatpush1.bf16.msra.mxu0 %v2119
  %2359 = vmatprep.subr.bf16.mxu0 %v2136
  %2360 = vmatpush1.bf16.msra.mxu0 %v2135
  %2361 = vmatprep.subr.bf16.mxu0 0
  %2362 = vmatpush1.bf16.msra.mxu0 0
  %2363 = vmatprep.subr.bf16.mxu0 0
  %2364 = vmatpush1.bf16.msra.mxu0 0
  %2365 = vmatprep.subr.bf16.mxu0 0
  %2366 = vmatpush1.bf16.msra.mxu0 0
  %2367 = vmatprep.subr.bf16.mxu0 0
  %2368 = vmatpush1.bf16.msra.mxu0 0
  %2369 = vmatprep.subr.bf16.mxu0 0
  %2370 = vmatpush1.bf16.msra.mxu0 0
  %2371 = vmatprep.subr.bf16.mxu0 0
  %2372 = vmatpush1.bf16.msra.mxu0 0
  %2373 = vmatprep.subr.bf16.mxu0 0
  %2374 = vmatpush1.bf16.msra.mxu0 0
  %2375 = vmatprep.subr.bf16.mxu0 0
  %2376 = vmatpush1.bf16.msra.mxu0 0
  %2377 = vmatprep.subr.bf16.mxu0 0
  %2378 = vmatpush1.bf16.msra.mxu0 0
  %2379 = vmatprep.subr.bf16.mxu0 0
  %2380 = vmatpush1.bf16.msra.mxu0 0
  %2381 = vmatprep.subr.bf16.mxu0 0
  %2382 = vmatpush1.bf16.msra.mxu0 0
  %2383 = vmatprep.subr.bf16.mxu0 0
  %2384 = vmatpush1.bf16.msra.mxu0 0
  %2385 = vmatprep.subr.bf16.mxu0 0
  %2386 = vmatpush1.bf16.msra.mxu0 0
  %2387 = vmatprep.mubr.bf16.mxu0 0
  %2388 = vmatmul.mubr.bf16.gmra.mrb[0].mxu0 %v306
  %v2389 = vpop.f32.mrb[0].mxu0
  %v2390 = vadd.f32 0.0, %v2389
  %v2391 = vpop.f32.mrb[0].mxu0
  %v2392 = vadd.f32 0.0, %v2391
  %v2393 = vpop.f32.mrb[0].mxu0
  %v2394 = vpop.f32.mrb[0].mxu0
  %2395 = vdwg.mxu0
  %2396 = vmatprep.subr.bf16.mxu0 %v2106
  %2397 = vmatpush1.bf16.msra.mxu0 %v2105
  %2398 = vmatprep.subr.bf16.mxu0 %v2122
  %2399 = vmatpush1.bf16.msra.mxu0 %v2121
  %2400 = vmatprep.subr.bf16.mxu0 %v2138
  %2401 = vmatpush1.bf16.msra.mxu0 %v2137
  %2402 = vmatprep.subr.bf16.mxu0 0
  %2403 = vmatpush1.bf16.msra.mxu0 0
  %2404 = vmatprep.subr.bf16.mxu0 0
  %2405 = vmatpush1.bf16.msra.mxu0 0
  %2406 = vmatprep.subr.bf16.mxu0 0
  %2407 = vmatpush1.bf16.msra.mxu0 0
  %2408 = vmatprep.subr.bf16.mxu0 0
  %2409 = vmatpush1.bf16.msra.mxu0 0
  %2410 = vmatprep.subr.bf16.mxu0 0
  %2411 = vmatpush1.bf16.msra.mxu0 0
  %2412 = vmatprep.subr.bf16.mxu0 0
  %2413 = vmatpush1.bf16.msra.mxu0 0
  %2414 = vmatprep.subr.bf16.mxu0 0
  %2415 = vmatpush1.bf16.msra.mxu0 0
  %2416 = vmatprep.subr.bf16.mxu0 0
  %2417 = vmatpush1.bf16.msra.mxu0 0
  %2418 = vmatprep.subr.bf16.mxu0 0
  %2419 = vmatpush1.bf16.msra.mxu0 0
  %2420 = vmatprep.subr.bf16.mxu0 0
  %2421 = vmatpush1.bf16.msra.mxu0 0
  %2422 = vmatprep.subr.bf16.mxu0 0
  %2423 = vmatpush1.bf16.msra.mxu0 0
  %2424 = vmatprep.subr.bf16.mxu0 0
  %2425 = vmatpush1.bf16.msra.mxu0 0
  %2426 = vmatprep.subr.bf16.mxu0 0
  %2427 = vmatpush1.bf16.msra.mxu0 0
  %2428 = vmatprep.mubr.bf16.mxu0 0
  %2429 = vmatmul.mubr.bf16.gmra.mrb[0].mxu0 %v306
  %v2430 = vpop.f32.mrb[0].mxu0
  %v2431 = vadd.f32 0.0, %v2430
  %v2432 = vpop.f32.mrb[0].mxu0
  %v2433 = vadd.f32 0.0, %v2432
  %v2434 = vpop.f32.mrb[0].mxu0
  %v2435 = vpop.f32.mrb[0].mxu0
  %2436 = vdwg.mxu0
  %2437 = vmatprep.subr.bf16.mxu0 %v2108
  %2438 = vmatpush1.bf16.msra.mxu0 %v2107
  %2439 = vmatprep.subr.bf16.mxu0 %v2124
  %2440 = vmatpush1.bf16.msra.mxu0 %v2123
  %2441 = vmatprep.subr.bf16.mxu0 %v2140
  %2442 = vmatpush1.bf16.msra.mxu0 %v2139
  %2443 = vmatprep.subr.bf16.mxu0 0
  %2444 = vmatpush1.bf16.msra.mxu0 0
  %2445 = vmatprep.subr.bf16.mxu0 0
  %2446 = vmatpush1.bf16.msra.mxu0 0
  %2447 = vmatprep.subr.bf16.mxu0 0
  %2448 = vmatpush1.bf16.msra.mxu0 0
  %2449 = vmatprep.subr.bf16.mxu0 0
  %2450 = vmatpush1.bf16.msra.mxu0 0
  %2451 = vmatprep.subr.bf16.mxu0 0
  %2452 = vmatpush1.bf16.msra.mxu0 0
  %2453 = vmatprep.subr.bf16.mxu0 0
  %2454 = vmatpush1.bf16.msra.mxu0 0
  %2455 = vmatprep.subr.bf16.mxu0 0
  %2456 = vmatpush1.bf16.msra.mxu0 0
  %2457 = vmatprep.subr.bf16.mxu0 0
  %2458 = vmatpush1.bf16.msra.mxu0 0
  %2459 = vmatprep.subr.bf16.mxu0 0
  %2460 = vmatpush1.bf16.msra.mxu0 0
  %2461 = vmatprep.subr.bf16.mxu0 0
  %2462 = vmatpush1.bf16.msra.mxu0 0
  %2463 = vmatprep.subr.bf16.mxu0 0
  %2464 = vmatpush1.bf16.msra.mxu0 0
  %2465 = vmatprep.subr.bf16.mxu0 0
  %2466 = vmatpush1.bf16.msra.mxu0 0
  %2467 = vmatprep.subr.bf16.mxu0 0
  %2468 = vmatpush1.bf16.msra.mxu0 0
  %2469 = vmatprep.mubr.bf16.mxu0 0
  %2470 = vmatmul.mubr.bf16.gmra.mrb[0].mxu0 %v306
  %v2471 = vpop.f32.mrb[0].mxu0
  %v2472 = vadd.f32 0.0, %v2471
  %v2473 = vpop.f32.mrb[0].mxu0
  %v2474 = vadd.f32 0.0, %v2473
  %v2475 = vpop.f32.mrb[0].mxu0
  %v2476 = vpop.f32.mrb[0].mxu0
  %2477 = vdwg.mxu0
  %2478 = vmatprep.subr.bf16.mxu0 %v2110
  %2479 = vmatpush1.bf16.msra.mxu0 %v2109
  %2480 = vmatprep.subr.bf16.mxu0 %v2126
  %2481 = vmatpush1.bf16.msra.mxu0 %v2125
  %2482 = vmatprep.subr.bf16.mxu0 %v2142
  %2483 = vmatpush1.bf16.msra.mxu0 %v2141
  %2484 = vmatprep.subr.bf16.mxu0 0
  %2485 = vmatpush1.bf16.msra.mxu0 0
  %2486 = vmatprep.subr.bf16.mxu0 0
  %2487 = vmatpush1.bf16.msra.mxu0 0
  %2488 = vmatprep.subr.bf16.mxu0 0
  %2489 = vmatpush1.bf16.msra.mxu0 0
  %2490 = vmatprep.subr.bf16.mxu0 0
  %2491 = vmatpush1.bf16.msra.mxu0 0
  %2492 = vmatprep.subr.bf16.mxu0 0
  %2493 = vmatpush1.bf16.msra.mxu0 0
  %2494 = vmatprep.subr.bf16.mxu0 0
  %2495 = vmatpush1.bf16.msra.mxu0 0
  %2496 = vmatprep.subr.bf16.mxu0 0
  %2497 = vmatpush1.bf16.msra.mxu0 0
  %2498 = vmatprep.subr.bf16.mxu0 0
  %2499 = vmatpush1.bf16.msra.mxu0 0
  %2500 = vmatprep.subr.bf16.mxu0 0
  %2501 = vmatpush1.bf16.msra.mxu0 0
  %2502 = vmatprep.subr.bf16.mxu0 0
  %2503 = vmatpush1.bf16.msra.mxu0 0
  %2504 = vmatprep.subr.bf16.mxu0 0
  %2505 = vmatpush1.bf16.msra.mxu0 0
  %2506 = vmatprep.subr.bf16.mxu0 0
  %2507 = vmatpush1.bf16.msra.mxu0 0
  %2508 = vmatprep.subr.bf16.mxu0 0
  %2509 = vmatpush1.bf16.msra.mxu0 0
  %2510 = vmatprep.mubr.bf16.mxu0 0
  %2511 = vmatmul.mubr.bf16.gmra.mrb[0].mxu0 %v306
  %v2512 = vpop.f32.mrb[0].mxu0
  %v2513 = vadd.f32 0.0, %v2512
  %v2514 = vpop.f32.mrb[0].mxu0
  %v2515 = vadd.f32 0.0, %v2514
  %v2516 = vpop.f32.mrb[0].mxu0
  %v2517 = vpop.f32.mrb[0].mxu0
  %2518 = vdwg.mxu0
  %v2519 = vmax.f32 %v1886, %v2226
  %v2520 = vmax.f32 %v1887, %v2228
  %v2521 = vmax.f32 %v1888, %v2267
  %v2522 = vmax.f32 %v1889, %v2269
  %v2523 = vmax.f32 %v1890, %v2308
  %v2524 = vmax.f32 %v1891, %v2310
  %v2525 = vmax.f32 %v1892, %v2349
  %v2526 = vmax.f32 %v1893, %v2351
  %v2527 = vmax.f32 %v1894, %v2390
  %v2528 = vmax.f32 %v1895, %v2392
  %v2529 = vmax.f32 %v1896, %v2431
  %v2530 = vmax.f32 %v1897, %v2433
  %v2531 = vmax.f32 %v1898, %v2472
  %v2532 = vmax.f32 %v1899, %v2474
  %v2533 = vmax.f32 %v1900, %v2513
  %v2534 = vmax.f32 %v1901, %v2515
  %v2535 = vld [vmem:[%s2] sm:$0xf]
  %2537 = vset.pattern.permute.xlu0 0
  %2538 = vperm.xlu0 %2537, %v2535
  %v2539 = vpop.permute.xlu0 %2538
  %v2541 = vadd.f32 %v2519, %v2539
  %v2542 = vadd.f32 %v2520, %v2539
  %v2543 = vadd.f32 %v2521, %v2539
  %v2544 = vadd.f32 %v2522, %v2539
  %v2545 = vadd.f32 %v2523, %v2539
  %v2546 = vadd.f32 %v2524, %v2539
  %v2547 = vadd.f32 %v2525, %v2539
  %v2548 = vadd.f32 %v2526, %v2539
  %v2549 = vadd.f32 %v2527, %v2539
  %v2550 = vadd.f32 %v2528, %v2539
  %v2551 = vadd.f32 %v2529, %v2539
  %v2552 = vadd.f32 %v2530, %v2539
  %v2553 = vadd.f32 %v2531, %v2539
  %v2554 = vadd.f32 %v2532, %v2539
  %v2555 = vadd.f32 %v2533, %v2539
  %v2556 = vadd.f32 %v2534, %v2539
  %v2557 = vmax.f32 %v2541, 0.0
  %v2558 = vmax.f32 %v2542, 0.0
  %v2559 = vmax.f32 %v2543, 0.0
  %v2560 = vmax.f32 %v2544, 0.0
  %v2561 = vmax.f32 %v2545, 0.0
  %v2562 = vmax.f32 %v2546, 0.0
  %v2563 = vmax.f32 %v2547, 0.0
  %v2564 = vmax.f32 %v2548, 0.0
  %v2565 = vmax.f32 %v2549, 0.0
  %v2566 = vmax.f32 %v2550, 0.0
  %v2567 = vmax.f32 %v2551, 0.0
  %v2568 = vmax.f32 %v2552, 0.0
  %v2569 = vmax.f32 %v2553, 0.0
  %v2570 = vmax.f32 %v2554, 0.0
  %v2571 = vmax.f32 %v2555, 0.0
  %v2572 = vmax.f32 %v2556, 0.0
  %v2573 = vpack.c.bf16 %v2557, %v2557
  %v2574 = vpack.c.bf16 %v2558, %v2558
  %v2575 = vpack.c.bf16 %v2559, %v2559
  %v2576 = vpack.c.bf16 %v2560, %v2560
  %v2577 = vpack.c.bf16 %v2561, %v2561
  %v2578 = vpack.c.bf16 %v2562, %v2562
  %v2579 = vpack.c.bf16 %v2563, %v2563
  %v2580 = vpack.c.bf16 %v2564, %v2564
  %v2581 = vpack.c.bf16 %v2565, %v2565
  %v2582 = vpack.c.bf16 %v2566, %v2566
  %v2583 = vpack.c.bf16 %v2567, %v2567
  %v2584 = vpack.c.bf16 %v2568, %v2568
  %v2585 = vpack.c.bf16 %v2569, %v2569
  %v2586 = vpack.c.bf16 %v2570, %v2570
  %v2587 = vpack.c.bf16 %v2571, %v2571
  %v2588 = vpack.c.bf16 %v2572, %v2572
  %v2605 = vcombine.low %v2573, %v2574
  %v2606 = vcombine.low %v2575, %v2576
  %v2608 = vunpack.c.l.s4 1983009808
  %v2609 = vunpack.c.0.s8 %v2608
  %v2610 = vlaneseq
  %v2611 = vshrl.u32 %v2610, 7
  %v2612 = vsub.s32 %v2609, %v2611
  %v2613 = vrot.slane %v2605, %v2612
  %v2615 = vunpack.c.l.s4 1983009808
  %v2616 = vunpack.c.0.s8 %v2615
  %v2617 = vlaneseq
  %v2618 = vshrl.u32 %v2617, 7
  %v2619 = vsub.s32 %v2616, %v2618
  %v2620 = vrot.slane %v2606, %v2619
  %v2621 = vcombine.low %v2613, %v2620
  %v2622 = vcombine.low %v2577, %v2578
  %v2623 = vcombine.low %v2579, %v2580
  %v2625 = vunpack.c.l.s4 1983009808
  %v2626 = vunpack.c.0.s8 %v2625
  %v2627 = vlaneseq
  %v2628 = vshrl.u32 %v2627, 7
  %v2629 = vsub.s32 %v2626, %v2628
  %v2630 = vrot.slane %v2622, %v2629
  %v2632 = vunpack.c.l.s4 1983009808
  %v2633 = vunpack.c.0.s8 %v2632
  %v2634 = vlaneseq
  %v2635 = vshrl.u32 %v2634, 7
  %v2636 = vsub.s32 %v2633, %v2635
  %v2637 = vrot.slane %v2623, %v2636
  %v2638 = vcombine.low %v2630, %v2637
  %v2639 = vcombine.low %v2581, %v2582
  %v2640 = vcombine.low %v2583, %v2584
  %v2642 = vunpack.c.l.s4 1983009808
  %v2643 = vunpack.c.0.s8 %v2642
  %v2644 = vlaneseq
  %v2645 = vshrl.u32 %v2644, 7
  %v2646 = vsub.s32 %v2643, %v2645
  %v2647 = vrot.slane %v2639, %v2646
  %v2649 = vunpack.c.l.s4 1983009808
  %v2650 = vunpack.c.0.s8 %v2649
  %v2651 = vlaneseq
  %v2652 = vshrl.u32 %v2651, 7
  %v2653 = vsub.s32 %v2650, %v2652
  %v2654 = vrot.slane %v2640, %v2653
  %v2655 = vcombine.low %v2647, %v2654
  %v2656 = vcombine.low %v2585, %v2586
  %v2657 = vcombine.low %v2587, %v2588
  %v2659 = vunpack.c.l.s4 1983009808
  %v2660 = vunpack.c.0.s8 %v2659
  %v2661 = vlaneseq
  %v2662 = vshrl.u32 %v2661, 7
  %v2663 = vsub.s32 %v2660, %v2662
  %v2664 = vrot.slane %v2656, %v2663
  %v2666 = vunpack.c.l.s4 1983009808
  %v2667 = vunpack.c.0.s8 %v2666
  %v2668 = vlaneseq
  %v2669 = vshrl.u32 %v2668, 7
  %v2670 = vsub.s32 %v2667, %v2669
  %v2671 = vrot.slane %v2657, %v2670
  %v2672 = vcombine.low %v2664, %v2671
  %2677 = vst [vmem:[%s3] sm:$0xff] %v2621
  %2678 = vst [vmem:[%s3 + $0x8] sm:$0xff] %v2638
  %2679 = vst [vmem:[%s3 + $0x10] sm:$0xff] %v2655
  %2680 = vst [vmem:[%s3 + $0x18] sm:$0xff] %v2672
  // Predicated region
  $region14: #{basic_network_forward.2} parent=0 // pred_check
    _
  $region15: #{basic_network_forward.2} parent=0 // pred_check_branch
    %2682 = sbr.rel (0) target = $region17
  $region16: #{basic_network_forward.2} parent=0 // pred_region
    _
  $region17: #{basic_network_forward.2} parent=0 // pred_fallthru
    _
  // Predicated region
  $region18: #{basic_network_forward.2} parent=0 // pred_check
    _
  $region19: #{basic_network_forward.2} parent=0 // pred_check_branch
    %2684 = sbr.rel (0) target = $region21
  $region20: #{basic_network_forward.2} parent=0 // pred_region
    _
  $region21: #{basic_network_forward.2} parent=0 // pred_fallthru
    _

// kernel: basic_network_forward.3
$region0: #{basic_network_forward.3}
  #allocation0 [shape = 'u32[]', space=smem, size = 0x4, offset = 0x4, fixed_abs, tag = 'smem constant byte address 0x4 - core index']
  #allocation1 [shape = 'u32[144,128]{1,0:T(1,128)}', space=vmem, size = 0x12000, scoped, tag = 'internal scratch']
  %s0 = inlined_call_operand.vmem [shape: bf16[2,4,64,64], index: 0, kind: input, shape index: {}]
  %s1 = inlined_call_operand.vmem [shape: bf16[8,64], index: 1, kind: input, shape index: {}]
  %s2 = inlined_call_operand.vmem [shape: f32[8,1], index: 2, kind: input, shape index: {}]
  %s3 = inlined_call_operand.vmem [shape: f32[2,8,64], index: 3, kind: input, shape index: {}]
  %s4 = inlined_call_operand.vmem [shape: f32[2,1], index: 4, kind: input, shape index: {}]
  %s5 = inlined_call_operand.vmem [shape: f32[2,2,1], index: 5, kind: output, shape index: {}]
  %s6 = sld [smem:[#allocation0]]
  $region53: #{basic_network_forward.3} parent=0
    _
  %s8 = ssub.s32 1, %s6
  %s9 = scalar_select 0, %s8, %s6
  loop: start=0, step=1, limit=4
  $region2: #{basic_network_forward.3} parent=0 // loop_pre_header
    _
  $region3: #{basic_network_forward.3} parent=0 // loop_header
    %s11 = sphi 0, %s15
    %p12 = scmp.ge.s32.totalorder %s11, 4
    %s21 = sphi 0, %s23
    %s24 = sphi 0, %s21
    %s25 = sphi 0, %s24
    %s41 = sphi 0, %s25
    %s45 = sphi 0, %s45
    %s47 = sphi 0, %s45
    %s48 = sphi 0, %s47
    %s62 = sphi 0, %s48
    %s66 = sphi 0, %s66
    %s68 = sphi 0, %s66
    %s69 = sphi 0, %s68
    %s83 = sphi 0, %s69
    %s87 = sphi 0, %s87
    %s89 = sphi 0, %s87
    %s90 = sphi 0, %s89
    %s104 = sphi 0, %s90
    %s108 = sphi 0, %s108
    %s110 = sphi 0, %s108
    %s111 = sphi 0, %s110
    %s125 = sphi 0, %s111
    %s131 = sphi 0, %s133
    %s134 = sphi 0, %s131
    %s135 = sphi 0, %s134
    %s151 = sphi 0, %s135
  $region4: #{basic_network_forward.3} parent=0 // loop_header_branch
    %14 = sbr.rel (%p12) target = $region8
  $region5: #{basic_network_forward.3} parent=0 // loop_body
    %s16 = ssub.s32 %s11, 1
    %s17 = ssub.s32 %s11, 2
    %s18 = sadd.s32 %s11, 1
    %s19 = ssub.s32 %s11, %s18
    %p20 = scmp.eq.s32.totalorder %s19, 0
    %s22 = sadd.s32 %s21, 1
    %s23 = scalar_select %p20, %s21, %s22
    %p26 = pneg %p20
    %p27 = scmp.eq.s32.totalorder %s11, 1
    %p28 = por %p26, %p27
    %p29 = scmp.ne.s32.totalorder %s21, %s24
    %p30 = scmp.eq.s32.totalorder %s11, 0
    %p31 = por %p29, %p30
    %p32 = scmp.ne.s32.totalorder %s21, %s24
    %p33 = scmp.eq.s32.totalorder %s16, 1
    %p34 = por %p32, %p33
    %p35 = scmp.ne.s32.totalorder %s24, %s25
    %p36 = scmp.eq.s32.totalorder %s16, 0
    %p37 = por %p35, %p36
    %p38 = scmp.ne.s32.totalorder %s24, %s25
    %p39 = scmp.eq.s32.totalorder %s17, 1
    %p40 = por %p38, %p39
    %p42 = scmp.ne.s32.totalorder %s25, %s41
    %p43 = scmp.eq.s32.totalorder %s17, 0
    %p44 = por %p42, %p43
    %s46 = sadd.s32 %s45, 1
    %p49 = scmp.eq.s32.totalorder %s11, 1
    %p50 = scmp.ne.s32.totalorder %s45, %s47
    %p51 = scmp.eq.s32.totalorder %s11, 0
    %p52 = por %p50, %p51
    %p53 = scmp.ne.s32.totalorder %s45, %s47
    %p54 = scmp.eq.s32.totalorder %s16, 1
    %p55 = por %p53, %p54
    %p56 = scmp.ne.s32.totalorder %s47, %s48
    %p57 = scmp.eq.s32.totalorder %s16, 0
    %p58 = por %p56, %p57
    %p59 = scmp.ne.s32.totalorder %s47, %s48
    %p60 = scmp.eq.s32.totalorder %s17, 1
    %p61 = por %p59, %p60
    %p63 = scmp.ne.s32.totalorder %s48, %s62
    %p64 = scmp.eq.s32.totalorder %s17, 0
    %p65 = por %p63, %p64
    %s67 = sadd.s32 %s66, 1
    %p70 = scmp.eq.s32.totalorder %s11, 1
    %p71 = scmp.ne.s32.totalorder %s66, %s68
    %p72 = scmp.eq.s32.totalorder %s11, 0
    %p73 = por %p71, %p72
    %p74 = scmp.ne.s32.totalorder %s66, %s68
    %p75 = scmp.eq.s32.totalorder %s16, 1
    %p76 = por %p74, %p75
    %p77 = scmp.ne.s32.totalorder %s68, %s69
    %p78 = scmp.eq.s32.totalorder %s16, 0
    %p79 = por %p77, %p78
    %p80 = scmp.ne.s32.totalorder %s68, %s69
    %p81 = scmp.eq.s32.totalorder %s17, 1
    %p82 = por %p80, %p81
    %p84 = scmp.ne.s32.totalorder %s69, %s83
    %p85 = scmp.eq.s32.totalorder %s17, 0
    %p86 = por %p84, %p85
    %s88 = sadd.s32 %s87, 1
    %p91 = scmp.eq.s32.totalorder %s11, 1
    %p92 = scmp.ne.s32.totalorder %s87, %s89
    %p93 = scmp.eq.s32.totalorder %s11, 0
    %p94 = por %p92, %p93
    %p95 = scmp.ne.s32.totalorder %s87, %s89
    %p96 = scmp.eq.s32.totalorder %s16, 1
    %p97 = por %p95, %p96
    %p98 = scmp.ne.s32.totalorder %s89, %s90
    %p99 = scmp.eq.s32.totalorder %s16, 0
    %p100 = por %p98, %p99
    %p101 = scmp.ne.s32.totalorder %s89, %s90
    %p102 = scmp.eq.s32.totalorder %s17, 1
    %p103 = por %p101, %p102
    %p105 = scmp.ne.s32.totalorder %s90, %s104
    %p106 = scmp.eq.s32.totalorder %s17, 0
    %p107 = por %p105, %p106
    %s109 = sadd.s32 %s108, 1
    %p112 = scmp.eq.s32.totalorder %s11, 1
    %p113 = scmp.ne.s32.totalorder %s108, %s110
    %p114 = scmp.eq.s32.totalorder %s11, 0
    %p115 = por %p113, %p114
    %p116 = scmp.ne.s32.totalorder %s108, %s110
    %p117 = scmp.eq.s32.totalorder %s16, 1
    %p118 = por %p116, %p117
    %p119 = scmp.ne.s32.totalorder %s110, %s111
    %p120 = scmp.eq.s32.totalorder %s16, 0
    %p121 = por %p119, %p120
    %p122 = scmp.ne.s32.totalorder %s110, %s111
    %p123 = scmp.eq.s32.totalorder %s17, 1
    %p124 = por %p122, %p123
    %p126 = scmp.ne.s32.totalorder %s111, %s125
    %p127 = scmp.eq.s32.totalorder %s17, 0
    %p128 = por %p126, %p127
    %s129 = ssub.s32 %s11, %s18
    %p130 = scmp.eq.s32.totalorder %s129, 0
    %s132 = sadd.s32 %s131, 1
    %s133 = scalar_select %p130, %s131, %s132
    %p136 = pneg %p130
    %p137 = scmp.eq.s32.totalorder %s11, 1
    %p138 = por %p136, %p137
    %p139 = scmp.ne.s32.totalorder %s131, %s134
    %p140 = scmp.eq.s32.totalorder %s11, 0
    %p141 = por %p139, %p140
    %p142 = scmp.ne.s32.totalorder %s131, %s134
    %p143 = scmp.eq.s32.totalorder %s16, 1
    %p144 = por %p142, %p143
    %p145 = scmp.ne.s32.totalorder %s134, %s135
    %p146 = scmp.eq.s32.totalorder %s16, 0
    %p147 = por %p145, %p146
    %p148 = scmp.ne.s32.totalorder %s134, %s135
    %p149 = scmp.eq.s32.totalorder %s17, 1
    %p150 = por %p148, %p149
    %p152 = scmp.ne.s32.totalorder %s135, %s151
    %p153 = scmp.eq.s32.totalorder %s17, 0
    %p154 = por %p152, %p153
    %p155 = scmp.le.s32.totalorder 1, %s11
    %p156 = scmp.lt.s32.totalorder %s11, 3
    %p157 = pnand %p155, %p156
    %p158 = pneg %p157
    // Predicated region
    $region9: #{basic_network_forward.3} parent=5 // pred_check
      _
    $region10: #{basic_network_forward.3} parent=5 // pred_check_branch
      %160 = sbr.rel (%p157) target = $region12
    $region11: #{basic_network_forward.3} parent=5 // pred_region
      %s161 = ssub.s32 %s11, 1
      // Predicated region
      $region13: #{basic_network_forward.3} parent=11 // pred_check
        %p162 = pneg %p58
      $region14: #{basic_network_forward.3} parent=11 // pred_check_branch
        %164 = sbr.rel (%p162) target = $region16
      $region15: #{basic_network_forward.3} parent=11 // pred_region
        _
      $region16: #{basic_network_forward.3} parent=11 // pred_fallthru
        _
      // Predicated region
      $region17: #{basic_network_forward.3} parent=11 // pred_check
        %p165 = pneg %p79
      $region18: #{basic_network_forward.3} parent=11 // pred_check_branch
        %167 = sbr.rel (%p165) target = $region20
      $region19: #{basic_network_forward.3} parent=11 // pred_region
        _
      $region20: #{basic_network_forward.3} parent=11 // pred_fallthru
        _
      // Predicated region
      $region21: #{basic_network_forward.3} parent=11 // pred_check
        %p168 = pneg %p100
      $region22: #{basic_network_forward.3} parent=11 // pred_check_branch
        %170 = sbr.rel (%p168) target = $region24
      $region23: #{basic_network_forward.3} parent=11 // pred_region
        _
      $region24: #{basic_network_forward.3} parent=11 // pred_fallthru
        _
      // Predicated region
      $region25: #{basic_network_forward.3} parent=11 // pred_check
        %p171 = pneg %p121
      $region26: #{basic_network_forward.3} parent=11 // pred_check_branch
        %173 = sbr.rel (%p171) target = $region28
      $region27: #{basic_network_forward.3} parent=11 // pred_region
        _
      $region28: #{basic_network_forward.3} parent=11 // pred_fallthru
        _
    $region12: #{basic_network_forward.3} parent=5 // pred_fallthru
      _
    %p174 = scmp.lt.s32.totalorder %s11, 2
    // Predicated region
    $region29: #{basic_network_forward.3} parent=5 // pred_check
      %p175 = pneg %p174
    $region30: #{basic_network_forward.3} parent=5 // pred_check_branch
      %177 = sbr.rel (%p175) target = $region32
    $region31: #{basic_network_forward.3} parent=5 // pred_region
      // Predicated region
      $region33: #{basic_network_forward.3} parent=31 // pred_check
        %p178 = pneg %p31
      $region34: #{basic_network_forward.3} parent=31 // pred_check_branch
        %180 = sbr.rel (%p178) target = $region36
      $region35: #{basic_network_forward.3} parent=31 // pred_region
        %p181 = scmp.lt.s32.totalorder %s11, 1
        %s182 = scalar_select %p181, %s11, 1
        %s183 = smul.addr %s182, 32
        %s184 = smul.addr %s183, 4
        %s185 = scalar_lea.vmem %s0, %s184
      $region36: #{basic_network_forward.3} parent=31 // pred_fallthru
        _
    $region32: #{basic_network_forward.3} parent=5 // pred_fallthru
      _
    %p186 = scmp.le.s32.totalorder 1, %s11
    %p187 = scmp.lt.s32.totalorder %s11, 3
    %p188 = pnand %p186, %p187
    %p189 = pneg %p188
    // Predicated region
    $region37: #{basic_network_forward.3} parent=5 // pred_check
      _
    $region38: #{basic_network_forward.3} parent=5 // pred_check_branch
      %191 = sbr.rel (%p188) target = $region40
    $region39: #{basic_network_forward.3} parent=5 // pred_region
      %s192 = ssub.s32 %s11, 1
      %p193 = scmp.lt.s32.totalorder %s16, 1
      %s194 = scalar_select %p193, %s16, 1
      %s195 = smul.addr %s194, 32
      %s196 = smul.addr %s195, 4
      %s197 = scalar_lea.vmem %s0, %s196
      %p198 = pneg %p37
      %p199 = pneg %p34
      %p200 = pneg %p58
      %p201 = pneg %p55
      %p202 = pneg %p79
      %p203 = pneg %p76
      %p204 = pneg %p100
      %p205 = pneg %p97
      %p206 = pneg %p121
      %p207 = pneg %p118
      %p208 = pneg %p147
      %p209 = pneg %p144
      %p210 = scmp.lt.s32.totalorder %s16, 1
      %s211 = scalar_select %p210, %s16, 1
      %s212 = smul.addr %s211, 2
      %s213 = scalar_lea.vmem %s5, %s212
      %p214 = scmp.lt.s32.totalorder %s16, 1
      %s215 = scalar_select %p214, %s16, 1
      %s216 = smul.addr %s215, 32
      %s217 = smul.addr %s216, 4
      %s218 = scalar_lea.vmem %s0, %s217
      %p219 = scmp.lt.s32.totalorder %s16, 1
      %s220 = scalar_select %p219, %s16, 1
      %s221 = smul.addr %s220, 2
      %s222 = scalar_lea.vmem %s5, %s221
      %v224 = vld [vmem:[%s1] sm:$0xf]
      %v225 = vld [vmem:[%s218] sm:$0xf]
      %v226 = vld [vmem:[%s218 + $0x4] sm:$0xf]
      %v227 = vld [vmem:[%s218 + $0x8] sm:$0xf]
      %v228 = vld [vmem:[%s218 + $0xc] sm:$0xf]
      %v229 = vld [vmem:[%s218 + $0x10] sm:$0xf]
      %v230 = vld [vmem:[%s218 + $0x14] sm:$0xf]
      %v231 = vld [vmem:[%s218 + $0x18] sm:$0xf]
      %v232 = vld [vmem:[%s218 + $0x1c] sm:$0xf]
      %v241 = vunpack.c.l.b16 %v225
      %v242 = vunpack.c.l.b16 %v226
      %v243 = vunpack.c.l.b16 %v227
      %v244 = vunpack.c.l.b16 %v228
      %v245 = vunpack.c.l.b16 %v229
      %v246 = vunpack.c.l.b16 %v230
      %v247 = vunpack.c.l.b16 %v231
      %v248 = vunpack.c.l.b16 %v232
      %v249 = vpack.c.b16 %v242, %v241
      %v250 = vpack.c.b16 %v244, %v243
      %v251 = vpack.c.b16 %v246, %v245
      %v252 = vpack.c.b16 %v248, %v247
      %vm257 = vcmask 523264
      %v259 = vsel %vm257, %v224, 0
      %261 = vmatprep.subr.bf16.mxu0 0
      %262 = vmatpush1.bf16.msra.mxu0 %v249
      %263 = vmatprep.subr.bf16.mxu0 0
      %264 = vmatpush1.bf16.msra.mxu0 %v250
      %265 = vmatprep.subr.bf16.mxu0 0
      %266 = vmatpush1.bf16.msra.mxu0 %v251
      %267 = vmatprep.subr.bf16.mxu0 0
      %268 = vmatpush1.bf16.msra.mxu0 %v252
      %269 = vmatprep.subr.bf16.mxu0 0
      %270 = vmatpush1.bf16.msra.mxu0 0
      %271 = vmatprep.subr.bf16.mxu0 0
      %272 = vmatpush1.bf16.msra.mxu0 0
      %273 = vmatprep.subr.bf16.mxu0 0
      %274 = vmatpush1.bf16.msra.mxu0 0
      %275 = vmatprep.subr.bf16.mxu0 0
      %276 = vmatpush1.bf16.msra.mxu0 0
      %277 = vmatprep.subr.bf16.mxu0 0
      %278 = vmatpush1.bf16.msra.mxu0 0
      %279 = vmatprep.subr.bf16.mxu0 0
      %280 = vmatpush1.bf16.msra.mxu0 0
      %281 = vmatprep.subr.bf16.mxu0 0
      %282 = vmatpush1.bf16.msra.mxu0 0
      %283 = vmatprep.subr.bf16.mxu0 0
      %284 = vmatpush1.bf16.msra.mxu0 0
      %285 = vmatprep.subr.bf16.mxu0 0
      %286 = vmatpush1.bf16.msra.mxu0 0
      %287 = vmatprep.subr.bf16.mxu0 0
      %288 = vmatpush1.bf16.msra.mxu0 0
      %289 = vmatprep.subr.bf16.mxu0 0
      %290 = vmatpush1.bf16.msra.mxu0 0
      %291 = vmatprep.subr.bf16.mxu0 0
      %292 = vmatpush1.bf16.msra.mxu0 0
      %293 = vmatprep.mubr.bf16.mxu0 0
      %294 = vmatmul.mubr.bf16.gmra.mrb[0].mxu0 %v259
      %v295 = vpop.f32.mrb[0].mxu0
      %v296 = vadd.f32 0.0, %v295
      %v297 = vpop.f32.mrb[0].mxu0
      %v298 = vpop.f32.mrb[0].mxu0
      %v299 = vpop.f32.mrb[0].mxu0
      %300 = vdwg.mxu0
      %s301 = scalar_lea.vmem %s218, 32
      %v302 = vld [vmem:[%s301] sm:$0xf]
      %v303 = vld [vmem:[%s301 + $0x4] sm:$0xf]
      %v304 = vld [vmem:[%s301 + $0x8] sm:$0xf]
      %v305 = vld [vmem:[%s301 + $0xc] sm:$0xf]
      %v306 = vld [vmem:[%s301 + $0x10] sm:$0xf]
      %v307 = vld [vmem:[%s301 + $0x14] sm:$0xf]
      %v308 = vld [vmem:[%s301 + $0x18] sm:$0xf]
      %v309 = vld [vmem:[%s301 + $0x1c] sm:$0xf]
      %v318 = vunpack.c.l.b16 %v302
      %v319 = vunpack.c.l.b16 %v303
      %v320 = vunpack.c.l.b16 %v304
      %v321 = vunpack.c.l.b16 %v305
      %v322 = vunpack.c.l.b16 %v306
      %v323 = vunpack.c.l.b16 %v307
      %v324 = vunpack.c.l.b16 %v308
      %v325 = vunpack.c.l.b16 %v309
      %v326 = vpack.c.b16 %v319, %v318
      %v327 = vpack.c.b16 %v321, %v320
      %v328 = vpack.c.b16 %v323, %v322
      %v329 = vpack.c.b16 %v325, %v324
      %334 = vmatprep.subr.bf16.mxu0 0
      %335 = vmatpush1.bf16.msra.mxu0 %v326
      %336 = vmatprep.subr.bf16.mxu0 0
      %337 = vmatpush1.bf16.msra.mxu0 %v327
      %338 = vmatprep.subr.bf16.mxu0 0
      %339 = vmatpush1.bf16.msra.mxu0 %v328
      %340 = vmatprep.subr.bf16.mxu0 0
      %341 = vmatpush1.bf16.msra.mxu0 %v329
      %342 = vmatprep.subr.bf16.mxu0 0
      %343 = vmatpush1.bf16.msra.mxu0 0
      %344 = vmatprep.subr.bf16.mxu0 0
      %345 = vmatpush1.bf16.msra.mxu0 0
      %346 = vmatprep.subr.bf16.mxu0 0
      %347 = vmatpush1.bf16.msra.mxu0 0
      %348 = vmatprep.subr.bf16.mxu0 0
      %349 = vmatpush1.bf16.msra.mxu0 0
      %350 = vmatprep.subr.bf16.mxu0 0
      %351 = vmatpush1.bf16.msra.mxu0 0
      %352 = vmatprep.subr.bf16.mxu0 0
      %353 = vmatpush1.bf16.msra.mxu0 0
      %354 = vmatprep.subr.bf16.mxu0 0
      %355 = vmatpush1.bf16.msra.mxu0 0
      %356 = vmatprep.subr.bf16.mxu0 0
      %357 = vmatpush1.bf16.msra.mxu0 0
      %358 = vmatprep.subr.bf16.mxu0 0
      %359 = vmatpush1.bf16.msra.mxu0 0
      %360 = vmatprep.subr.bf16.mxu0 0
      %361 = vmatpush1.bf16.msra.mxu0 0
      %362 = vmatprep.subr.bf16.mxu0 0
      %363 = vmatpush1.bf16.msra.mxu0 0
      %364 = vmatprep.subr.bf16.mxu0 0
      %365 = vmatpush1.bf16.msra.mxu0 0
      %366 = vmatprep.mubr.bf16.mxu0 0
      %367 = vmatmul.mubr.bf16.gmra.mrb[0].mxu0 %v259
      %v368 = vpop.f32.mrb[0].mxu0
      %v369 = vadd.f32 0.0, %v368
      %v370 = vpop.f32.mrb[0].mxu0
      %v371 = vpop.f32.mrb[0].mxu0
      %v372 = vpop.f32.mrb[0].mxu0
      %373 = vdwg.mxu0
      %v374 = vmax.f32 %v296, %v369
      %s375 = scalar_lea.vmem %s218, 64
      %v376 = vld [vmem:[%s375] sm:$0xf]
      %v377 = vld [vmem:[%s375 + $0x4] sm:$0xf]
      %v378 = vld [vmem:[%s375 + $0x8] sm:$0xf]
      %v379 = vld [vmem:[%s375 + $0xc] sm:$0xf]
      %v380 = vld [vmem:[%s375 + $0x10] sm:$0xf]
      %v381 = vld [vmem:[%s375 + $0x14] sm:$0xf]
      %v382 = vld [vmem:[%s375 + $0x18] sm:$0xf]
      %v383 = vld [vmem:[%s375 + $0x1c] sm:$0xf]
      %v392 = vunpack.c.l.b16 %v376
      %v393 = vunpack.c.l.b16 %v377
      %v394 = vunpack.c.l.b16 %v378
      %v395 = vunpack.c.l.b16 %v379
      %v396 = vunpack.c.l.b16 %v380
      %v397 = vunpack.c.l.b16 %v381
      %v398 = vunpack.c.l.b16 %v382
      %v399 = vunpack.c.l.b16 %v383
      %v400 = vpack.c.b16 %v393, %v392
      %v401 = vpack.c.b16 %v395, %v394
      %v402 = vpack.c.b16 %v397, %v396
      %v403 = vpack.c.b16 %v399, %v398
      %408 = vmatprep.subr.bf16.mxu0 0
      %409 = vmatpush1.bf16.msra.mxu0 %v400
      %410 = vmatprep.subr.bf16.mxu0 0
      %411 = vmatpush1.bf16.msra.mxu0 %v401
      %412 = vmatprep.subr.bf16.mxu0 0
      %413 = vmatpush1.bf16.msra.mxu0 %v402
      %414 = vmatprep.subr.bf16.mxu0 0
      %415 = vmatpush1.bf16.msra.mxu0 %v403
      %416 = vmatprep.subr.bf16.mxu0 0
      %417 = vmatpush1.bf16.msra.mxu0 0
      %418 = vmatprep.subr.bf16.mxu0 0
      %419 = vmatpush1.bf16.msra.mxu0 0
      %420 = vmatprep.subr.bf16.mxu0 0
      %421 = vmatpush1.bf16.msra.mxu0 0
      %422 = vmatprep.subr.bf16.mxu0 0
      %423 = vmatpush1.bf16.msra.mxu0 0
      %424 = vmatprep.subr.bf16.mxu0 0
      %425 = vmatpush1.bf16.msra.mxu0 0
      %426 = vmatprep.subr.bf16.mxu0 0
      %427 = vmatpush1.bf16.msra.mxu0 0
      %428 = vmatprep.subr.bf16.mxu0 0
      %429 = vmatpush1.bf16.msra.mxu0 0
      %430 = vmatprep.subr.bf16.mxu0 0
      %431 = vmatpush1.bf16.msra.mxu0 0
      %432 = vmatprep.subr.bf16.mxu0 0
      %433 = vmatpush1.bf16.msra.mxu0 0
      %434 = vmatprep.subr.bf16.mxu0 0
      %435 = vmatpush1.bf16.msra.mxu0 0
      %436 = vmatprep.subr.bf16.mxu0 0
      %437 = vmatpush1.bf16.msra.mxu0 0
      %438 = vmatprep.subr.bf16.mxu0 0
      %439 = vmatpush1.bf16.msra.mxu0 0
      %440 = vmatprep.mubr.bf16.mxu0 0
      %441 = vmatmul.mubr.bf16.gmra.mrb[0].mxu0 %v259
      %v442 = vpop.f32.mrb[0].mxu0
      %v443 = vadd.f32 0.0, %v442
      %v444 = vpop.f32.mrb[0].mxu0
      %v445 = vpop.f32.mrb[0].mxu0
      %v446 = vpop.f32.mrb[0].mxu0
      %447 = vdwg.mxu0
      %v448 = vmax.f32 %v374, %v443
      %s449 = scalar_lea.vmem %s218, 96
      %v450 = vld [vmem:[%s449] sm:$0xf]
      %v451 = vld [vmem:[%s449 + $0x4] sm:$0xf]
      %v452 = vld [vmem:[%s449 + $0x8] sm:$0xf]
      %v453 = vld [vmem:[%s449 + $0xc] sm:$0xf]
      %v454 = vld [vmem:[%s449 + $0x10] sm:$0xf]
      %v455 = vld [vmem:[%s449 + $0x14] sm:$0xf]
      %v456 = vld [vmem:[%s449 + $0x18] sm:$0xf]
      %v457 = vld [vmem:[%s449 + $0x1c] sm:$0xf]
      %v466 = vunpack.c.l.b16 %v450
      %v467 = vunpack.c.l.b16 %v451
      %v468 = vunpack.c.l.b16 %v452
      %v469 = vunpack.c.l.b16 %v453
      %v470 = vunpack.c.l.b16 %v454
      %v471 = vunpack.c.l.b16 %v455
      %v472 = vunpack.c.l.b16 %v456
      %v473 = vunpack.c.l.b16 %v457
      %v474 = vpack.c.b16 %v467, %v466
      %v475 = vpack.c.b16 %v469, %v468
      %v476 = vpack.c.b16 %v471, %v470
      %v477 = vpack.c.b16 %v473, %v472
      %482 = vmatprep.subr.bf16.mxu0 0
      %483 = vmatpush1.bf16.msra.mxu0 %v474
      %484 = vmatprep.subr.bf16.mxu0 0
      %485 = vmatpush1.bf16.msra.mxu0 %v475
      %486 = vmatprep.subr.bf16.mxu0 0
      %487 = vmatpush1.bf16.msra.mxu0 %v476
      %488 = vmatprep.subr.bf16.mxu0 0
      %489 = vmatpush1.bf16.msra.mxu0 %v477
      %490 = vmatprep.subr.bf16.mxu0 0
      %491 = vmatpush1.bf16.msra.mxu0 0
      %492 = vmatprep.subr.bf16.mxu0 0
      %493 = vmatpush1.bf16.msra.mxu0 0
      %494 = vmatprep.subr.bf16.mxu0 0
      %495 = vmatpush1.bf16.msra.mxu0 0
      %496 = vmatprep.subr.bf16.mxu0 0
      %497 = vmatpush1.bf16.msra.mxu0 0
      %498 = vmatprep.subr.bf16.mxu0 0
      %499 = vmatpush1.bf16.msra.mxu0 0
      %500 = vmatprep.subr.bf16.mxu0 0
      %501 = vmatpush1.bf16.msra.mxu0 0
      %502 = vmatprep.subr.bf16.mxu0 0
      %503 = vmatpush1.bf16.msra.mxu0 0
      %504 = vmatprep.subr.bf16.mxu0 0
      %505 = vmatpush1.bf16.msra.mxu0 0
      %506 = vmatprep.subr.bf16.mxu0 0
      %507 = vmatpush1.bf16.msra.mxu0 0
      %508 = vmatprep.subr.bf16.mxu0 0
      %509 = vmatpush1.bf16.msra.mxu0 0
      %510 = vmatprep.subr.bf16.mxu0 0
      %511 = vmatpush1.bf16.msra.mxu0 0
      %512 = vmatprep.subr.bf16.mxu0 0
      %513 = vmatpush1.bf16.msra.mxu0 0
      %514 = vmatprep.mubr.bf16.mxu0 0
      %515 = vmatmul.mubr.bf16.gmra.mrb[0].mxu0 %v259
      %v516 = vpop.f32.mrb[0].mxu0
      %v517 = vadd.f32 0.0, %v516
      %v518 = vpop.f32.mrb[0].mxu0
      %v519 = vpop.f32.mrb[0].mxu0
      %v520 = vpop.f32.mrb[0].mxu0
      %521 = vdwg.mxu0
      %v522 = vmax.f32 %v448, %v517
      %v523 = vld [vmem:[%s2] sm:$0xff]
      %525 = vset.pattern.permute.xlu0 0
      %526 = vperm.xlu0 %525, %v523
      %v527 = vpop.permute.xlu0 %526
      %v529 = vadd.f32 %v522, %v527
      %v530 = vmax.f32 %v529, 0.0
      %v531 = vld [vmem:[%s3] sm:$0xff]
      %v532 = vld [vmem:[%s3 + $0x8] sm:$0xff]
      %v533 = vmul.f32 %v531, %v530
      %v534 = vmul.f32 %v532, %v530
      %v535 = vsel %vm257, %v533, 0.0
      %536 = vadd.xlane.f32.xlu0 %v535
      %v537 = vpop.xlane.xlu0 %536
      %v538 = vsel %vm257, %v534, 0.0
      %539 = vadd.xlane.f32.xlu0 %v538
      %v540 = vpop.xlane.xlu0 %539
      %v543 = vlaneseq
      %v544 = vand.u32 %v543, 127
      %v545 = vlaneseq
      %v546 = vshrl.u32 %v545, 7
      %v547 = vsub.s32 %v544, %v546
      %v548 = vrot.slane %v537, %v547
      %v549 = vlaneseq
      %v550 = vshrl.u32 %v549, 7
      %v551 = vsub.s32 %v544, %v550
      %v552 = vrot.slane %v540, %v551
      %vm553 = vcmask 1041409
      %v554 = vsel %vm553, %v552, %v548
      %vm556 = vcmask 58368
      %v557 = vsel %vm556, %v554, 0.0
      %558 = vadd.xlane.f32.xlu0 %v557
      %v559 = vpop.xlane.xlu0 %558
      %v560 = vld [vmem:[%s4] sm:$0x3]
      %v561 = vadd.f32 %v559, %v560
      %vm562 = vcmask 1024
      %563 = vst.msk [vmem:[%s222] sm:$0x3] %vm562, %v561
      %p564 = scmp.lt.s32.totalorder %s16, 1
      %s565 = scalar_select %p564, %s16, 1
      %s566 = smul.addr %s565, 2
      %s567 = scalar_lea.vmem %s5, %s566
      // Predicated region
      $region41: #{basic_network_forward.3} parent=39 // pred_check
        %p568 = pneg %p144
      $region42: #{basic_network_forward.3} parent=39 // pred_check_branch
        %570 = sbr.rel (%p568) target = $region44
      $region43: #{basic_network_forward.3} parent=39 // pred_region
        _
      $region44: #{basic_network_forward.3} parent=39 // pred_fallthru
        _
    $region40: #{basic_network_forward.3} parent=5 // pred_fallthru
      _
    %p571 = scmp.le.s32.totalorder 2, %s11
    // Predicated region
    $region45: #{basic_network_forward.3} parent=5 // pred_check
      %p572 = pneg %p571
    $region46: #{basic_network_forward.3} parent=5 // pred_check_branch
      %574 = sbr.rel (%p572) target = $region48
    $region47: #{basic_network_forward.3} parent=5 // pred_region
      %s575 = ssub.s32 %s11, 2
      // Predicated region
      $region49: #{basic_network_forward.3} parent=47 // pred_check
        %p576 = pneg %p150
      $region50: #{basic_network_forward.3} parent=47 // pred_check_branch
        %578 = sbr.rel (%p576) target = $region52
      $region51: #{basic_network_forward.3} parent=47 // pred_region
        %p579 = scmp.lt.s32.totalorder %s17, 1
        %s580 = scalar_select %p579, %s17, 1
        %s581 = smul.addr %s580, 2
        %s582 = scalar_lea.vmem %s5, %s581
      $region52: #{basic_network_forward.3} parent=47 // pred_fallthru
        _
    $region48: #{basic_network_forward.3} parent=5 // pred_fallthru
      _
  $region6: #{basic_network_forward.3} parent=0 // loop_footer
    %s15 = sadd.s32 1, %s11
  $region7: #{basic_network_forward.3} parent=0 // loop_footer_branch
    %10 = sbr.rel target = $region3
  $region8: #{basic_network_forward.3} parent=0 // loop_exit
    _

</llo_original>
